<compile_context>
chip_gen: v5e
topology: v5e:2x2
jax: 0.10.0
libtpu: 0.0.40
codegen_flags: <defaults>
</compile_context>

<pallas_src>
import functools
import math

import jax
import jax.numpy as jnp
from jax.experimental import pallas as pl
from jax.experimental.pallas import tpu as pltpu


# --------------------------------- kernel ----------------------------------

def tvae_kernel(
    # data
    xc_ref,       # (S*N, 2D) bf16: row block s = [x[s] | x[S-1-s]] (fwd/bwd inputs paired)
    s0_ref,       # (B, D)    dec_state0 = x[:, 0, :]
    act_ref,      # (T-1, B, D) target actions (time-major)
    epsz_ref,     # (N, Z)    posterior sample noise
    epsa_ref,     # (T-1, B, D) per-step action sample noise
    # fused encoder bi-GRU (gate-interleaved layout [r_f r_b | z_f z_b | n_f n_b])
    wihe_ref,     # (2D, 6H) bf16  block input weight
    bie_ref,      # (1, 6H)  f32   folded input bias (b_ih + b_hh for r,z; b_ih only for n)
    whhe_ref,     # (2H, 6H) bf16  block-diagonal hidden weight
    bhne_ref,     # (1, 2H)  f32   [b_hh_n fwd | b_hh_n bwd]
    # enc_fc (w1 pre-scaled by 1/S) + fused mean|logvar head
    w1_ref, b1_ref, w2_ref, b2_ref, wml_ref, bml_ref,
    # decoder (fused lane-dense weights)
    wsd_ref,      # (D, 3R+H) bf16  [wds | wa1s]
    whd_ref,      # (R, 3R+H) bf16  [whhd | wa1h]
    wfa_ref,      # (D, 3R)   bf16  wds + wda   (re-associated GRU input)
    bid_ref, bhnd_ref,
    wz_ref, ba1_ref, wa2_ref, ba2_ref, waml_ref, baml_ref,
    # output (SMEM): [seq_nll, kld]
    out_ref,
    *, B, T, D, H, Z, R,
):
    LOG2PI = math.log(2.0 * math.pi)
    S = B          # encoder GRU "sequence" length (leading axis of in_features)
    N = T          # encoder GRU "batch"
    H2 = 2 * H
    R3 = 3 * R

    def bdot(a, w):
        # bf16 MXU operands, f32 accumulation; all carries stay f32 outside.
        return jnp.dot(a.astype(jnp.bfloat16), w, preferred_element_type=jnp.float32)

    def gru_update(gi, gh, bhn, h, K):
        # gi already contains b_ih (+ b_hh for r,z gates); gh has no bias; bhn = b_hh_n.
        r = jax.nn.sigmoid(gi[:, 0:K] + gh[:, 0:K])
        zg = jax.nn.sigmoid(gi[:, K:2 * K] + gh[:, K:2 * K])
        n = jnp.tanh(gi[:, 2 * K:3 * K] + r * (gh[:, 2 * K:3 * K] + bhn))
        return (1.0 - zg) * n + zg * h

    # ---- hoisted fused encoder input projection (ONE matmul for both directions) ----
    # gi_all row block s = per-step GRU input gates for fwd (from x[s]) AND bwd (from
    # x[S-1-s]) in the gate-interleaved layout. Kept as a live value (no scratch).
    gi_all = bdot(xc_ref[...], wihe_ref[...]) + bie_ref[...]          # (S*N, 6H) f32
    whhe = whhe_ref[...]
    bhne = bhne_ref[...]

    # ------------- fused fwd/bwd encoder recurrence: carry = [h_f | h_b] -------------
    # The two directions share one block-diagonal hh matmul per step (single MXU push on
    # v6e/v7x); the update over K = 2H produces the concatenated carry directly.
    h_fb = jnp.zeros((N, H2), jnp.float32)
    sum_fb = jnp.zeros((N, H2), jnp.float32)
    for s in range(S):                              # static unroll (S small)
        gi = gi_all[s * N:(s + 1) * N, :]           # tile-aligned static slice
        gh = bdot(h_fb, whhe)                       # (N, 6H)
        h_fb = gru_update(gi, gh, bhne, h_fb, H2)
        sum_fb = sum_fb + h_fb                      # sum == S * time-mean of [h_f | h_b]

    # ------------------------------ enc_fc + heads ------------------------------
    # w1 is pre-scaled by 1/S in the wrapper, so the sum acts as the time-mean here.
    h1 = jax.nn.relu(bdot(sum_fb, w1_ref[...]) + b1_ref[...])
    h2 = jax.nn.relu(bdot(h1, w2_ref[...]) + b2_ref[...])
    ml = bdot(h2, wml_ref[...]) + bml_ref[...]
    enc_mean = ml[:, 0:Z]
    enc_logvar = ml[:, Z:2 * Z]

    # ----------------------- KL divergence (free bits) --------------------------
    free_bits = 1.0 / Z
    kl = 0.5 * (jnp.exp(enc_logvar) + enc_mean * enc_mean - 1.0 - enc_logvar)
    kld = jnp.sum(jnp.maximum(kl, free_bits))

    # posterior.sample()
    z = enc_mean + epsz_ref[...] * jnp.exp(0.5 * enc_logvar)          # (N, Z), N == B

    # ----------------------------- decoder rollout ------------------------------
    wsd = wsd_ref[...]; whd = whd_ref[...]; wfa = wfa_ref[...]
    bid = bid_ref[...]; bhnd = bhnd_ref[...]
    wa2 = wa2_ref[...]; ba2 = ba2_ref[...]
    waml = waml_ref[...]; baml = baml_ref[...]

    # hoisted loop-invariant z projection (includes ba1)
    zproj = bdot(z, wz_ref[...]) + ba1_ref[...]                       # (B, H)

    dec_state = s0_ref[...]                                           # (B, D)  f32 carry
    hid = jnp.zeros((B, R), jnp.float32)
    nll = jnp.zeros((B, D), jnp.float32)

    for t in range(T - 1):                           # static unroll (T-1 small)
        # Both lane-dense projections issued at the TOP of the step: neither waits on the
        # dh1 -> dh2 -> mean/logvar -> action chain (re-associated GRU input below).
        sproj = bdot(dec_state, wsd)                 # (B, 3R+H): [gru state term | fc term]
        hproj = bdot(hid, whd)                       # (B, 3R+H): [gru hidden term | fc term]
        # decode_action (concat-free: pre-split/fused wa1, hoisted z term)
        dh1 = jax.nn.relu(sproj[:, R3:] + hproj[:, R3:] + zproj)
        dh2 = jax.nn.relu(bdot(dh1, wa2) + ba2)
        ml_d = bdot(dh2, waml) + baml                # (B, 2D)
        a_mean = ml_d[:, 0:D]
        a_logvar = ml_d[:, D:2 * D]
        # seq_nll -= log_prob(out_actions[t])  (elementwise accum; const log2pi added later)
        diff = act_ref[t] - a_mean
        nll = nll + diff * diff * jnp.exp(-a_logvar) + a_logvar
        # dec_action = sample()
        action = a_mean + epsa_ref[t] * jnp.exp(0.5 * a_logvar)
        # update_hidden: dec_rnn GRU step on cat([dec_state + action, action]), with the
        # input projection re-associated as ds_old@wds + action@(wds+wda):
        gi_d = sproj[:, 0:R3] + bdot(action, wfa) + bid
        hid = gru_update(gi_d, hproj[:, 0:R3], bhnd, hid, R)
        dec_state = dec_state + action

    seq_nll = 0.5 * (jnp.sum(nll) + (T - 1) * B * D * LOG2PI)
    out_ref[0] = seq_nll
    out_ref[1] = kld


# ------------------------------ wrapper / glue ------------------------------

_PARAM_ORDER = [
    "wih_f", "whh_f", "bih_f", "bhh_f",
    "wih_b", "whh_b", "bih_b", "bhh_b",
    "w1", "b1", "w2", "b2",
    "wm", "bm", "wl", "bl",
    "wih_d", "whh_d", "bih_d", "bhh_d",
    "wa1", "ba1", "wa2", "ba2",
    "wam", "bam", "wal", "bal",
]


def init_params(key, D, H, Z, R):
    """Deterministic PyTorch-style uniform(-1/sqrt(fan), 1/sqrt(fan)) init (transposed)."""
    keys = iter(jax.random.split(key, len(_PARAM_ORDER)))

    def u(shape, fan):
        k = 1.0 / math.sqrt(fan)
        return jax.random.uniform(next(keys), shape, jnp.float32, -k, k)

    p = {}
    # encoder bi-GRU (stored transposed: (in, 3H)); GRU init scale uses hidden size
    p["wih_f"] = u((D, 3 * H), H); p["whh_f"] = u((H, 3 * H), H)
    p["bih_f"] = u((1, 3 * H), H); p["bhh_f"] = u((1, 3 * H), H)
    p["wih_b"] = u((D, 3 * H), H); p["whh_b"] = u((H, 3 * H), H)
    p["bih_b"] = u((1, 3 * H), H); p["bhh_b"] = u((1, 3 * H), H)
    # enc_fc
    p["w1"] = u((2 * H, H), 2 * H); p["b1"] = u((1, H), 2 * H)
    p["w2"] = u((H, H), H);         p["b2"] = u((1, H), H)
    p["wm"] = u((H, Z), H);         p["bm"] = u((1, Z), H)
    p["wl"] = u((H, Z), H);         p["bl"] = u((1, Z), H)
    # dec_rnn: GRU(2*D, R)
    p["wih_d"] = u((2 * D, 3 * R), R); p["whh_d"] = u((R, 3 * R), R)
    p["bih_d"] = u((1, 3 * R), R);     p["bhh_d"] = u((1, 3 * R), R)
    # dec_action_fc
    fin = D + Z + R
    p["wa1"] = u((fin, H), fin); p["ba1"] = u((1, H), fin)
    p["wa2"] = u((H, H), H);     p["ba2"] = u((1, H), H)
    p["wam"] = u((H, D), H);     p["bam"] = u((1, D), H)
    p["wal"] = u((H, D), H);     p["bal"] = u((1, D), H)
    return p


def _fold_gru_bias(bih, bhh, K):
    """b_ih + b_hh folded for r,z gates; b_hh_n kept separate (it sits inside r*(...))."""
    zeros = jnp.zeros((1, K), jnp.float32)
    bfold = bih + jnp.concatenate([bhh[:, :2 * K], zeros], axis=1)       # (1, 3K)
    bhn = bhh[:, 2 * K:3 * K]                                            # (1, K)
    return bfold, bhn


def prepare_kernel_params(params, *, D, H, Z, R, S):
    """Offline weight reorganization (pure XLA, outside the kernel). Matmul weights bf16."""
    p = params
    bf16 = jnp.bfloat16

    def interleave_gates(wf, wb, K):
        # Rows = [fwd-input rows ; bwd-input rows]; cols = [r_f r_b | z_f z_b | n_f n_b].
        zf = jnp.zeros((wf.shape[0], K), jnp.float32)
        zb = jnp.zeros((wb.shape[0], K), jnp.float32)
        top = jnp.concatenate([wf[:, 0:K], zf, wf[:, K:2 * K], zf, wf[:, 2 * K:3 * K], zf],
                              axis=1)
        bot = jnp.concatenate([zb, wb[:, 0:K], zb, wb[:, K:2 * K], zb, wb[:, 2 * K:3 * K]],
                              axis=1)
        return jnp.concatenate([top, bot], axis=0)

    # --- encoder bi-GRU fused into one gate-interleaved GRU of width 2H ---
    bif3, bhnf = _fold_gru_bias(p["bih_f"], p["bhh_f"], H)
    bib3, bhnb = _fold_gru_bias(p["bih_b"], p["bhh_b"], H)
    wih_e = interleave_gates(p["wih_f"], p["wih_b"], H)                  # (2D, 6H)
    whh_e = interleave_gates(p["whh_f"], p["whh_b"], H)                  # (2H, 6H) block-diag
    bi_e = jnp.concatenate([bif3[:, 0:H], bib3[:, 0:H],
                            bif3[:, H:2 * H], bib3[:, H:2 * H],
                            bif3[:, 2 * H:3 * H], bib3[:, 2 * H:3 * H]], axis=1)  # (1, 6H)
    bhn_e = jnp.concatenate([bhnf, bhnb], axis=1)                        # (1, 2H)

    # --- decoder GRU + action fc: fused lane-dense weights + re-associated input ---
    bid, bhnd = _fold_gru_bias(p["bih_d"], p["bhh_d"], R)
    wds = p["wih_d"][:D, :]                                              # (D, 3R)
    wda = p["wih_d"][D:, :]                                              # (D, 3R)
    wa1s = p["wa1"][:D, :]
    wa1z = p["wa1"][D:D + Z, :]
    wa1h = p["wa1"][D + Z:, :]
    wsd = jnp.concatenate([wds, wa1s], axis=1)                           # (D, 3R+H)
    whd = jnp.concatenate([p["whh_d"], wa1h], axis=1)                    # (R, 3R+H)
    wfa = wds + wda                                                      # (D, 3R) folded

    inv_s = jnp.float32(1.0 / S)
    return [
        # fused encoder GRU
        wih_e.astype(bf16), bi_e, whh_e.astype(bf16), bhn_e,
        # enc_fc (w1 pre-scaled by 1/S) + fused mean|logvar head
        (p["w1"] * inv_s).astype(bf16), p["b1"],
        p["w2"].astype(bf16), p["b2"],
        jnp.concatenate([p["wm"], p["wl"]], axis=1).astype(bf16),
        jnp.concatenate([p["bm"], p["bl"]], axis=1),
        # decoder
        wsd.astype(bf16), whd.astype(bf16), wfa.astype(bf16), bid, bhnd,
        wa1z.astype(bf16), p["ba1"],
        p["wa2"].astype(bf16), p["ba2"],
        jnp.concatenate([p["wam"], p["wal"]], axis=1).astype(bf16),
        jnp.concatenate([p["bam"], p["bal"]], axis=1),
    ]


def trajectory_model_forward(x, params, eps_z, eps_a, *, h_dim, z_dim, rnn_dim):
    """Returns (seq_nll, kld) scalars, matching TrajectoryModel.forward."""
    B, T, D = x.shape
    assert B == T, "reference forward() requires batch == seq_len (torch.cat shapes)"
    H, Z, R = h_dim, z_dim, rnn_dim
    assert H == R, "enc_fc expects 2*rnn_dim == 2*h_dim features"
    S, N = B, T

    x = x.astype(jnp.float32)
    # Paired fwd/bwd encoder inputs: row block s = [x[s] | x[S-1-s]] (seq-major, cast bf16).
    xcomb = jnp.concatenate([x, x[::-1]], axis=-1).reshape(S * N, 2 * D).astype(jnp.bfloat16)
    s0 = x[:, 0, :]                                                    # dec_state0
    acts = jnp.transpose(x[:, 1:, :] - x[:, :-1, :], (1, 0, 2))        # (T-1, B, D)

    kparams = prepare_kernel_params(params, D=D, H=H, Z=Z, R=R, S=S)
    inputs = [xcomb, s0, acts, eps_z.astype(jnp.float32), eps_a.astype(jnp.float32)] + kparams

    kernel = functools.partial(tvae_kernel, B=B, T=T, D=D, H=H, Z=Z, R=R)
    vmem = pl.BlockSpec(memory_space=pltpu.MemorySpace.VMEM)
    smem = pl.BlockSpec(memory_space=pltpu.MemorySpace.SMEM)

    out = pl.pallas_call(
        kernel,
        out_shape=jax.ShapeDtypeStruct((2,), jnp.float32),
        in_specs=[vmem] * len(inputs),
        out_specs=smem,
    )(*inputs)
    return out[0], out[1]


# ----------------------------------- main -----------------------------------

if __name__ == "__main__":
    # model_config: rnn_dim == h_dim (required by enc_fc input dim), num_layers = 1
    B = 8      # batch  (must equal seq len, see note above)
    T = 8      # sequence length
    D = 6      # feature dim (train_data[0].shape[-1])
    H = 32     # h_dim
    R = 32     # rnn_dim
    Z = 8      # z_dim

    root = jax.random.PRNGKey(0)
    k_x, k_p, k_ez, k_ea = jax.random.split(root, 4)

    x = jax.random.normal(k_x, (B, T, D), jnp.float32)
    params = init_params(k_p, D, H, Z, R)
    eps_z = jax.random.normal(k_ez, (T, Z), jnp.float32)          # posterior.sample() noise
    eps_a = jax.random.normal(k_ea, (T - 1, B, D), jnp.float32)   # per-step action noise

    fwd = jax.jit(functools.partial(trajectory_model_forward,
                                    h_dim=H, z_dim=Z, rnn_dim=R))
    seq_nll, kld = fwd(x, params, eps_z, eps_a)
    jax.block_until_ready((seq_nll, kld))
    print("KERNEL_OK")
</pallas_src>

<mosaic_0001>
module attributes {stable_mosaic.version = 11 : i64} {
  func.func @tvae_kernel(%arg0: memref<64x12xbf16, #tpu.memory_space<vmem>>, %arg1: memref<8x6xf32, #tpu.memory_space<vmem>>, %arg2: memref<7x8x6xf32, #tpu.memory_space<vmem>>, %arg3: memref<8x8xf32, #tpu.memory_space<vmem>>, %arg4: memref<7x8x6xf32, #tpu.memory_space<vmem>>, %arg5: memref<12x192xbf16, #tpu.memory_space<vmem>>, %arg6: memref<1x192xf32, #tpu.memory_space<vmem>>, %arg7: memref<64x192xbf16, #tpu.memory_space<vmem>>, %arg8: memref<1x64xf32, #tpu.memory_space<vmem>>, %arg9: memref<64x32xbf16, #tpu.memory_space<vmem>>, %arg10: memref<1x32xf32, #tpu.memory_space<vmem>>, %arg11: memref<32x32xbf16, #tpu.memory_space<vmem>>, %arg12: memref<1x32xf32, #tpu.memory_space<vmem>>, %arg13: memref<32x16xbf16, #tpu.memory_space<vmem>>, %arg14: memref<1x16xf32, #tpu.memory_space<vmem>>, %arg15: memref<6x128xbf16, #tpu.memory_space<vmem>>, %arg16: memref<32x128xbf16, #tpu.memory_space<vmem>>, %arg17: memref<6x96xbf16, #tpu.memory_space<vmem>>, %arg18: memref<1x96xf32, #tpu.memory_space<vmem>>, %arg19: memref<1x32xf32, #tpu.memory_space<vmem>>, %arg20: memref<8x32xbf16, #tpu.memory_space<vmem>>, %arg21: memref<1x32xf32, #tpu.memory_space<vmem>>, %arg22: memref<32x32xbf16, #tpu.memory_space<vmem>>, %arg23: memref<1x32xf32, #tpu.memory_space<vmem>>, %arg24: memref<32x12xbf16, #tpu.memory_space<vmem>>, %arg25: memref<1x12xf32, #tpu.memory_space<vmem>>, %arg26: memref<2xf32, #tpu.memory_space<smem>>) attributes {dimension_semantics = [], scalar_prefetch = 0 : i64, scratch_operands = 0 : i64, tpu.core_type = #tpu.core_type<tc>} {
    %c0 = arith.constant 0 : index
    %c0_0 = arith.constant 0 : index
    %0 = vector.load %arg0[%c0, %c0_0] : memref<64x12xbf16, #tpu.memory_space<vmem>>, vector<64x12xbf16>
    %c0_1 = arith.constant 0 : index
    %c0_2 = arith.constant 0 : index
    %1 = vector.load %arg5[%c0_1, %c0_2] : memref<12x192xbf16, #tpu.memory_space<vmem>>, vector<12x192xbf16>
    %cst = arith.constant dense<0.000000e+00> : vector<64x192xf32>
    %2 = tpu.matmul %0, %1, %cst {dimension_numbers = #tpu.dot_dimension_numbers<[1], [0], [0], [1], [0, 0, 1, 1], [], []>} : vector<64x12xbf16>, vector<12x192xbf16>, vector<64x192xf32> -> vector<64x192xf32>
    %c0_3 = arith.constant 0 : index
    %c0_4 = arith.constant 0 : index
    %3 = vector.load %arg6[%c0_3, %c0_4] : memref<1x192xf32, #tpu.memory_space<vmem>>, vector<1x192xf32>
    %4 = vector.broadcast %3 : vector<1x192xf32> to vector<64x192xf32>
    %5 = arith.addf %2, %4 : vector<64x192xf32>
    %c0_5 = arith.constant 0 : index
    %c0_6 = arith.constant 0 : index
    %6 = vector.load %arg7[%c0_5, %c0_6] : memref<64x192xbf16, #tpu.memory_space<vmem>>, vector<64x192xbf16>
    %c0_7 = arith.constant 0 : index
    %c0_8 = arith.constant 0 : index
    %7 = vector.load %arg8[%c0_7, %c0_8] : memref<1x64xf32, #tpu.memory_space<vmem>>, vector<1x64xf32>
    %cst_9 = arith.constant 0.000000e+00 : f32
    %8 = vector.broadcast %cst_9 : f32 to vector<8x64xf32>
    %cst_10 = arith.constant 0.000000e+00 : f32
    %9 = vector.broadcast %cst_10 : f32 to vector<8x64xf32>
    %10 = vector.extract_strided_slice %5 {offsets = [0, 0], sizes = [8, 192], strides = [1, 1]} : vector<64x192xf32> to vector<8x192xf32>
    %11 = arith.truncf %8 : vector<8x64xf32> to vector<8x64xbf16>
    %cst_11 = arith.constant dense<0.000000e+00> : vector<8x192xf32>
    %12 = tpu.matmul %11, %6, %cst_11 {dimension_numbers = #tpu.dot_dimension_numbers<[1], [0], [0], [1], [0, 0, 1, 1], [], []>} : vector<8x64xbf16>, vector<64x192xbf16>, vector<8x192xf32> -> vector<8x192xf32>
    %13 = vector.extract_strided_slice %10 {offsets = [0, 0], sizes = [8, 64], strides = [1, 1]} : vector<8x192xf32> to vector<8x64xf32>
    %14 = vector.extract_strided_slice %12 {offsets = [0, 0], sizes = [8, 64], strides = [1, 1]} : vector<8x192xf32> to vector<8x64xf32>
    %15 = arith.addf %13, %14 : vector<8x64xf32>
    %16 = arith.negf %15 : vector<8x64xf32>
    %17 = math.exp %16 : vector<8x64xf32>
    %cst_12 = arith.constant 1.000000e+00 : f32
    %18 = vector.broadcast %cst_12 : f32 to vector<8x64xf32>
    %19 = arith.addf %18, %17 : vector<8x64xf32>
    %20 = arith.divf %18, %19 : vector<8x64xf32>
    %21 = vector.extract_strided_slice %10 {offsets = [0, 64], sizes = [8, 64], strides = [1, 1]} : vector<8x192xf32> to vector<8x64xf32>
    %22 = vector.extract_strided_slice %12 {offsets = [0, 64], sizes = [8, 64], strides = [1, 1]} : vector<8x192xf32> to vector<8x64xf32>
    %23 = arith.addf %21, %22 : vector<8x64xf32>
    %24 = arith.negf %23 : vector<8x64xf32>
    %25 = math.exp %24 : vector<8x64xf32>
    %cst_13 = arith.constant 1.000000e+00 : f32
    %26 = vector.broadcast %cst_13 : f32 to vector<8x64xf32>
    %27 = arith.addf %26, %25 : vector<8x64xf32>
    %28 = arith.divf %26, %27 : vector<8x64xf32>
    %29 = vector.extract_strided_slice %10 {offsets = [0, 128], sizes = [8, 64], strides = [1, 1]} : vector<8x192xf32> to vector<8x64xf32>
    %30 = vector.extract_strided_slice %12 {offsets = [0, 128], sizes = [8, 64], strides = [1, 1]} : vector<8x192xf32> to vector<8x64xf32>
    %31 = vector.broadcast %7 : vector<1x64xf32> to vector<8x64xf32>
    %32 = arith.addf %30, %31 : vector<8x64xf32>
    %33 = arith.mulf %20, %32 : vector<8x64xf32>
    %34 = arith.addf %29, %33 : vector<8x64xf32>
    %35 = math.tanh %34 : vector<8x64xf32>
    %cst_14 = arith.constant 1.000000e+00 : f32
    %36 = vector.broadcast %cst_14 : f32 to vector<8x64xf32>
    %37 = arith.subf %36, %28 : vector<8x64xf32>
    %38 = arith.mulf %37, %35 : vector<8x64xf32>
    %39 = arith.mulf %28, %8 : vector<8x64xf32>
    %40 = arith.addf %38, %39 : vector<8x64xf32>
    %41 = arith.addf %9, %40 : vector<8x64xf32>
    %42 = vector.extract_strided_slice %5 {offsets = [8, 0], sizes = [8, 192], strides = [1, 1]} : vector<64x192xf32> to vector<8x192xf32>
    %43 = arith.truncf %40 : vector<8x64xf32> to vector<8x64xbf16>
    %cst_15 = arith.constant dense<0.000000e+00> : vector<8x192xf32>
    %44 = tpu.matmul %43, %6, %cst_15 {dimension_numbers = #tpu.dot_dimension_numbers<[1], [0], [0], [1], [0, 0, 1, 1], [], []>} : vector<8x64xbf16>, vector<64x192xbf16>, vector<8x192xf32> -> vector<8x192xf32>
    %45 = vector.extract_strided_slice %42 {offsets = [0, 0], sizes = [8, 64], strides = [1, 1]} : vector<8x192xf32> to vector<8x64xf32>
    %46 = vector.extract_strided_slice %44 {offsets = [0, 0], sizes = [8, 64], strides = [1, 1]} : vector<8x192xf32> to vector<8x64xf32>
    %47 = arith.addf %45, %46 : vector<8x64xf32>
    %48 = arith.negf %47 : vector<8x64xf32>
    %49 = math.exp %48 : vector<8x64xf32>
    %cst_16 = arith.constant 1.000000e+00 : f32
    %50 = vector.broadcast %cst_16 : f32 to vector<8x64xf32>
    %51 = arith.addf %50, %49 : vector<8x64xf32>
    %52 = arith.divf %50, %51 : vector<8x64xf32>
    %53 = vector.extract_strided_slice %42 {offsets = [0, 64], sizes = [8, 64], strides = [1, 1]} : vector<8x192xf32> to vector<8x64xf32>
    %54 = vector.extract_strided_slice %44 {offsets = [0, 64], sizes = [8, 64], strides = [1, 1]} : vector<8x192xf32> to vector<8x64xf32>
    %55 = arith.addf %53, %54 : vector<8x64xf32>
    %56 = arith.negf %55 : vector<8x64xf32>
    %57 = math.exp %56 : vector<8x64xf32>
    %cst_17 = arith.constant 1.000000e+00 : f32
    %58 = vector.broadcast %cst_17 : f32 to vector<8x64xf32>
    %59 = arith.addf %58, %57 : vector<8x64xf32>
    %60 = arith.divf %58, %59 : vector<8x64xf32>
    %61 = vector.extract_strided_slice %42 {offsets = [0, 128], sizes = [8, 64], strides = [1, 1]} : vector<8x192xf32> to vector<8x64xf32>
    %62 = vector.extract_strided_slice %44 {offsets = [0, 128], sizes = [8, 64], strides = [1, 1]} : vector<8x192xf32> to vector<8x64xf32>
    %63 = vector.broadcast %7 : vector<1x64xf32> to vector<8x64xf32>
    %64 = arith.addf %62, %63 : vector<8x64xf32>
    %65 = arith.mulf %52, %64 : vector<8x64xf32>
    %66 = arith.addf %61, %65 : vector<8x64xf32>
    %67 = math.tanh %66 : vector<8x64xf32>
    %cst_18 = arith.constant 1.000000e+00 : f32
    %68 = vector.broadcast %cst_18 : f32 to vector<8x64xf32>
    %69 = arith.subf %68, %60 : vector<8x64xf32>
    %70 = arith.mulf %69, %67 : vector<8x64xf32>
    %71 = arith.mulf %60, %40 : vector<8x64xf32>
    %72 = arith.addf %70, %71 : vector<8x64xf32>
    %73 = arith.addf %41, %72 : vector<8x64xf32>
    %74 = vector.extract_strided_slice %5 {offsets = [16, 0], sizes = [8, 192], strides = [1, 1]} : vector<64x192xf32> to vector<8x192xf32>
    %75 = arith.truncf %72 : vector<8x64xf32> to vector<8x64xbf16>
    %cst_19 = arith.constant dense<0.000000e+00> : vector<8x192xf32>
    %76 = tpu.matmul %75, %6, %cst_19 {dimension_numbers = #tpu.dot_dimension_numbers<[1], [0], [0], [1], [0, 0, 1, 1], [], []>} : vector<8x64xbf16>, vector<64x192xbf16>, vector<8x192xf32> -> vector<8x192xf32>
    %77 = vector.extract_strided_slice %74 {offsets = [0, 0], sizes = [8, 64], strides = [1, 1]} : vector<8x192xf32> to vector<8x64xf32>
    %78 = vector.extract_strided_slice %76 {offsets = [0, 0], sizes = [8, 64], strides = [1, 1]} : vector<8x192xf32> to vector<8x64xf32>
    %79 = arith.addf %77, %78 : vector<8x64xf32>
    %80 = arith.negf %79 : vector<8x64xf32>
    %81 = math.exp %80 : vector<8x64xf32>
    %cst_20 = arith.constant 1.000000e+00 : f32
    %82 = vector.broadcast %cst_20 : f32 to vector<8x64xf32>
    %83 = arith.addf %82, %81 : vector<8x64xf32>
    %84 = arith.divf %82, %83 : vector<8x64xf32>
    %85 = vector.extract_strided_slice %74 {offsets = [0, 64], sizes = [8, 64], strides = [1, 1]} : vector<8x192xf32> to vector<8x64xf32>
    %86 = vector.extract_strided_slice %76 {offsets = [0, 64], sizes = [8, 64], strides = [1, 1]} : vector<8x192xf32> to vector<8x64xf32>
    %87 = arith.addf %85, %86 : vector<8x64xf32>
    %88 = arith.negf %87 : vector<8x64xf32>
    %89 = math.exp %88 : vector<8x64xf32>
    %cst_21 = arith.constant 1.000000e+00 : f32
    %90 = vector.broadcast %cst_21 : f32 to vector<8x64xf32>
    %91 = arith.addf %90, %89 : vector<8x64xf32>
    %92 = arith.divf %90, %91 : vector<8x64xf32>
    %93 = vector.extract_strided_slice %74 {offsets = [0, 128], sizes = [8, 64], strides = [1, 1]} : vector<8x192xf32> to vector<8x64xf32>
    %94 = vector.extract_strided_slice %76 {offsets = [0, 128], sizes = [8, 64], strides = [1, 1]} : vector<8x192xf32> to vector<8x64xf32>
    %95 = vector.broadcast %7 : vector<1x64xf32> to vector<8x64xf32>
    %96 = arith.addf %94, %95 : vector<8x64xf32>
    %97 = arith.mulf %84, %96 : vector<8x64xf32>
    %98 = arith.addf %93, %97 : vector<8x64xf32>
    %99 = math.tanh %98 : vector<8x64xf32>
    %cst_22 = arith.constant 1.000000e+00 : f32
    %100 = vector.broadcast %cst_22 : f32 to vector<8x64xf32>
    %101 = arith.subf %100, %92 : vector<8x64xf32>
    %102 = arith.mulf %101, %99 : vector<8x64xf32>
    %103 = arith.mulf %92, %72 : vector<8x64xf32>
    %104 = arith.addf %102, %103 : vector<8x64xf32>
    %105 = arith.addf %73, %104 : vector<8x64xf32>
    %106 = vector.extract_strided_slice %5 {offsets = [24, 0], sizes = [8, 192], strides = [1, 1]} : vector<64x192xf32> to vector<8x192xf32>
    %107 = arith.truncf %104 : vector<8x64xf32> to vector<8x64xbf16>
    %cst_23 = arith.constant dense<0.000000e+00> : vector<8x192xf32>
    %108 = tpu.matmul %107, %6, %cst_23 {dimension_numbers = #tpu.dot_dimension_numbers<[1], [0], [0], [1], [0, 0, 1, 1], [], []>} : vector<8x64xbf16>, vector<64x192xbf16>, vector<8x192xf32> -> vector<8x192xf32>
    %109 = vector.extract_strided_slice %106 {offsets = [0, 0], sizes = [8, 64], strides = [1, 1]} : vector<8x192xf32> to vector<8x64xf32>
    %110 = vector.extract_strided_slice %108 {offsets = [0, 0], sizes = [8, 64], strides = [1, 1]} : vector<8x192xf32> to vector<8x64xf32>
    %111 = arith.addf %109, %110 : vector<8x64xf32>
    %112 = arith.negf %111 : vector<8x64xf32>
    %113 = math.exp %112 : vector<8x64xf32>
    %cst_24 = arith.constant 1.000000e+00 : f32
    %114 = vector.broadcast %cst_24 : f32 to vector<8x64xf32>
    %115 = arith.addf %114, %113 : vector<8x64xf32>
    %116 = arith.divf %114, %115 : vector<8x64xf32>
    %117 = vector.extract_strided_slice %106 {offsets = [0, 64], sizes = [8, 64], strides = [1, 1]} : vector<8x192xf32> to vector<8x64xf32>
    %118 = vector.extract_strided_slice %108 {offsets = [0, 64], sizes = [8, 64], strides = [1, 1]} : vector<8x192xf32> to vector<8x64xf32>
    %119 = arith.addf %117, %118 : vector<8x64xf32>
    %120 = arith.negf %119 : vector<8x64xf32>
    %121 = math.exp %120 : vector<8x64xf32>
    %cst_25 = arith.constant 1.000000e+00 : f32
    %122 = vector.broadcast %cst_25 : f32 to vector<8x64xf32>
    %123 = arith.addf %122, %121 : vector<8x64xf32>
    %124 = arith.divf %122, %123 : vector<8x64xf32>
    %125 = vector.extract_strided_slice %106 {offsets = [0, 128], sizes = [8, 64], strides = [1, 1]} : vector<8x192xf32> to vector<8x64xf32>
    %126 = vector.extract_strided_slice %108 {offsets = [0, 128], sizes = [8, 64], strides = [1, 1]} : vector<8x192xf32> to vector<8x64xf32>
    %127 = vector.broadcast %7 : vector<1x64xf32> to vector<8x64xf32>
    %128 = arith.addf %126, %127 : vector<8x64xf32>
    %129 = arith.mulf %116, %128 : vector<8x64xf32>
    %130 = arith.addf %125, %129 : vector<8x64xf32>
    %131 = math.tanh %130 : vector<8x64xf32>
    %cst_26 = arith.constant 1.000000e+00 : f32
    %132 = vector.broadcast %cst_26 : f32 to vector<8x64xf32>
    %133 = arith.subf %132, %124 : vector<8x64xf32>
    %134 = arith.mulf %133, %131 : vector<8x64xf32>
    %135 = arith.mulf %124, %104 : vector<8x64xf32>
    %136 = arith.addf %134, %135 : vector<8x64xf32>
    %137 = arith.addf %105, %136 : vector<8x64xf32>
    %138 = vector.extract_strided_slice %5 {offsets = [32, 0], sizes = [8, 192], strides = [1, 1]} : vector<64x192xf32> to vector<8x192xf32>
    %139 = arith.truncf %136 : vector<8x64xf32> to vector<8x64xbf16>
    %cst_27 = arith.constant dense<0.000000e+00> : vector<8x192xf32>
    %140 = tpu.matmul %139, %6, %cst_27 {dimension_numbers = #tpu.dot_dimension_numbers<[1], [0], [0], [1], [0, 0, 1, 1], [], []>} : vector<8x64xbf16>, vector<64x192xbf16>, vector<8x192xf32> -> vector<8x192xf32>
    %141 = vector.extract_strided_slice %138 {offsets = [0, 0], sizes = [8, 64], strides = [1, 1]} : vector<8x192xf32> to vector<8x64xf32>
    %142 = vector.extract_strided_slice %140 {offsets = [0, 0], sizes = [8, 64], strides = [1, 1]} : vector<8x192xf32> to vector<8x64xf32>
    %143 = arith.addf %141, %142 : vector<8x64xf32>
    %144 = arith.negf %143 : vector<8x64xf32>
    %145 = math.exp %144 : vector<8x64xf32>
    %cst_28 = arith.constant 1.000000e+00 : f32
    %146 = vector.broadcast %cst_28 : f32 to vector<8x64xf32>
    %147 = arith.addf %146, %145 : vector<8x64xf32>
    %148 = arith.divf %146, %147 : vector<8x64xf32>
    %149 = vector.extract_strided_slice %138 {offsets = [0, 64], sizes = [8, 64], strides = [1, 1]} : vector<8x192xf32> to vector<8x64xf32>
    %150 = vector.extract_strided_slice %140 {offsets = [0, 64], sizes = [8, 64], strides = [1, 1]} : vector<8x192xf32> to vector<8x64xf32>
    %151 = arith.addf %149, %150 : vector<8x64xf32>
    %152 = arith.negf %151 : vector<8x64xf32>
    %153 = math.exp %152 : vector<8x64xf32>
    %cst_29 = arith.constant 1.000000e+00 : f32
    %154 = vector.broadcast %cst_29 : f32 to vector<8x64xf32>
    %155 = arith.addf %154, %153 : vector<8x64xf32>
    %156 = arith.divf %154, %155 : vector<8x64xf32>
    %157 = vector.extract_strided_slice %138 {offsets = [0, 128], sizes = [8, 64], strides = [1, 1]} : vector<8x192xf32> to vector<8x64xf32>
    %158 = vector.extract_strided_slice %140 {offsets = [0, 128], sizes = [8, 64], strides = [1, 1]} : vector<8x192xf32> to vector<8x64xf32>
    %159 = vector.broadcast %7 : vector<1x64xf32> to vector<8x64xf32>
    %160 = arith.addf %158, %159 : vector<8x64xf32>
    %161 = arith.mulf %148, %160 : vector<8x64xf32>
    %162 = arith.addf %157, %161 : vector<8x64xf32>
    %163 = math.tanh %162 : vector<8x64xf32>
    %cst_30 = arith.constant 1.000000e+00 : f32
    %164 = vector.broadcast %cst_30 : f32 to vector<8x64xf32>
    %165 = arith.subf %164, %156 : vector<8x64xf32>
    %166 = arith.mulf %165, %163 : vector<8x64xf32>
    %167 = arith.mulf %156, %136 : vector<8x64xf32>
    %168 = arith.addf %166, %167 : vector<8x64xf32>
    %169 = arith.addf %137, %168 : vector<8x64xf32>
    %170 = vector.extract_strided_slice %5 {offsets = [40, 0], sizes = [8, 192], strides = [1, 1]} : vector<64x192xf32> to vector<8x192xf32>
    %171 = arith.truncf %168 : vector<8x64xf32> to vector<8x64xbf16>
    %cst_31 = arith.constant dense<0.000000e+00> : vector<8x192xf32>
    %172 = tpu.matmul %171, %6, %cst_31 {dimension_numbers = #tpu.dot_dimension_numbers<[1], [0], [0], [1], [0, 0, 1, 1], [], []>} : vector<8x64xbf16>, vector<64x192xbf16>, vector<8x192xf32> -> vector<8x192xf32>
    %173 = vector.extract_strided_slice %170 {offsets = [0, 0], sizes = [8, 64], strides = [1, 1]} : vector<8x192xf32> to vector<8x64xf32>
    %174 = vector.extract_strided_slice %172 {offsets = [0, 0], sizes = [8, 64], strides = [1, 1]} : vector<8x192xf32> to vector<8x64xf32>
    %175 = arith.addf %173, %174 : vector<8x64xf32>
    %176 = arith.negf %175 : vector<8x64xf32>
    %177 = math.exp %176 : vector<8x64xf32>
    %cst_32 = arith.constant 1.000000e+00 : f32
    %178 = vector.broadcast %cst_32 : f32 to vector<8x64xf32>
    %179 = arith.addf %178, %177 : vector<8x64xf32>
    %180 = arith.divf %178, %179 : vector<8x64xf32>
    %181 = vector.extract_strided_slice %170 {offsets = [0, 64], sizes = [8, 64], strides = [1, 1]} : vector<8x192xf32> to vector<8x64xf32>
    %182 = vector.extract_strided_slice %172 {offsets = [0, 64], sizes = [8, 64], strides = [1, 1]} : vector<8x192xf32> to vector<8x64xf32>
    %183 = arith.addf %181, %182 : vector<8x64xf32>
    %184 = arith.negf %183 : vector<8x64xf32>
    %185 = math.exp %184 : vector<8x64xf32>
    %cst_33 = arith.constant 1.000000e+00 : f32
    %186 = vector.broadcast %cst_33 : f32 to vector<8x64xf32>
    %187 = arith.addf %186, %185 : vector<8x64xf32>
    %188 = arith.divf %186, %187 : vector<8x64xf32>
    %189 = vector.extract_strided_slice %170 {offsets = [0, 128], sizes = [8, 64], strides = [1, 1]} : vector<8x192xf32> to vector<8x64xf32>
    %190 = vector.extract_strided_slice %172 {offsets = [0, 128], sizes = [8, 64], strides = [1, 1]} : vector<8x192xf32> to vector<8x64xf32>
    %191 = vector.broadcast %7 : vector<1x64xf32> to vector<8x64xf32>
    %192 = arith.addf %190, %191 : vector<8x64xf32>
    %193 = arith.mulf %180, %192 : vector<8x64xf32>
    %194 = arith.addf %189, %193 : vector<8x64xf32>
    %195 = math.tanh %194 : vector<8x64xf32>
    %cst_34 = arith.constant 1.000000e+00 : f32
    %196 = vector.broadcast %cst_34 : f32 to vector<8x64xf32>
    %197 = arith.subf %196, %188 : vector<8x64xf32>
    %198 = arith.mulf %197, %195 : vector<8x64xf32>
    %199 = arith.mulf %188, %168 : vector<8x64xf32>
    %200 = arith.addf %198, %199 : vector<8x64xf32>
    %201 = arith.addf %169, %200 : vector<8x64xf32>
    %202 = vector.extract_strided_slice %5 {offsets = [48, 0], sizes = [8, 192], strides = [1, 1]} : vector<64x192xf32> to vector<8x192xf32>
    %203 = arith.truncf %200 : vector<8x64xf32> to vector<8x64xbf16>
    %cst_35 = arith.constant dense<0.000000e+00> : vector<8x192xf32>
    %204 = tpu.matmul %203, %6, %cst_35 {dimension_numbers = #tpu.dot_dimension_numbers<[1], [0], [0], [1], [0, 0, 1, 1], [], []>} : vector<8x64xbf16>, vector<64x192xbf16>, vector<8x192xf32> -> vector<8x192xf32>
    %205 = vector.extract_strided_slice %202 {offsets = [0, 0], sizes = [8, 64], strides = [1, 1]} : vector<8x192xf32> to vector<8x64xf32>
    %206 = vector.extract_strided_slice %204 {offsets = [0, 0], sizes = [8, 64], strides = [1, 1]} : vector<8x192xf32> to vector<8x64xf32>
    %207 = arith.addf %205, %206 : vector<8x64xf32>
    %208 = arith.negf %207 : vector<8x64xf32>
    %209 = math.exp %208 : vector<8x64xf32>
    %cst_36 = arith.constant 1.000000e+00 : f32
    %210 = vector.broadcast %cst_36 : f32 to vector<8x64xf32>
    %211 = arith.addf %210, %209 : vector<8x64xf32>
    %212 = arith.divf %210, %211 : vector<8x64xf32>
    %213 = vector.extract_strided_slice %202 {offsets = [0, 64], sizes = [8, 64], strides = [1, 1]} : vector<8x192xf32> to vector<8x64xf32>
    %214 = vector.extract_strided_slice %204 {offsets = [0, 64], sizes = [8, 64], strides = [1, 1]} : vector<8x192xf32> to vector<8x64xf32>
    %215 = arith.addf %213, %214 : vector<8x64xf32>
    %216 = arith.negf %215 : vector<8x64xf32>
    %217 = math.exp %216 : vector<8x64xf32>
    %cst_37 = arith.constant 1.000000e+00 : f32
    %218 = vector.broadcast %cst_37 : f32 to vector<8x64xf32>
    %219 = arith.addf %218, %217 : vector<8x64xf32>
    %220 = arith.divf %218, %219 : vector<8x64xf32>
    %221 = vector.extract_strided_slice %202 {offsets = [0, 128], sizes = [8, 64], strides = [1, 1]} : vector<8x192xf32> to vector<8x64xf32>
    %222 = vector.extract_strided_slice %204 {offsets = [0, 128], sizes = [8, 64], strides = [1, 1]} : vector<8x192xf32> to vector<8x64xf32>
    %223 = vector.broadcast %7 : vector<1x64xf32> to vector<8x64xf32>
    %224 = arith.addf %222, %223 : vector<8x64xf32>
    %225 = arith.mulf %212, %224 : vector<8x64xf32>
    %226 = arith.addf %221, %225 : vector<8x64xf32>
    %227 = math.tanh %226 : vector<8x64xf32>
    %cst_38 = arith.constant 1.000000e+00 : f32
    %228 = vector.broadcast %cst_38 : f32 to vector<8x64xf32>
    %229 = arith.subf %228, %220 : vector<8x64xf32>
    %230 = arith.mulf %229, %227 : vector<8x64xf32>
    %231 = arith.mulf %220, %200 : vector<8x64xf32>
    %232 = arith.addf %230, %231 : vector<8x64xf32>
    %233 = arith.addf %201, %232 : vector<8x64xf32>
    %234 = vector.extract_strided_slice %5 {offsets = [56, 0], sizes = [8, 192], strides = [1, 1]} : vector<64x192xf32> to vector<8x192xf32>
    %235 = arith.truncf %232 : vector<8x64xf32> to vector<8x64xbf16>
    %cst_39 = arith.constant dense<0.000000e+00> : vector<8x192xf32>
    %236 = tpu.matmul %235, %6, %cst_39 {dimension_numbers = #tpu.dot_dimension_numbers<[1], [0], [0], [1], [0, 0, 1, 1], [], []>} : vector<8x64xbf16>, vector<64x192xbf16>, vector<8x192xf32> -> vector<8x192xf32>
    %237 = vector.extract_strided_slice %234 {offsets = [0, 0], sizes = [8, 64], strides = [1, 1]} : vector<8x192xf32> to vector<8x64xf32>
    %238 = vector.extract_strided_slice %236 {offsets = [0, 0], sizes = [8, 64], strides = [1, 1]} : vector<8x192xf32> to vector<8x64xf32>
    %239 = arith.addf %237, %238 : vector<8x64xf32>
    %240 = arith.negf %239 : vector<8x64xf32>
    %241 = math.exp %240 : vector<8x64xf32>
    %cst_40 = arith.constant 1.000000e+00 : f32
    %242 = vector.broadcast %cst_40 : f32 to vector<8x64xf32>
    %243 = arith.addf %242, %241 : vector<8x64xf32>
    %244 = arith.divf %242, %243 : vector<8x64xf32>
    %245 = vector.extract_strided_slice %234 {offsets = [0, 64], sizes = [8, 64], strides = [1, 1]} : vector<8x192xf32> to vector<8x64xf32>
    %246 = vector.extract_strided_slice %236 {offsets = [0, 64], sizes = [8, 64], strides = [1, 1]} : vector<8x192xf32> to vector<8x64xf32>
    %247 = arith.addf %245, %246 : vector<8x64xf32>
    %248 = arith.negf %247 : vector<8x64xf32>
    %249 = math.exp %248 : vector<8x64xf32>
    %cst_41 = arith.constant 1.000000e+00 : f32
    %250 = vector.broadcast %cst_41 : f32 to vector<8x64xf32>
    %251 = arith.addf %250, %249 : vector<8x64xf32>
    %252 = arith.divf %250, %251 : vector<8x64xf32>
    %253 = vector.extract_strided_slice %234 {offsets = [0, 128], sizes = [8, 64], strides = [1, 1]} : vector<8x192xf32> to vector<8x64xf32>
    %254 = vector.extract_strided_slice %236 {offsets = [0, 128], sizes = [8, 64], strides = [1, 1]} : vector<8x192xf32> to vector<8x64xf32>
    %255 = vector.broadcast %7 : vector<1x64xf32> to vector<8x64xf32>
    %256 = arith.addf %254, %255 : vector<8x64xf32>
    %257 = arith.mulf %244, %256 : vector<8x64xf32>
    %258 = arith.addf %253, %257 : vector<8x64xf32>
    %259 = math.tanh %258 : vector<8x64xf32>
    %cst_42 = arith.constant 1.000000e+00 : f32
    %260 = vector.broadcast %cst_42 : f32 to vector<8x64xf32>
    %261 = arith.subf %260, %252 : vector<8x64xf32>
    %262 = arith.mulf %261, %259 : vector<8x64xf32>
    %263 = arith.mulf %252, %232 : vector<8x64xf32>
    %264 = arith.addf %262, %263 : vector<8x64xf32>
    %265 = arith.addf %233, %264 : vector<8x64xf32>
    %c0_43 = arith.constant 0 : index
    %c0_44 = arith.constant 0 : index
    %266 = vector.load %arg9[%c0_43, %c0_44] : memref<64x32xbf16, #tpu.memory_space<vmem>>, vector<64x32xbf16>
    %267 = arith.truncf %265 : vector<8x64xf32> to vector<8x64xbf16>
    %cst_45 = arith.constant dense<0.000000e+00> : vector<8x32xf32>
    %268 = tpu.matmul %267, %266, %cst_45 {dimension_numbers = #tpu.dot_dimension_numbers<[1], [0], [0], [1], [0, 0, 1, 1], [], []>} : vector<8x64xbf16>, vector<64x32xbf16>, vector<8x32xf32> -> vector<8x32xf32>
    %c0_46 = arith.constant 0 : index
    %c0_47 = arith.constant 0 : index
    %269 = vector.load %arg10[%c0_46, %c0_47] : memref<1x32xf32, #tpu.memory_space<vmem>>, vector<1x32xf32>
    %270 = vector.broadcast %269 : vector<1x32xf32> to vector<8x32xf32>
    %271 = arith.addf %268, %270 : vector<8x32xf32>
    %cst_48 = arith.constant 0.000000e+00 : f32
    %272 = vector.broadcast %cst_48 : f32 to vector<8x32xf32>
    %273 = arith.maximumf %271, %272 : vector<8x32xf32>
    %c0_49 = arith.constant 0 : index
    %c0_50 = arith.constant 0 : index
    %274 = vector.load %arg11[%c0_49, %c0_50] : memref<32x32xbf16, #tpu.memory_space<vmem>>, vector<32x32xbf16>
    %275 = arith.truncf %273 : vector<8x32xf32> to vector<8x32xbf16>
    %cst_51 = arith.constant dense<0.000000e+00> : vector<8x32xf32>
    %276 = tpu.matmul %275, %274, %cst_51 {dimension_numbers = #tpu.dot_dimension_numbers<[1], [0], [0], [1], [0, 0, 1, 1], [], []>} : vector<8x32xbf16>, vector<32x32xbf16>, vector<8x32xf32> -> vector<8x32xf32>
    %c0_52 = arith.constant 0 : index
    %c0_53 = arith.constant 0 : index
    %277 = vector.load %arg12[%c0_52, %c0_53] : memref<1x32xf32, #tpu.memory_space<vmem>>, vector<1x32xf32>
    %278 = vector.broadcast %277 : vector<1x32xf32> to vector<8x32xf32>
    %279 = arith.addf %276, %278 : vector<8x32xf32>
    %cst_54 = arith.constant 0.000000e+00 : f32
    %280 = vector.broadcast %cst_54 : f32 to vector<8x32xf32>
    %281 = arith.maximumf %279, %280 : vector<8x32xf32>
    %c0_55 = arith.constant 0 : index
    %c0_56 = arith.constant 0 : index
    %282 = vector.load %arg13[%c0_55, %c0_56] : memref<32x16xbf16, #tpu.memory_space<vmem>>, vector<32x16xbf16>
    %283 = arith.truncf %281 : vector<8x32xf32> to vector<8x32xbf16>
    %cst_57 = arith.constant dense<0.000000e+00> : vector<8x16xf32>
    %284 = tpu.matmul %283, %282, %cst_57 {dimension_numbers = #tpu.dot_dimension_numbers<[1], [0], [0], [1], [0, 0, 1, 1], [], []>} : vector<8x32xbf16>, vector<32x16xbf16>, vector<8x16xf32> -> vector<8x16xf32>
    %c0_58 = arith.constant 0 : index
    %c0_59 = arith.constant 0 : index
    %285 = vector.load %arg14[%c0_58, %c0_59] : memref<1x16xf32, #tpu.memory_space<vmem>>, vector<1x16xf32>
    %286 = vector.broadcast %285 : vector<1x16xf32> to vector<8x16xf32>
    %287 = arith.addf %284, %286 : vector<8x16xf32>
    %288 = vector.extract_strided_slice %287 {offsets = [0, 0], sizes = [8, 8], strides = [1, 1]} : vector<8x16xf32> to vector<8x8xf32>
    %289 = vector.extract_strided_slice %287 {offsets = [0, 8], sizes = [8, 8], strides = [1, 1]} : vector<8x16xf32> to vector<8x8xf32>
    %290 = math.exp %289 : vector<8x8xf32>
    %291 = arith.mulf %288, %288 : vector<8x8xf32>
    %292 = arith.addf %290, %291 : vector<8x8xf32>
    %cst_60 = arith.constant 1.000000e+00 : f32
    %293 = vector.broadcast %cst_60 : f32 to vector<8x8xf32>
    %294 = arith.subf %292, %293 : vector<8x8xf32>
    %295 = arith.subf %294, %289 : vector<8x8xf32>
    %cst_61 = arith.constant 5.000000e-01 : f32
    %296 = vector.broadcast %cst_61 : f32 to vector<8x8xf32>
    %297 = arith.mulf %296, %295 : vector<8x8xf32>
    %cst_62 = arith.constant 1.250000e-01 : f32
    %298 = vector.broadcast %cst_62 : f32 to vector<8x8xf32>
    %299 = arith.maximumf %297, %298 : vector<8x8xf32>
    %300 = vector.shape_cast %299 : vector<8x8xf32> to vector<1x8x8xf32>
    %cst_63 = arith.constant dense<0.000000e+00> : vector<1xf32>
    %301 = vector.multi_reduction <add>, %300, %cst_63 [1, 2] : vector<1x8x8xf32> to vector<1xf32>
    %302 = vector.shape_cast %301 : vector<1xf32> to vector<1x1x1xf32>
    %303 = vector.extract %302[0, 0, 0] : f32 from vector<1x1x1xf32>
    %c0_64 = arith.constant 0 : index
    %c0_65 = arith.constant 0 : index
    %304 = vector.load %arg3[%c0_64, %c0_65] : memref<8x8xf32, #tpu.memory_space<vmem>>, vector<8x8xf32>
    %cst_66 = arith.constant 5.000000e-01 : f32
    %305 = vector.broadcast %cst_66 : f32 to vector<8x8xf32>
    %306 = arith.mulf %305, %289 : vector<8x8xf32>
    %307 = math.exp %306 : vector<8x8xf32>
    %308 = arith.mulf %304, %307 : vector<8x8xf32>
    %309 = arith.addf %288, %308 : vector<8x8xf32>
    %c0_67 = arith.constant 0 : index
    %c0_68 = arith.constant 0 : index
    %310 = vector.load %arg15[%c0_67, %c0_68] : memref<6x128xbf16, #tpu.memory_space<vmem>>, vector<6x128xbf16>
    %c0_69 = arith.constant 0 : index
    %c0_70 = arith.constant 0 : index
    %311 = vector.load %arg16[%c0_69, %c0_70] : memref<32x128xbf16, #tpu.memory_space<vmem>>, vector<32x128xbf16>
    %c0_71 = arith.constant 0 : index
    %c0_72 = arith.constant 0 : index
    %312 = vector.load %arg17[%c0_71, %c0_72] : memref<6x96xbf16, #tpu.memory_space<vmem>>, vector<6x96xbf16>
    %c0_73 = arith.constant 0 : index
    %c0_74 = arith.constant 0 : index
    %313 = vector.load %arg18[%c0_73, %c0_74] : memref<1x96xf32, #tpu.memory_space<vmem>>, vector<1x96xf32>
    %c0_75 = arith.constant 0 : index
    %c0_76 = arith.constant 0 : index
    %314 = vector.load %arg19[%c0_75, %c0_76] : memref<1x32xf32, #tpu.memory_space<vmem>>, vector<1x32xf32>
    %c0_77 = arith.constant 0 : index
    %c0_78 = arith.constant 0 : index
    %315 = vector.load %arg22[%c0_77, %c0_78] : memref<32x32xbf16, #tpu.memory_space<vmem>>, vector<32x32xbf16>
    %c0_79 = arith.constant 0 : index
    %c0_80 = arith.constant 0 : index
    %316 = vector.load %arg23[%c0_79, %c0_80] : memref<1x32xf32, #tpu.memory_space<vmem>>, vector<1x32xf32>
    %c0_81 = arith.constant 0 : index
    %c0_82 = arith.constant 0 : index
    %317 = vector.load %arg24[%c0_81, %c0_82] : memref<32x12xbf16, #tpu.memory_space<vmem>>, vector<32x12xbf16>
    %c0_83 = arith.constant 0 : index
    %c0_84 = arith.constant 0 : index
    %318 = vector.load %arg25[%c0_83, %c0_84] : memref<1x12xf32, #tpu.memory_space<vmem>>, vector<1x12xf32>
    %c0_85 = arith.constant 0 : index
    %c0_86 = arith.constant 0 : index
    %319 = vector.load %arg20[%c0_85, %c0_86] : memref<8x32xbf16, #tpu.memory_space<vmem>>, vector<8x32xbf16>
    %320 = arith.truncf %309 : vector<8x8xf32> to vector<8x8xbf16>
    %cst_87 = arith.constant dense<0.000000e+00> : vector<8x32xf32>
    %321 = tpu.matmul %320, %319, %cst_87 {dimension_numbers = #tpu.dot_dimension_numbers<[1], [0], [0], [1], [0, 0, 1, 1], [], []>} : vector<8x8xbf16>, vector<8x32xbf16>, vector<8x32xf32> -> vector<8x32xf32>
    %c0_88 = arith.constant 0 : index
    %c0_89 = arith.constant 0 : index
    %322 = vector.load %arg21[%c0_88, %c0_89] : memref<1x32xf32, #tpu.memory_space<vmem>>, vector<1x32xf32>
    %323 = vector.broadcast %322 : vector<1x32xf32> to vector<8x32xf32>
    %324 = arith.addf %321, %323 : vector<8x32xf32>
    %c0_90 = arith.constant 0 : index
    %c0_91 = arith.constant 0 : index
    %325 = vector.load %arg1[%c0_90, %c0_91] : memref<8x6xf32, #tpu.memory_space<vmem>>, vector<8x6xf32>
    %cst_92 = arith.constant 0.000000e+00 : f32
    %326 = vector.broadcast %cst_92 : f32 to vector<8x32xf32>
    %cst_93 = arith.constant 0.000000e+00 : f32
    %327 = vector.broadcast %cst_93 : f32 to vector<8x6xf32>
    %328 = arith.truncf %325 : vector<8x6xf32> to vector<8x6xbf16>
    %cst_94 = arith.constant dense<0.000000e+00> : vector<8x128xf32>
    %329 = tpu.matmul %328, %310, %cst_94 {dimension_numbers = #tpu.dot_dimension_numbers<[1], [0], [0], [1], [0, 0, 1, 1], [], []>} : vector<8x6xbf16>, vector<6x128xbf16>, vector<8x128xf32> -> vector<8x128xf32>
    %330 = arith.truncf %326 : vector<8x32xf32> to vector<8x32xbf16>
    %cst_95 = arith.constant dense<0.000000e+00> : vector<8x128xf32>
    %331 = tpu.matmul %330, %311, %cst_95 {dimension_numbers = #tpu.dot_dimension_numbers<[1], [0], [0], [1], [0, 0, 1, 1], [], []>} : vector<8x32xbf16>, vector<32x128xbf16>, vector<8x128xf32> -> vector<8x128xf32>
    %332 = vector.extract_strided_slice %329 {offsets = [0, 96], sizes = [8, 32], strides = [1, 1]} : vector<8x128xf32> to vector<8x32xf32>
    %333 = vector.extract_strided_slice %331 {offsets = [0, 96], sizes = [8, 32], strides = [1, 1]} : vector<8x128xf32> to vector<8x32xf32>
    %334 = arith.addf %332, %333 : vector<8x32xf32>
    %335 = arith.addf %334, %324 : vector<8x32xf32>
    %cst_96 = arith.constant 0.000000e+00 : f32
    %336 = vector.broadcast %cst_96 : f32 to vector<8x32xf32>
    %337 = arith.maximumf %335, %336 : vector<8x32xf32>
    %338 = arith.truncf %337 : vector<8x32xf32> to vector<8x32xbf16>
    %cst_97 = arith.constant dense<0.000000e+00> : vector<8x32xf32>
    %339 = tpu.matmul %338, %315, %cst_97 {dimension_numbers = #tpu.dot_dimension_numbers<[1], [0], [0], [1], [0, 0, 1, 1], [], []>} : vector<8x32xbf16>, vector<32x32xbf16>, vector<8x32xf32> -> vector<8x32xf32>
    %340 = vector.broadcast %316 : vector<1x32xf32> to vector<8x32xf32>
    %341 = arith.addf %339, %340 : vector<8x32xf32>
    %cst_98 = arith.constant 0.000000e+00 : f32
    %342 = vector.broadcast %cst_98 : f32 to vector<8x32xf32>
    %343 = arith.maximumf %341, %342 : vector<8x32xf32>
    %344 = arith.truncf %343 : vector<8x32xf32> to vector<8x32xbf16>
    %cst_99 = arith.constant dense<0.000000e+00> : vector<8x12xf32>
    %345 = tpu.matmul %344, %317, %cst_99 {dimension_numbers = #tpu.dot_dimension_numbers<[1], [0], [0], [1], [0, 0, 1, 1], [], []>} : vector<8x32xbf16>, vector<32x12xbf16>, vector<8x12xf32> -> vector<8x12xf32>
    %346 = vector.broadcast %318 : vector<1x12xf32> to vector<8x12xf32>
    %347 = arith.addf %345, %346 : vector<8x12xf32>
    %348 = vector.extract_strided_slice %347 {offsets = [0, 0], sizes = [8, 6], strides = [1, 1]} : vector<8x12xf32> to vector<8x6xf32>
    %349 = vector.extract_strided_slice %347 {offsets = [0, 6], sizes = [8, 6], strides = [1, 1]} : vector<8x12xf32> to vector<8x6xf32>
    %c0_100 = arith.constant 0 : index
    %c0_101 = arith.constant 0 : index
    %c0_102 = arith.constant 0 : index
    %350 = vector.load %arg2[%c0_100, %c0_101, %c0_102] : memref<7x8x6xf32, #tpu.memory_space<vmem>>, vector<1x8x6xf32>
    %351 = vector.shape_cast %350 : vector<1x8x6xf32> to vector<8x6xf32>
    %352 = arith.subf %351, %348 : vector<8x6xf32>
    %353 = arith.mulf %352, %352 : vector<8x6xf32>
    %cst_103 = arith.constant 0.000000e+00 : f32
    %354 = vector.broadcast %cst_103 : f32 to vector<8x6xf32>
    %355 = arith.subf %354, %349 : vector<8x6xf32>
    %356 = math.exp %355 : vector<8x6xf32>
    %357 = arith.mulf %353, %356 : vector<8x6xf32>
    %358 = arith.addf %327, %357 : vector<8x6xf32>
    %359 = arith.addf %358, %349 : vector<8x6xf32>
    %c0_104 = arith.constant 0 : index
    %c0_105 = arith.constant 0 : index
    %c0_106 = arith.constant 0 : index
    %360 = vector.load %arg4[%c0_104, %c0_105, %c0_106] : memref<7x8x6xf32, #tpu.memory_space<vmem>>, vector<1x8x6xf32>
    %361 = vector.shape_cast %360 : vector<1x8x6xf32> to vector<8x6xf32>
    %cst_107 = arith.constant 5.000000e-01 : f32
    %362 = vector.broadcast %cst_107 : f32 to vector<8x6xf32>
    %363 = arith.mulf %362, %349 : vector<8x6xf32>
    %364 = math.exp %363 : vector<8x6xf32>
    %365 = arith.mulf %361, %364 : vector<8x6xf32>
    %366 = arith.addf %348, %365 : vector<8x6xf32>
    %367 = vector.extract_strided_slice %329 {offsets = [0, 0], sizes = [8, 96], strides = [1, 1]} : vector<8x128xf32> to vector<8x96xf32>
    %368 = arith.truncf %366 : vector<8x6xf32> to vector<8x6xbf16>
    %cst_108 = arith.constant dense<0.000000e+00> : vector<8x96xf32>
    %369 = tpu.matmul %368, %312, %cst_108 {dimension_numbers = #tpu.dot_dimension_numbers<[1], [0], [0], [1], [0, 0, 1, 1], [], []>} : vector<8x6xbf16>, vector<6x96xbf16>, vector<8x96xf32> -> vector<8x96xf32>
    %370 = arith.addf %367, %369 : vector<8x96xf32>
    %371 = vector.broadcast %313 : vector<1x96xf32> to vector<8x96xf32>
    %372 = arith.addf %370, %371 : vector<8x96xf32>
    %373 = vector.extract_strided_slice %331 {offsets = [0, 0], sizes = [8, 96], strides = [1, 1]} : vector<8x128xf32> to vector<8x96xf32>
    %374 = vector.extract_strided_slice %372 {offsets = [0, 0], sizes = [8, 32], strides = [1, 1]} : vector<8x96xf32> to vector<8x32xf32>
    %375 = vector.extract_strided_slice %373 {offsets = [0, 0], sizes = [8, 32], strides = [1, 1]} : vector<8x96xf32> to vector<8x32xf32>
    %376 = arith.addf %374, %375 : vector<8x32xf32>
    %377 = arith.negf %376 : vector<8x32xf32>
    %378 = math.exp %377 : vector<8x32xf32>
    %cst_109 = arith.constant 1.000000e+00 : f32
    %379 = vector.broadcast %cst_109 : f32 to vector<8x32xf32>
    %380 = arith.addf %379, %378 : vector<8x32xf32>
    %381 = arith.divf %379, %380 : vector<8x32xf32>
    %382 = vector.extract_strided_slice %372 {offsets = [0, 32], sizes = [8, 32], strides = [1, 1]} : vector<8x96xf32> to vector<8x32xf32>
    %383 = vector.extract_strided_slice %373 {offsets = [0, 32], sizes = [8, 32], strides = [1, 1]} : vector<8x96xf32> to vector<8x32xf32>
    %384 = arith.addf %382, %383 : vector<8x32xf32>
    %385 = arith.negf %384 : vector<8x32xf32>
    %386 = math.exp %385 : vector<8x32xf32>
    %cst_110 = arith.constant 1.000000e+00 : f32
    %387 = vector.broadcast %cst_110 : f32 to vector<8x32xf32>
    %388 = arith.addf %387, %386 : vector<8x32xf32>
    %389 = arith.divf %387, %388 : vector<8x32xf32>
    %390 = vector.extract_strided_slice %372 {offsets = [0, 64], sizes = [8, 32], strides = [1, 1]} : vector<8x96xf32> to vector<8x32xf32>
    %391 = vector.extract_strided_slice %373 {offsets = [0, 64], sizes = [8, 32], strides = [1, 1]} : vector<8x96xf32> to vector<8x32xf32>
    %392 = vector.broadcast %314 : vector<1x32xf32> to vector<8x32xf32>
    %393 = arith.addf %391, %392 : vector<8x32xf32>
    %394 = arith.mulf %381, %393 : vector<8x32xf32>
    %395 = arith.addf %390, %394 : vector<8x32xf32>
    %396 = math.tanh %395 : vector<8x32xf32>
    %cst_111 = arith.constant 1.000000e+00 : f32
    %397 = vector.broadcast %cst_111 : f32 to vector<8x32xf32>
    %398 = arith.subf %397, %389 : vector<8x32xf32>
    %399 = arith.mulf %398, %396 : vector<8x32xf32>
    %400 = arith.mulf %389, %326 : vector<8x32xf32>
    %401 = arith.addf %399, %400 : vector<8x32xf32>
    %402 = arith.addf %325, %366 : vector<8x6xf32>
    %403 = arith.truncf %402 : vector<8x6xf32> to vector<8x6xbf16>
    %cst_112 = arith.constant dense<0.000000e+00> : vector<8x128xf32>
    %404 = tpu.matmul %403, %310, %cst_112 {dimension_numbers = #tpu.dot_dimension_numbers<[1], [0], [0], [1], [0, 0, 1, 1], [], []>} : vector<8x6xbf16>, vector<6x128xbf16>, vector<8x128xf32> -> vector<8x128xf32>
    %405 = arith.truncf %401 : vector<8x32xf32> to vector<8x32xbf16>
    %cst_113 = arith.constant dense<0.000000e+00> : vector<8x128xf32>
    %406 = tpu.matmul %405, %311, %cst_113 {dimension_numbers = #tpu.dot_dimension_numbers<[1], [0], [0], [1], [0, 0, 1, 1], [], []>} : vector<8x32xbf16>, vector<32x128xbf16>, vector<8x128xf32> -> vector<8x128xf32>
    %407 = vector.extract_strided_slice %404 {offsets = [0, 96], sizes = [8, 32], strides = [1, 1]} : vector<8x128xf32> to vector<8x32xf32>
    %408 = vector.extract_strided_slice %406 {offsets = [0, 96], sizes = [8, 32], strides = [1, 1]} : vector<8x128xf32> to vector<8x32xf32>
    %409 = arith.addf %407, %408 : vector<8x32xf32>
    %410 = arith.addf %409, %324 : vector<8x32xf32>
    %cst_114 = arith.constant 0.000000e+00 : f32
    %411 = vector.broadcast %cst_114 : f32 to vector<8x32xf32>
    %412 = arith.maximumf %410, %411 : vector<8x32xf32>
    %413 = arith.truncf %412 : vector<8x32xf32> to vector<8x32xbf16>
    %cst_115 = arith.constant dense<0.000000e+00> : vector<8x32xf32>
    %414 = tpu.matmul %413, %315, %cst_115 {dimension_numbers = #tpu.dot_dimension_numbers<[1], [0], [0], [1], [0, 0, 1, 1], [], []>} : vector<8x32xbf16>, vector<32x32xbf16>, vector<8x32xf32> -> vector<8x32xf32>
    %415 = vector.broadcast %316 : vector<1x32xf32> to vector<8x32xf32>
    %416 = arith.addf %414, %415 : vector<8x32xf32>
    %cst_116 = arith.constant 0.000000e+00 : f32
    %417 = vector.broadcast %cst_116 : f32 to vector<8x32xf32>
    %418 = arith.maximumf %416, %417 : vector<8x32xf32>
    %419 = arith.truncf %418 : vector<8x32xf32> to vector<8x32xbf16>
    %cst_117 = arith.constant dense<0.000000e+00> : vector<8x12xf32>
    %420 = tpu.matmul %419, %317, %cst_117 {dimension_numbers = #tpu.dot_dimension_numbers<[1], [0], [0], [1], [0, 0, 1, 1], [], []>} : vector<8x32xbf16>, vector<32x12xbf16>, vector<8x12xf32> -> vector<8x12xf32>
    %421 = vector.broadcast %318 : vector<1x12xf32> to vector<8x12xf32>
    %422 = arith.addf %420, %421 : vector<8x12xf32>
    %423 = vector.extract_strided_slice %422 {offsets = [0, 0], sizes = [8, 6], strides = [1, 1]} : vector<8x12xf32> to vector<8x6xf32>
    %424 = vector.extract_strided_slice %422 {offsets = [0, 6], sizes = [8, 6], strides = [1, 1]} : vector<8x12xf32> to vector<8x6xf32>
    %c1 = arith.constant 1 : index
    %c0_118 = arith.constant 0 : index
    %c0_119 = arith.constant 0 : index
    %425 = vector.load %arg2[%c1, %c0_118, %c0_119] : memref<7x8x6xf32, #tpu.memory_space<vmem>>, vector<1x8x6xf32>
    %426 = vector.shape_cast %425 : vector<1x8x6xf32> to vector<8x6xf32>
    %427 = arith.subf %426, %423 : vector<8x6xf32>
    %428 = arith.mulf %427, %427 : vector<8x6xf32>
    %cst_120 = arith.constant 0.000000e+00 : f32
    %429 = vector.broadcast %cst_120 : f32 to vector<8x6xf32>
    %430 = arith.subf %429, %424 : vector<8x6xf32>
    %431 = math.exp %430 : vector<8x6xf32>
    %432 = arith.mulf %428, %431 : vector<8x6xf32>
    %433 = arith.addf %359, %432 : vector<8x6xf32>
    %434 = arith.addf %433, %424 : vector<8x6xf32>
    %c1_121 = arith.constant 1 : index
    %c0_122 = arith.constant 0 : index
    %c0_123 = arith.constant 0 : index
    %435 = vector.load %arg4[%c1_121, %c0_122, %c0_123] : memref<7x8x6xf32, #tpu.memory_space<vmem>>, vector<1x8x6xf32>
    %436 = vector.shape_cast %435 : vector<1x8x6xf32> to vector<8x6xf32>
    %cst_124 = arith.constant 5.000000e-01 : f32
    %437 = vector.broadcast %cst_124 : f32 to vector<8x6xf32>
    %438 = arith.mulf %437, %424 : vector<8x6xf32>
    %439 = math.exp %438 : vector<8x6xf32>
    %440 = arith.mulf %436, %439 : vector<8x6xf32>
    %441 = arith.addf %423, %440 : vector<8x6xf32>
    %442 = vector.extract_strided_slice %404 {offsets = [0, 0], sizes = [8, 96], strides = [1, 1]} : vector<8x128xf32> to vector<8x96xf32>
    %443 = arith.truncf %441 : vector<8x6xf32> to vector<8x6xbf16>
    %cst_125 = arith.constant dense<0.000000e+00> : vector<8x96xf32>
    %444 = tpu.matmul %443, %312, %cst_125 {dimension_numbers = #tpu.dot_dimension_numbers<[1], [0], [0], [1], [0, 0, 1, 1], [], []>} : vector<8x6xbf16>, vector<6x96xbf16>, vector<8x96xf32> -> vector<8x96xf32>
    %445 = arith.addf %442, %444 : vector<8x96xf32>
    %446 = vector.broadcast %313 : vector<1x96xf32> to vector<8x96xf32>
    %447 = arith.addf %445, %446 : vector<8x96xf32>
    %448 = vector.extract_strided_slice %406 {offsets = [0, 0], sizes = [8, 96], strides = [1, 1]} : vector<8x128xf32> to vector<8x96xf32>
    %449 = vector.extract_strided_slice %447 {offsets = [0, 0], sizes = [8, 32], strides = [1, 1]} : vector<8x96xf32> to vector<8x32xf32>
    %450 = vector.extract_strided_slice %448 {offsets = [0, 0], sizes = [8, 32], strides = [1, 1]} : vector<8x96xf32> to vector<8x32xf32>
    %451 = arith.addf %449, %450 : vector<8x32xf32>
    %452 = arith.negf %451 : vector<8x32xf32>
    %453 = math.exp %452 : vector<8x32xf32>
    %cst_126 = arith.constant 1.000000e+00 : f32
    %454 = vector.broadcast %cst_126 : f32 to vector<8x32xf32>
    %455 = arith.addf %454, %453 : vector<8x32xf32>
    %456 = arith.divf %454, %455 : vector<8x32xf32>
    %457 = vector.extract_strided_slice %447 {offsets = [0, 32], sizes = [8, 32], strides = [1, 1]} : vector<8x96xf32> to vector<8x32xf32>
    %458 = vector.extract_strided_slice %448 {offsets = [0, 32], sizes = [8, 32], strides = [1, 1]} : vector<8x96xf32> to vector<8x32xf32>
    %459 = arith.addf %457, %458 : vector<8x32xf32>
    %460 = arith.negf %459 : vector<8x32xf32>
    %461 = math.exp %460 : vector<8x32xf32>
    %cst_127 = arith.constant 1.000000e+00 : f32
    %462 = vector.broadcast %cst_127 : f32 to vector<8x32xf32>
    %463 = arith.addf %462, %461 : vector<8x32xf32>
    %464 = arith.divf %462, %463 : vector<8x32xf32>
    %465 = vector.extract_strided_slice %447 {offsets = [0, 64], sizes = [8, 32], strides = [1, 1]} : vector<8x96xf32> to vector<8x32xf32>
    %466 = vector.extract_strided_slice %448 {offsets = [0, 64], sizes = [8, 32], strides = [1, 1]} : vector<8x96xf32> to vector<8x32xf32>
    %467 = vector.broadcast %314 : vector<1x32xf32> to vector<8x32xf32>
    %468 = arith.addf %466, %467 : vector<8x32xf32>
    %469 = arith.mulf %456, %468 : vector<8x32xf32>
    %470 = arith.addf %465, %469 : vector<8x32xf32>
    %471 = math.tanh %470 : vector<8x32xf32>
    %cst_128 = arith.constant 1.000000e+00 : f32
    %472 = vector.broadcast %cst_128 : f32 to vector<8x32xf32>
    %473 = arith.subf %472, %464 : vector<8x32xf32>
    %474 = arith.mulf %473, %471 : vector<8x32xf32>
    %475 = arith.mulf %464, %401 : vector<8x32xf32>
    %476 = arith.addf %474, %475 : vector<8x32xf32>
    %477 = arith.addf %402, %441 : vector<8x6xf32>
    %478 = arith.truncf %477 : vector<8x6xf32> to vector<8x6xbf16>
    %cst_129 = arith.constant dense<0.000000e+00> : vector<8x128xf32>
    %479 = tpu.matmul %478, %310, %cst_129 {dimension_numbers = #tpu.dot_dimension_numbers<[1], [0], [0], [1], [0, 0, 1, 1], [], []>} : vector<8x6xbf16>, vector<6x128xbf16>, vector<8x128xf32> -> vector<8x128xf32>
    %480 = arith.truncf %476 : vector<8x32xf32> to vector<8x32xbf16>
    %cst_130 = arith.constant dense<0.000000e+00> : vector<8x128xf32>
    %481 = tpu.matmul %480, %311, %cst_130 {dimension_numbers = #tpu.dot_dimension_numbers<[1], [0], [0], [1], [0, 0, 1, 1], [], []>} : vector<8x32xbf16>, vector<32x128xbf16>, vector<8x128xf32> -> vector<8x128xf32>
    %482 = vector.extract_strided_slice %479 {offsets = [0, 96], sizes = [8, 32], strides = [1, 1]} : vector<8x128xf32> to vector<8x32xf32>
    %483 = vector.extract_strided_slice %481 {offsets = [0, 96], sizes = [8, 32], strides = [1, 1]} : vector<8x128xf32> to vector<8x32xf32>
    %484 = arith.addf %482, %483 : vector<8x32xf32>
    %485 = arith.addf %484, %324 : vector<8x32xf32>
    %cst_131 = arith.constant 0.000000e+00 : f32
    %486 = vector.broadcast %cst_131 : f32 to vector<8x32xf32>
    %487 = arith.maximumf %485, %486 : vector<8x32xf32>
    %488 = arith.truncf %487 : vector<8x32xf32> to vector<8x32xbf16>
    %cst_132 = arith.constant dense<0.000000e+00> : vector<8x32xf32>
    %489 = tpu.matmul %488, %315, %cst_132 {dimension_numbers = #tpu.dot_dimension_numbers<[1], [0], [0], [1], [0, 0, 1, 1], [], []>} : vector<8x32xbf16>, vector<32x32xbf16>, vector<8x32xf32> -> vector<8x32xf32>
    %490 = vector.broadcast %316 : vector<1x32xf32> to vector<8x32xf32>
    %491 = arith.addf %489, %490 : vector<8x32xf32>
    %cst_133 = arith.constant 0.000000e+00 : f32
    %492 = vector.broadcast %cst_133 : f32 to vector<8x32xf32>
    %493 = arith.maximumf %491, %492 : vector<8x32xf32>
    %494 = arith.truncf %493 : vector<8x32xf32> to vector<8x32xbf16>
    %cst_134 = arith.constant dense<0.000000e+00> : vector<8x12xf32>
    %495 = tpu.matmul %494, %317, %cst_134 {dimension_numbers = #tpu.dot_dimension_numbers<[1], [0], [0], [1], [0, 0, 1, 1], [], []>} : vector<8x32xbf16>, vector<32x12xbf16>, vector<8x12xf32> -> vector<8x12xf32>
    %496 = vector.broadcast %318 : vector<1x12xf32> to vector<8x12xf32>
    %497 = arith.addf %495, %496 : vector<8x12xf32>
    %498 = vector.extract_strided_slice %497 {offsets = [0, 0], sizes = [8, 6], strides = [1, 1]} : vector<8x12xf32> to vector<8x6xf32>
    %499 = vector.extract_strided_slice %497 {offsets = [0, 6], sizes = [8, 6], strides = [1, 1]} : vector<8x12xf32> to vector<8x6xf32>
    %c2 = arith.constant 2 : index
    %c0_135 = arith.constant 0 : index
    %c0_136 = arith.constant 0 : index
    %500 = vector.load %arg2[%c2, %c0_135, %c0_136] : memref<7x8x6xf32, #tpu.memory_space<vmem>>, vector<1x8x6xf32>
    %501 = vector.shape_cast %500 : vector<1x8x6xf32> to vector<8x6xf32>
    %502 = arith.subf %501, %498 : vector<8x6xf32>
    %503 = arith.mulf %502, %502 : vector<8x6xf32>
    %cst_137 = arith.constant 0.000000e+00 : f32
    %504 = vector.broadcast %cst_137 : f32 to vector<8x6xf32>
    %505 = arith.subf %504, %499 : vector<8x6xf32>
    %506 = math.exp %505 : vector<8x6xf32>
    %507 = arith.mulf %503, %506 : vector<8x6xf32>
    %508 = arith.addf %434, %507 : vector<8x6xf32>
    %509 = arith.addf %508, %499 : vector<8x6xf32>
    %c2_138 = arith.constant 2 : index
    %c0_139 = arith.constant 0 : index
    %c0_140 = arith.constant 0 : index
    %510 = vector.load %arg4[%c2_138, %c0_139, %c0_140] : memref<7x8x6xf32, #tpu.memory_space<vmem>>, vector<1x8x6xf32>
    %511 = vector.shape_cast %510 : vector<1x8x6xf32> to vector<8x6xf32>
    %cst_141 = arith.constant 5.000000e-01 : f32
    %512 = vector.broadcast %cst_141 : f32 to vector<8x6xf32>
    %513 = arith.mulf %512, %499 : vector<8x6xf32>
    %514 = math.exp %513 : vector<8x6xf32>
    %515 = arith.mulf %511, %514 : vector<8x6xf32>
    %516 = arith.addf %498, %515 : vector<8x6xf32>
    %517 = vector.extract_strided_slice %479 {offsets = [0, 0], sizes = [8, 96], strides = [1, 1]} : vector<8x128xf32> to vector<8x96xf32>
    %518 = arith.truncf %516 : vector<8x6xf32> to vector<8x6xbf16>
    %cst_142 = arith.constant dense<0.000000e+00> : vector<8x96xf32>
    %519 = tpu.matmul %518, %312, %cst_142 {dimension_numbers = #tpu.dot_dimension_numbers<[1], [0], [0], [1], [0, 0, 1, 1], [], []>} : vector<8x6xbf16>, vector<6x96xbf16>, vector<8x96xf32> -> vector<8x96xf32>
    %520 = arith.addf %517, %519 : vector<8x96xf32>
    %521 = vector.broadcast %313 : vector<1x96xf32> to vector<8x96xf32>
    %522 = arith.addf %520, %521 : vector<8x96xf32>
    %523 = vector.extract_strided_slice %481 {offsets = [0, 0], sizes = [8, 96], strides = [1, 1]} : vector<8x128xf32> to vector<8x96xf32>
    %524 = vector.extract_strided_slice %522 {offsets = [0, 0], sizes = [8, 32], strides = [1, 1]} : vector<8x96xf32> to vector<8x32xf32>
    %525 = vector.extract_strided_slice %523 {offsets = [0, 0], sizes = [8, 32], strides = [1, 1]} : vector<8x96xf32> to vector<8x32xf32>
    %526 = arith.addf %524, %525 : vector<8x32xf32>
    %527 = arith.negf %526 : vector<8x32xf32>
    %528 = math.exp %527 : vector<8x32xf32>
    %cst_143 = arith.constant 1.000000e+00 : f32
    %529 = vector.broadcast %cst_143 : f32 to vector<8x32xf32>
    %530 = arith.addf %529, %528 : vector<8x32xf32>
    %531 = arith.divf %529, %530 : vector<8x32xf32>
    %532 = vector.extract_strided_slice %522 {offsets = [0, 32], sizes = [8, 32], strides = [1, 1]} : vector<8x96xf32> to vector<8x32xf32>
    %533 = vector.extract_strided_slice %523 {offsets = [0, 32], sizes = [8, 32], strides = [1, 1]} : vector<8x96xf32> to vector<8x32xf32>
    %534 = arith.addf %532, %533 : vector<8x32xf32>
    %535 = arith.negf %534 : vector<8x32xf32>
    %536 = math.exp %535 : vector<8x32xf32>
    %cst_144 = arith.constant 1.000000e+00 : f32
    %537 = vector.broadcast %cst_144 : f32 to vector<8x32xf32>
    %538 = arith.addf %537, %536 : vector<8x32xf32>
    %539 = arith.divf %537, %538 : vector<8x32xf32>
    %540 = vector.extract_strided_slice %522 {offsets = [0, 64], sizes = [8, 32], strides = [1, 1]} : vector<8x96xf32> to vector<8x32xf32>
    %541 = vector.extract_strided_slice %523 {offsets = [0, 64], sizes = [8, 32], strides = [1, 1]} : vector<8x96xf32> to vector<8x32xf32>
    %542 = vector.broadcast %314 : vector<1x32xf32> to vector<8x32xf32>
    %543 = arith.addf %541, %542 : vector<8x32xf32>
    %544 = arith.mulf %531, %543 : vector<8x32xf32>
    %545 = arith.addf %540, %544 : vector<8x32xf32>
    %546 = math.tanh %545 : vector<8x32xf32>
    %cst_145 = arith.constant 1.000000e+00 : f32
    %547 = vector.broadcast %cst_145 : f32 to vector<8x32xf32>
    %548 = arith.subf %547, %539 : vector<8x32xf32>
    %549 = arith.mulf %548, %546 : vector<8x32xf32>
    %550 = arith.mulf %539, %476 : vector<8x32xf32>
    %551 = arith.addf %549, %550 : vector<8x32xf32>
    %552 = arith.addf %477, %516 : vector<8x6xf32>
    %553 = arith.truncf %552 : vector<8x6xf32> to vector<8x6xbf16>
    %cst_146 = arith.constant dense<0.000000e+00> : vector<8x128xf32>
    %554 = tpu.matmul %553, %310, %cst_146 {dimension_numbers = #tpu.dot_dimension_numbers<[1], [0], [0], [1], [0, 0, 1, 1], [], []>} : vector<8x6xbf16>, vector<6x128xbf16>, vector<8x128xf32> -> vector<8x128xf32>
    %555 = arith.truncf %551 : vector<8x32xf32> to vector<8x32xbf16>
    %cst_147 = arith.constant dense<0.000000e+00> : vector<8x128xf32>
    %556 = tpu.matmul %555, %311, %cst_147 {dimension_numbers = #tpu.dot_dimension_numbers<[1], [0], [0], [1], [0, 0, 1, 1], [], []>} : vector<8x32xbf16>, vector<32x128xbf16>, vector<8x128xf32> -> vector<8x128xf32>
    %557 = vector.extract_strided_slice %554 {offsets = [0, 96], sizes = [8, 32], strides = [1, 1]} : vector<8x128xf32> to vector<8x32xf32>
    %558 = vector.extract_strided_slice %556 {offsets = [0, 96], sizes = [8, 32], strides = [1, 1]} : vector<8x128xf32> to vector<8x32xf32>
    %559 = arith.addf %557, %558 : vector<8x32xf32>
    %560 = arith.addf %559, %324 : vector<8x32xf32>
    %cst_148 = arith.constant 0.000000e+00 : f32
    %561 = vector.broadcast %cst_148 : f32 to vector<8x32xf32>
    %562 = arith.maximumf %560, %561 : vector<8x32xf32>
    %563 = arith.truncf %562 : vector<8x32xf32> to vector<8x32xbf16>
    %cst_149 = arith.constant dense<0.000000e+00> : vector<8x32xf32>
    %564 = tpu.matmul %563, %315, %cst_149 {dimension_numbers = #tpu.dot_dimension_numbers<[1], [0], [0], [1], [0, 0, 1, 1], [], []>} : vector<8x32xbf16>, vector<32x32xbf16>, vector<8x32xf32> -> vector<8x32xf32>
    %565 = vector.broadcast %316 : vector<1x32xf32> to vector<8x32xf32>
    %566 = arith.addf %564, %565 : vector<8x32xf32>
    %cst_150 = arith.constant 0.000000e+00 : f32
    %567 = vector.broadcast %cst_150 : f32 to vector<8x32xf32>
    %568 = arith.maximumf %566, %567 : vector<8x32xf32>
    %569 = arith.truncf %568 : vector<8x32xf32> to vector<8x32xbf16>
    %cst_151 = arith.constant dense<0.000000e+00> : vector<8x12xf32>
    %570 = tpu.matmul %569, %317, %cst_151 {dimension_numbers = #tpu.dot_dimension_numbers<[1], [0], [0], [1], [0, 0, 1, 1], [], []>} : vector<8x32xbf16>, vector<32x12xbf16>, vector<8x12xf32> -> vector<8x12xf32>
    %571 = vector.broadcast %318 : vector<1x12xf32> to vector<8x12xf32>
    %572 = arith.addf %570, %571 : vector<8x12xf32>
    %573 = vector.extract_strided_slice %572 {offsets = [0, 0], sizes = [8, 6], strides = [1, 1]} : vector<8x12xf32> to vector<8x6xf32>
    %574 = vector.extract_strided_slice %572 {offsets = [0, 6], sizes = [8, 6], strides = [1, 1]} : vector<8x12xf32> to vector<8x6xf32>
    %c3 = arith.constant 3 : index
    %c0_152 = arith.constant 0 : index
    %c0_153 = arith.constant 0 : index
    %575 = vector.load %arg2[%c3, %c0_152, %c0_153] : memref<7x8x6xf32, #tpu.memory_space<vmem>>, vector<1x8x6xf32>
    %576 = vector.shape_cast %575 : vector<1x8x6xf32> to vector<8x6xf32>
    %577 = arith.subf %576, %573 : vector<8x6xf32>
    %578 = arith.mulf %577, %577 : vector<8x6xf32>
    %cst_154 = arith.constant 0.000000e+00 : f32
    %579 = vector.broadcast %cst_154 : f32 to vector<8x6xf32>
    %580 = arith.subf %579, %574 : vector<8x6xf32>
    %581 = math.exp %580 : vector<8x6xf32>
    %582 = arith.mulf %578, %581 : vector<8x6xf32>
    %583 = arith.addf %509, %582 : vector<8x6xf32>
    %584 = arith.addf %583, %574 : vector<8x6xf32>
    %c3_155 = arith.constant 3 : index
    %c0_156 = arith.constant 0 : index
    %c0_157 = arith.constant 0 : index
    %585 = vector.load %arg4[%c3_155, %c0_156, %c0_157] : memref<7x8x6xf32, #tpu.memory_space<vmem>>, vector<1x8x6xf32>
    %586 = vector.shape_cast %585 : vector<1x8x6xf32> to vector<8x6xf32>
    %cst_158 = arith.constant 5.000000e-01 : f32
    %587 = vector.broadcast %cst_158 : f32 to vector<8x6xf32>
    %588 = arith.mulf %587, %574 : vector<8x6xf32>
    %589 = math.exp %588 : vector<8x6xf32>
    %590 = arith.mulf %586, %589 : vector<8x6xf32>
    %591 = arith.addf %573, %590 : vector<8x6xf32>
    %592 = vector.extract_strided_slice %554 {offsets = [0, 0], sizes = [8, 96], strides = [1, 1]} : vector<8x128xf32> to vector<8x96xf32>
    %593 = arith.truncf %591 : vector<8x6xf32> to vector<8x6xbf16>
    %cst_159 = arith.constant dense<0.000000e+00> : vector<8x96xf32>
    %594 = tpu.matmul %593, %312, %cst_159 {dimension_numbers = #tpu.dot_dimension_numbers<[1], [0], [0], [1], [0, 0, 1, 1], [], []>} : vector<8x6xbf16>, vector<6x96xbf16>, vector<8x96xf32> -> vector<8x96xf32>
    %595 = arith.addf %592, %594 : vector<8x96xf32>
    %596 = vector.broadcast %313 : vector<1x96xf32> to vector<8x96xf32>
    %597 = arith.addf %595, %596 : vector<8x96xf32>
    %598 = vector.extract_strided_slice %556 {offsets = [0, 0], sizes = [8, 96], strides = [1, 1]} : vector<8x128xf32> to vector<8x96xf32>
    %599 = vector.extract_strided_slice %597 {offsets = [0, 0], sizes = [8, 32], strides = [1, 1]} : vector<8x96xf32> to vector<8x32xf32>
    %600 = vector.extract_strided_slice %598 {offsets = [0, 0], sizes = [8, 32], strides = [1, 1]} : vector<8x96xf32> to vector<8x32xf32>
    %601 = arith.addf %599, %600 : vector<8x32xf32>
    %602 = arith.negf %601 : vector<8x32xf32>
    %603 = math.exp %602 : vector<8x32xf32>
    %cst_160 = arith.constant 1.000000e+00 : f32
    %604 = vector.broadcast %cst_160 : f32 to vector<8x32xf32>
    %605 = arith.addf %604, %603 : vector<8x32xf32>
    %606 = arith.divf %604, %605 : vector<8x32xf32>
    %607 = vector.extract_strided_slice %597 {offsets = [0, 32], sizes = [8, 32], strides = [1, 1]} : vector<8x96xf32> to vector<8x32xf32>
    %608 = vector.extract_strided_slice %598 {offsets = [0, 32], sizes = [8, 32], strides = [1, 1]} : vector<8x96xf32> to vector<8x32xf32>
    %609 = arith.addf %607, %608 : vector<8x32xf32>
    %610 = arith.negf %609 : vector<8x32xf32>
    %611 = math.exp %610 : vector<8x32xf32>
    %cst_161 = arith.constant 1.000000e+00 : f32
    %612 = vector.broadcast %cst_161 : f32 to vector<8x32xf32>
    %613 = arith.addf %612, %611 : vector<8x32xf32>
    %614 = arith.divf %612, %613 : vector<8x32xf32>
    %615 = vector.extract_strided_slice %597 {offsets = [0, 64], sizes = [8, 32], strides = [1, 1]} : vector<8x96xf32> to vector<8x32xf32>
    %616 = vector.extract_strided_slice %598 {offsets = [0, 64], sizes = [8, 32], strides = [1, 1]} : vector<8x96xf32> to vector<8x32xf32>
    %617 = vector.broadcast %314 : vector<1x32xf32> to vector<8x32xf32>
    %618 = arith.addf %616, %617 : vector<8x32xf32>
    %619 = arith.mulf %606, %618 : vector<8x32xf32>
    %620 = arith.addf %615, %619 : vector<8x32xf32>
    %621 = math.tanh %620 : vector<8x32xf32>
    %cst_162 = arith.constant 1.000000e+00 : f32
    %622 = vector.broadcast %cst_162 : f32 to vector<8x32xf32>
    %623 = arith.subf %622, %614 : vector<8x32xf32>
    %624 = arith.mulf %623, %621 : vector<8x32xf32>
    %625 = arith.mulf %614, %551 : vector<8x32xf32>
    %626 = arith.addf %624, %625 : vector<8x32xf32>
    %627 = arith.addf %552, %591 : vector<8x6xf32>
    %628 = arith.truncf %627 : vector<8x6xf32> to vector<8x6xbf16>
    %cst_163 = arith.constant dense<0.000000e+00> : vector<8x128xf32>
    %629 = tpu.matmul %628, %310, %cst_163 {dimension_numbers = #tpu.dot_dimension_numbers<[1], [0], [0], [1], [0, 0, 1, 1], [], []>} : vector<8x6xbf16>, vector<6x128xbf16>, vector<8x128xf32> -> vector<8x128xf32>
    %630 = arith.truncf %626 : vector<8x32xf32> to vector<8x32xbf16>
    %cst_164 = arith.constant dense<0.000000e+00> : vector<8x128xf32>
    %631 = tpu.matmul %630, %311, %cst_164 {dimension_numbers = #tpu.dot_dimension_numbers<[1], [0], [0], [1], [0, 0, 1, 1], [], []>} : vector<8x32xbf16>, vector<32x128xbf16>, vector<8x128xf32> -> vector<8x128xf32>
    %632 = vector.extract_strided_slice %629 {offsets = [0, 96], sizes = [8, 32], strides = [1, 1]} : vector<8x128xf32> to vector<8x32xf32>
    %633 = vector.extract_strided_slice %631 {offsets = [0, 96], sizes = [8, 32], strides = [1, 1]} : vector<8x128xf32> to vector<8x32xf32>
    %634 = arith.addf %632, %633 : vector<8x32xf32>
    %635 = arith.addf %634, %324 : vector<8x32xf32>
    %cst_165 = arith.constant 0.000000e+00 : f32
    %636 = vector.broadcast %cst_165 : f32 to vector<8x32xf32>
    %637 = arith.maximumf %635, %636 : vector<8x32xf32>
    %638 = arith.truncf %637 : vector<8x32xf32> to vector<8x32xbf16>
    %cst_166 = arith.constant dense<0.000000e+00> : vector<8x32xf32>
    %639 = tpu.matmul %638, %315, %cst_166 {dimension_numbers = #tpu.dot_dimension_numbers<[1], [0], [0], [1], [0, 0, 1, 1], [], []>} : vector<8x32xbf16>, vector<32x32xbf16>, vector<8x32xf32> -> vector<8x32xf32>
    %640 = vector.broadcast %316 : vector<1x32xf32> to vector<8x32xf32>
    %641 = arith.addf %639, %640 : vector<8x32xf32>
    %cst_167 = arith.constant 0.000000e+00 : f32
    %642 = vector.broadcast %cst_167 : f32 to vector<8x32xf32>
    %643 = arith.maximumf %641, %642 : vector<8x32xf32>
    %644 = arith.truncf %643 : vector<8x32xf32> to vector<8x32xbf16>
    %cst_168 = arith.constant dense<0.000000e+00> : vector<8x12xf32>
    %645 = tpu.matmul %644, %317, %cst_168 {dimension_numbers = #tpu.dot_dimension_numbers<[1], [0], [0], [1], [0, 0, 1, 1], [], []>} : vector<8x32xbf16>, vector<32x12xbf16>, vector<8x12xf32> -> vector<8x12xf32>
    %646 = vector.broadcast %318 : vector<1x12xf32> to vector<8x12xf32>
    %647 = arith.addf %645, %646 : vector<8x12xf32>
    %648 = vector.extract_strided_slice %647 {offsets = [0, 0], sizes = [8, 6], strides = [1, 1]} : vector<8x12xf32> to vector<8x6xf32>
    %649 = vector.extract_strided_slice %647 {offsets = [0, 6], sizes = [8, 6], strides = [1, 1]} : vector<8x12xf32> to vector<8x6xf32>
    %c4 = arith.constant 4 : index
    %c0_169 = arith.constant 0 : index
    %c0_170 = arith.constant 0 : index
    %650 = vector.load %arg2[%c4, %c0_169, %c0_170] : memref<7x8x6xf32, #tpu.memory_space<vmem>>, vector<1x8x6xf32>
    %651 = vector.shape_cast %650 : vector<1x8x6xf32> to vector<8x6xf32>
    %652 = arith.subf %651, %648 : vector<8x6xf32>
    %653 = arith.mulf %652, %652 : vector<8x6xf32>
    %cst_171 = arith.constant 0.000000e+00 : f32
    %654 = vector.broadcast %cst_171 : f32 to vector<8x6xf32>
    %655 = arith.subf %654, %649 : vector<8x6xf32>
    %656 = math.exp %655 : vector<8x6xf32>
    %657 = arith.mulf %653, %656 : vector<8x6xf32>
    %658 = arith.addf %584, %657 : vector<8x6xf32>
    %659 = arith.addf %658, %649 : vector<8x6xf32>
    %c4_172 = arith.constant 4 : index
    %c0_173 = arith.constant 0 : index
    %c0_174 = arith.constant 0 : index
    %660 = vector.load %arg4[%c4_172, %c0_173, %c0_174] : memref<7x8x6xf32, #tpu.memory_space<vmem>>, vector<1x8x6xf32>
    %661 = vector.shape_cast %660 : vector<1x8x6xf32> to vector<8x6xf32>
    %cst_175 = arith.constant 5.000000e-01 : f32
    %662 = vector.broadcast %cst_175 : f32 to vector<8x6xf32>
    %663 = arith.mulf %662, %649 : vector<8x6xf32>
    %664 = math.exp %663 : vector<8x6xf32>
    %665 = arith.mulf %661, %664 : vector<8x6xf32>
    %666 = arith.addf %648, %665 : vector<8x6xf32>
    %667 = vector.extract_strided_slice %629 {offsets = [0, 0], sizes = [8, 96], strides = [1, 1]} : vector<8x128xf32> to vector<8x96xf32>
    %668 = arith.truncf %666 : vector<8x6xf32> to vector<8x6xbf16>
    %cst_176 = arith.constant dense<0.000000e+00> : vector<8x96xf32>
    %669 = tpu.matmul %668, %312, %cst_176 {dimension_numbers = #tpu.dot_dimension_numbers<[1], [0], [0], [1], [0, 0, 1, 1], [], []>} : vector<8x6xbf16>, vector<6x96xbf16>, vector<8x96xf32> -> vector<8x96xf32>
    %670 = arith.addf %667, %669 : vector<8x96xf32>
    %671 = vector.broadcast %313 : vector<1x96xf32> to vector<8x96xf32>
    %672 = arith.addf %670, %671 : vector<8x96xf32>
    %673 = vector.extract_strided_slice %631 {offsets = [0, 0], sizes = [8, 96], strides = [1, 1]} : vector<8x128xf32> to vector<8x96xf32>
    %674 = vector.extract_strided_slice %672 {offsets = [0, 0], sizes = [8, 32], strides = [1, 1]} : vector<8x96xf32> to vector<8x32xf32>
    %675 = vector.extract_strided_slice %673 {offsets = [0, 0], sizes = [8, 32], strides = [1, 1]} : vector<8x96xf32> to vector<8x32xf32>
    %676 = arith.addf %674, %675 : vector<8x32xf32>
    %677 = arith.negf %676 : vector<8x32xf32>
    %678 = math.exp %677 : vector<8x32xf32>
    %cst_177 = arith.constant 1.000000e+00 : f32
    %679 = vector.broadcast %cst_177 : f32 to vector<8x32xf32>
    %680 = arith.addf %679, %678 : vector<8x32xf32>
    %681 = arith.divf %679, %680 : vector<8x32xf32>
    %682 = vector.extract_strided_slice %672 {offsets = [0, 32], sizes = [8, 32], strides = [1, 1]} : vector<8x96xf32> to vector<8x32xf32>
    %683 = vector.extract_strided_slice %673 {offsets = [0, 32], sizes = [8, 32], strides = [1, 1]} : vector<8x96xf32> to vector<8x32xf32>
    %684 = arith.addf %682, %683 : vector<8x32xf32>
    %685 = arith.negf %684 : vector<8x32xf32>
    %686 = math.exp %685 : vector<8x32xf32>
    %cst_178 = arith.constant 1.000000e+00 : f32
    %687 = vector.broadcast %cst_178 : f32 to vector<8x32xf32>
    %688 = arith.addf %687, %686 : vector<8x32xf32>
    %689 = arith.divf %687, %688 : vector<8x32xf32>
    %690 = vector.extract_strided_slice %672 {offsets = [0, 64], sizes = [8, 32], strides = [1, 1]} : vector<8x96xf32> to vector<8x32xf32>
    %691 = vector.extract_strided_slice %673 {offsets = [0, 64], sizes = [8, 32], strides = [1, 1]} : vector<8x96xf32> to vector<8x32xf32>
    %692 = vector.broadcast %314 : vector<1x32xf32> to vector<8x32xf32>
    %693 = arith.addf %691, %692 : vector<8x32xf32>
    %694 = arith.mulf %681, %693 : vector<8x32xf32>
    %695 = arith.addf %690, %694 : vector<8x32xf32>
    %696 = math.tanh %695 : vector<8x32xf32>
    %cst_179 = arith.constant 1.000000e+00 : f32
    %697 = vector.broadcast %cst_179 : f32 to vector<8x32xf32>
    %698 = arith.subf %697, %689 : vector<8x32xf32>
    %699 = arith.mulf %698, %696 : vector<8x32xf32>
    %700 = arith.mulf %689, %626 : vector<8x32xf32>
    %701 = arith.addf %699, %700 : vector<8x32xf32>
    %702 = arith.addf %627, %666 : vector<8x6xf32>
    %703 = arith.truncf %702 : vector<8x6xf32> to vector<8x6xbf16>
    %cst_180 = arith.constant dense<0.000000e+00> : vector<8x128xf32>
    %704 = tpu.matmul %703, %310, %cst_180 {dimension_numbers = #tpu.dot_dimension_numbers<[1], [0], [0], [1], [0, 0, 1, 1], [], []>} : vector<8x6xbf16>, vector<6x128xbf16>, vector<8x128xf32> -> vector<8x128xf32>
    %705 = arith.truncf %701 : vector<8x32xf32> to vector<8x32xbf16>
    %cst_181 = arith.constant dense<0.000000e+00> : vector<8x128xf32>
    %706 = tpu.matmul %705, %311, %cst_181 {dimension_numbers = #tpu.dot_dimension_numbers<[1], [0], [0], [1], [0, 0, 1, 1], [], []>} : vector<8x32xbf16>, vector<32x128xbf16>, vector<8x128xf32> -> vector<8x128xf32>
    %707 = vector.extract_strided_slice %704 {offsets = [0, 96], sizes = [8, 32], strides = [1, 1]} : vector<8x128xf32> to vector<8x32xf32>
    %708 = vector.extract_strided_slice %706 {offsets = [0, 96], sizes = [8, 32], strides = [1, 1]} : vector<8x128xf32> to vector<8x32xf32>
    %709 = arith.addf %707, %708 : vector<8x32xf32>
    %710 = arith.addf %709, %324 : vector<8x32xf32>
    %cst_182 = arith.constant 0.000000e+00 : f32
    %711 = vector.broadcast %cst_182 : f32 to vector<8x32xf32>
    %712 = arith.maximumf %710, %711 : vector<8x32xf32>
    %713 = arith.truncf %712 : vector<8x32xf32> to vector<8x32xbf16>
    %cst_183 = arith.constant dense<0.000000e+00> : vector<8x32xf32>
    %714 = tpu.matmul %713, %315, %cst_183 {dimension_numbers = #tpu.dot_dimension_numbers<[1], [0], [0], [1], [0, 0, 1, 1], [], []>} : vector<8x32xbf16>, vector<32x32xbf16>, vector<8x32xf32> -> vector<8x32xf32>
    %715 = vector.broadcast %316 : vector<1x32xf32> to vector<8x32xf32>
    %716 = arith.addf %714, %715 : vector<8x32xf32>
    %cst_184 = arith.constant 0.000000e+00 : f32
    %717 = vector.broadcast %cst_184 : f32 to vector<8x32xf32>
    %718 = arith.maximumf %716, %717 : vector<8x32xf32>
    %719 = arith.truncf %718 : vector<8x32xf32> to vector<8x32xbf16>
    %cst_185 = arith.constant dense<0.000000e+00> : vector<8x12xf32>
    %720 = tpu.matmul %719, %317, %cst_185 {dimension_numbers = #tpu.dot_dimension_numbers<[1], [0], [0], [1], [0, 0, 1, 1], [], []>} : vector<8x32xbf16>, vector<32x12xbf16>, vector<8x12xf32> -> vector<8x12xf32>
    %721 = vector.broadcast %318 : vector<1x12xf32> to vector<8x12xf32>
    %722 = arith.addf %720, %721 : vector<8x12xf32>
    %723 = vector.extract_strided_slice %722 {offsets = [0, 0], sizes = [8, 6], strides = [1, 1]} : vector<8x12xf32> to vector<8x6xf32>
    %724 = vector.extract_strided_slice %722 {offsets = [0, 6], sizes = [8, 6], strides = [1, 1]} : vector<8x12xf32> to vector<8x6xf32>
    %c5 = arith.constant 5 : index
    %c0_186 = arith.constant 0 : index
    %c0_187 = arith.constant 0 : index
    %725 = vector.load %arg2[%c5, %c0_186, %c0_187] : memref<7x8x6xf32, #tpu.memory_space<vmem>>, vector<1x8x6xf32>
    %726 = vector.shape_cast %725 : vector<1x8x6xf32> to vector<8x6xf32>
    %727 = arith.subf %726, %723 : vector<8x6xf32>
    %728 = arith.mulf %727, %727 : vector<8x6xf32>
    %cst_188 = arith.constant 0.000000e+00 : f32
    %729 = vector.broadcast %cst_188 : f32 to vector<8x6xf32>
    %730 = arith.subf %729, %724 : vector<8x6xf32>
    %731 = math.exp %730 : vector<8x6xf32>
    %732 = arith.mulf %728, %731 : vector<8x6xf32>
    %733 = arith.addf %659, %732 : vector<8x6xf32>
    %734 = arith.addf %733, %724 : vector<8x6xf32>
    %c5_189 = arith.constant 5 : index
    %c0_190 = arith.constant 0 : index
    %c0_191 = arith.constant 0 : index
    %735 = vector.load %arg4[%c5_189, %c0_190, %c0_191] : memref<7x8x6xf32, #tpu.memory_space<vmem>>, vector<1x8x6xf32>
    %736 = vector.shape_cast %735 : vector<1x8x6xf32> to vector<8x6xf32>
    %cst_192 = arith.constant 5.000000e-01 : f32
    %737 = vector.broadcast %cst_192 : f32 to vector<8x6xf32>
    %738 = arith.mulf %737, %724 : vector<8x6xf32>
    %739 = math.exp %738 : vector<8x6xf32>
    %740 = arith.mulf %736, %739 : vector<8x6xf32>
    %741 = arith.addf %723, %740 : vector<8x6xf32>
    %742 = vector.extract_strided_slice %704 {offsets = [0, 0], sizes = [8, 96], strides = [1, 1]} : vector<8x128xf32> to vector<8x96xf32>
    %743 = arith.truncf %741 : vector<8x6xf32> to vector<8x6xbf16>
    %cst_193 = arith.constant dense<0.000000e+00> : vector<8x96xf32>
    %744 = tpu.matmul %743, %312, %cst_193 {dimension_numbers = #tpu.dot_dimension_numbers<[1], [0], [0], [1], [0, 0, 1, 1], [], []>} : vector<8x6xbf16>, vector<6x96xbf16>, vector<8x96xf32> -> vector<8x96xf32>
    %745 = arith.addf %742, %744 : vector<8x96xf32>
    %746 = vector.broadcast %313 : vector<1x96xf32> to vector<8x96xf32>
    %747 = arith.addf %745, %746 : vector<8x96xf32>
    %748 = vector.extract_strided_slice %706 {offsets = [0, 0], sizes = [8, 96], strides = [1, 1]} : vector<8x128xf32> to vector<8x96xf32>
    %749 = vector.extract_strided_slice %747 {offsets = [0, 0], sizes = [8, 32], strides = [1, 1]} : vector<8x96xf32> to vector<8x32xf32>
    %750 = vector.extract_strided_slice %748 {offsets = [0, 0], sizes = [8, 32], strides = [1, 1]} : vector<8x96xf32> to vector<8x32xf32>
    %751 = arith.addf %749, %750 : vector<8x32xf32>
    %752 = arith.negf %751 : vector<8x32xf32>
    %753 = math.exp %752 : vector<8x32xf32>
    %cst_194 = arith.constant 1.000000e+00 : f32
    %754 = vector.broadcast %cst_194 : f32 to vector<8x32xf32>
    %755 = arith.addf %754, %753 : vector<8x32xf32>
    %756 = arith.divf %754, %755 : vector<8x32xf32>
    %757 = vector.extract_strided_slice %747 {offsets = [0, 32], sizes = [8, 32], strides = [1, 1]} : vector<8x96xf32> to vector<8x32xf32>
    %758 = vector.extract_strided_slice %748 {offsets = [0, 32], sizes = [8, 32], strides = [1, 1]} : vector<8x96xf32> to vector<8x32xf32>
    %759 = arith.addf %757, %758 : vector<8x32xf32>
    %760 = arith.negf %759 : vector<8x32xf32>
    %761 = math.exp %760 : vector<8x32xf32>
    %cst_195 = arith.constant 1.000000e+00 : f32
    %762 = vector.broadcast %cst_195 : f32 to vector<8x32xf32>
    %763 = arith.addf %762, %761 : vector<8x32xf32>
    %764 = arith.divf %762, %763 : vector<8x32xf32>
    %765 = vector.extract_strided_slice %747 {offsets = [0, 64], sizes = [8, 32], strides = [1, 1]} : vector<8x96xf32> to vector<8x32xf32>
    %766 = vector.extract_strided_slice %748 {offsets = [0, 64], sizes = [8, 32], strides = [1, 1]} : vector<8x96xf32> to vector<8x32xf32>
    %767 = vector.broadcast %314 : vector<1x32xf32> to vector<8x32xf32>
    %768 = arith.addf %766, %767 : vector<8x32xf32>
    %769 = arith.mulf %756, %768 : vector<8x32xf32>
    %770 = arith.addf %765, %769 : vector<8x32xf32>
    %771 = math.tanh %770 : vector<8x32xf32>
    %cst_196 = arith.constant 1.000000e+00 : f32
    %772 = vector.broadcast %cst_196 : f32 to vector<8x32xf32>
    %773 = arith.subf %772, %764 : vector<8x32xf32>
    %774 = arith.mulf %773, %771 : vector<8x32xf32>
    %775 = arith.mulf %764, %701 : vector<8x32xf32>
    %776 = arith.addf %774, %775 : vector<8x32xf32>
    %777 = arith.addf %702, %741 : vector<8x6xf32>
    %778 = arith.truncf %777 : vector<8x6xf32> to vector<8x6xbf16>
    %cst_197 = arith.constant dense<0.000000e+00> : vector<8x128xf32>
    %779 = tpu.matmul %778, %310, %cst_197 {dimension_numbers = #tpu.dot_dimension_numbers<[1], [0], [0], [1], [0, 0, 1, 1], [], []>} : vector<8x6xbf16>, vector<6x128xbf16>, vector<8x128xf32> -> vector<8x128xf32>
    %780 = arith.truncf %776 : vector<8x32xf32> to vector<8x32xbf16>
    %cst_198 = arith.constant dense<0.000000e+00> : vector<8x128xf32>
    %781 = tpu.matmul %780, %311, %cst_198 {dimension_numbers = #tpu.dot_dimension_numbers<[1], [0], [0], [1], [0, 0, 1, 1], [], []>} : vector<8x32xbf16>, vector<32x128xbf16>, vector<8x128xf32> -> vector<8x128xf32>
    %782 = vector.extract_strided_slice %779 {offsets = [0, 96], sizes = [8, 32], strides = [1, 1]} : vector<8x128xf32> to vector<8x32xf32>
    %783 = vector.extract_strided_slice %781 {offsets = [0, 96], sizes = [8, 32], strides = [1, 1]} : vector<8x128xf32> to vector<8x32xf32>
    %784 = arith.addf %782, %783 : vector<8x32xf32>
    %785 = arith.addf %784, %324 : vector<8x32xf32>
    %cst_199 = arith.constant 0.000000e+00 : f32
    %786 = vector.broadcast %cst_199 : f32 to vector<8x32xf32>
    %787 = arith.maximumf %785, %786 : vector<8x32xf32>
    %788 = arith.truncf %787 : vector<8x32xf32> to vector<8x32xbf16>
    %cst_200 = arith.constant dense<0.000000e+00> : vector<8x32xf32>
    %789 = tpu.matmul %788, %315, %cst_200 {dimension_numbers = #tpu.dot_dimension_numbers<[1], [0], [0], [1], [0, 0, 1, 1], [], []>} : vector<8x32xbf16>, vector<32x32xbf16>, vector<8x32xf32> -> vector<8x32xf32>
    %790 = vector.broadcast %316 : vector<1x32xf32> to vector<8x32xf32>
    %791 = arith.addf %789, %790 : vector<8x32xf32>
    %cst_201 = arith.constant 0.000000e+00 : f32
    %792 = vector.broadcast %cst_201 : f32 to vector<8x32xf32>
    %793 = arith.maximumf %791, %792 : vector<8x32xf32>
    %794 = arith.truncf %793 : vector<8x32xf32> to vector<8x32xbf16>
    %cst_202 = arith.constant dense<0.000000e+00> : vector<8x12xf32>
    %795 = tpu.matmul %794, %317, %cst_202 {dimension_numbers = #tpu.dot_dimension_numbers<[1], [0], [0], [1], [0, 0, 1, 1], [], []>} : vector<8x32xbf16>, vector<32x12xbf16>, vector<8x12xf32> -> vector<8x12xf32>
    %796 = vector.broadcast %318 : vector<1x12xf32> to vector<8x12xf32>
    %797 = arith.addf %795, %796 : vector<8x12xf32>
    %798 = vector.extract_strided_slice %797 {offsets = [0, 0], sizes = [8, 6], strides = [1, 1]} : vector<8x12xf32> to vector<8x6xf32>
    %799 = vector.extract_strided_slice %797 {offsets = [0, 6], sizes = [8, 6], strides = [1, 1]} : vector<8x12xf32> to vector<8x6xf32>
    %c6 = arith.constant 6 : index
    %c0_203 = arith.constant 0 : index
    %c0_204 = arith.constant 0 : index
    %800 = vector.load %arg2[%c6, %c0_203, %c0_204] : memref<7x8x6xf32, #tpu.memory_space<vmem>>, vector<1x8x6xf32>
    %801 = vector.shape_cast %800 : vector<1x8x6xf32> to vector<8x6xf32>
    %802 = arith.subf %801, %798 : vector<8x6xf32>
    %803 = arith.mulf %802, %802 : vector<8x6xf32>
    %cst_205 = arith.constant 0.000000e+00 : f32
    %804 = vector.broadcast %cst_205 : f32 to vector<8x6xf32>
    %805 = arith.subf %804, %799 : vector<8x6xf32>
    %806 = math.exp %805 : vector<8x6xf32>
    %807 = arith.mulf %803, %806 : vector<8x6xf32>
    %808 = arith.addf %734, %807 : vector<8x6xf32>
    %809 = arith.addf %808, %799 : vector<8x6xf32>
    %810 = vector.shape_cast %809 : vector<8x6xf32> to vector<1x8x6xf32>
    %cst_206 = arith.constant dense<0.000000e+00> : vector<1xf32>
    %811 = vector.multi_reduction <add>, %810, %cst_206 [1, 2] : vector<1x8x6xf32> to vector<1xf32>
    %812 = vector.shape_cast %811 : vector<1xf32> to vector<1x1x1xf32>
    %813 = vector.extract %812[0, 0, 0] : f32 from vector<1x1x1xf32>
    %cst_207 = arith.constant 617.526672 : f32
    %814 = arith.addf %813, %cst_207 : f32
    %cst_208 = arith.constant 5.000000e-01 : f32
    %815 = arith.mulf %cst_208, %814 : f32
    %c0_209 = arith.constant 0 : index
    %816 = memref.load %arg26[%c0_209] : memref<2xf32, #tpu.memory_space<smem>>
    memref.store %815, %arg26[%c0_209] : memref<2xf32, #tpu.memory_space<smem>>
    %c1_210 = arith.constant 1 : index
    %817 = memref.load %arg26[%c1_210] : memref<2xf32, #tpu.memory_space<smem>>
    memref.store %303, %arg26[%c1_210] : memref<2xf32, #tpu.memory_space<smem>>
    return
  }
}

</mosaic_0001>

<llo_original>
// kernel: trajectory_model_forward.1
$region0: #{trajectory_model_forward.1}
  #allocation0 [shape = 'u32[]', space=smem, size = 0x4, offset = 0x4, fixed_abs, tag = 'smem constant byte address 0x4 - core index']
  #allocation1 [shape = 'u32[72,128]{1,0:T(1,128)}', space=vmem, size = 0x9000, scoped, tag = 'internal scratch']
  %s0 = inlined_call_operand.vmem [shape: bf16[64,12], index: 0, kind: input, shape index: {}]
  %s1 = inlined_call_operand.vmem [shape: f32[8,6], index: 1, kind: input, shape index: {}]
  %s2 = inlined_call_operand.vmem [shape: f32[7,8,6], index: 2, kind: input, shape index: {}]
  %s3 = inlined_call_operand.vmem [shape: f32[8,8], index: 3, kind: input, shape index: {}]
  %s4 = inlined_call_operand.vmem [shape: f32[7,8,6], index: 4, kind: input, shape index: {}]
  %s5 = inlined_call_operand.vmem [shape: bf16[12,192], index: 5, kind: input, shape index: {}]
  %s6 = inlined_call_operand.vmem [shape: f32[1,192], index: 6, kind: input, shape index: {}]
  %s7 = inlined_call_operand.vmem [shape: bf16[64,192], index: 7, kind: input, shape index: {}]
  %s8 = inlined_call_operand.vmem [shape: f32[1,64], index: 8, kind: input, shape index: {}]
  %s9 = inlined_call_operand.vmem [shape: bf16[64,32], index: 9, kind: input, shape index: {}]
  %s10 = inlined_call_operand.vmem [shape: f32[1,32], index: 10, kind: input, shape index: {}]
  %s11 = inlined_call_operand.vmem [shape: bf16[32,32], index: 11, kind: input, shape index: {}]
  %s12 = inlined_call_operand.vmem [shape: f32[1,32], index: 12, kind: input, shape index: {}]
  %s13 = inlined_call_operand.vmem [shape: bf16[32,16], index: 13, kind: input, shape index: {}]
  %s14 = inlined_call_operand.vmem [shape: f32[1,16], index: 14, kind: input, shape index: {}]
  %s15 = inlined_call_operand.vmem [shape: bf16[6,128], index: 15, kind: input, shape index: {}]
  %s16 = inlined_call_operand.vmem [shape: bf16[32,128], index: 16, kind: input, shape index: {}]
  %s17 = inlined_call_operand.vmem [shape: bf16[6,96], index: 17, kind: input, shape index: {}]
  %s18 = inlined_call_operand.vmem [shape: f32[1,96], index: 18, kind: input, shape index: {}]
  %s19 = inlined_call_operand.vmem [shape: f32[1,32], index: 19, kind: input, shape index: {}]
  %s20 = inlined_call_operand.vmem [shape: bf16[8,32], index: 20, kind: input, shape index: {}]
  %s21 = inlined_call_operand.vmem [shape: f32[1,32], index: 21, kind: input, shape index: {}]
  %s22 = inlined_call_operand.vmem [shape: bf16[32,32], index: 22, kind: input, shape index: {}]
  %s23 = inlined_call_operand.vmem [shape: f32[1,32], index: 23, kind: input, shape index: {}]
  %s24 = inlined_call_operand.vmem [shape: bf16[32,12], index: 24, kind: input, shape index: {}]
  %s25 = inlined_call_operand.vmem [shape: f32[1,12], index: 25, kind: input, shape index: {}]
  %s26 = inlined_call_operand.vmem [shape: f32[2], index: 26, kind: output, shape index: {}]
  %s27 = sld [smem:[#allocation0]]
  $region114: #{trajectory_model_forward.1} parent=0
    _
  %s29 = ssub.s32 1, %s27
  %s30 = scalar_select 0, %s29, %s27
  $region1: #{trajectory_model_forward.1} parent=0
    #allocation2 [shape = 'u8[512]{0}', space=smem, size = 0x200, scoped, tag = 'output window, operand 0, single buffered']
    #allocation3 [shape = 's32[1]{0}', space=sflag, size = 0x4, scoped, tag = 'scoped memory for trajectory_model_forward.1']
    %31 = vsyncpa [#allocation3], 0
    // Predicated region
    $region2: #{trajectory_model_forward.1} parent=1 // pred_check
      _
    $region3: #{trajectory_model_forward.1} parent=1 // pred_check_branch
      %33 = sbr.rel (0) target = $region5
    $region4: #{trajectory_model_forward.1} parent=1 // pred_region
      _
    $region5: #{trajectory_model_forward.1} parent=1 // pred_fallthru
      _
    // Predicated region
    $region6: #{trajectory_model_forward.1} parent=1 // pred_check
      _
    $region7: #{trajectory_model_forward.1} parent=1 // pred_check_branch
      %35 = sbr.rel (0) target = $region9
    $region8: #{trajectory_model_forward.1} parent=1 // pred_region
      _
    $region9: #{trajectory_model_forward.1} parent=1 // pred_fallthru
      _
    // Predicated region
    $region10: #{trajectory_model_forward.1} parent=1 // pred_check
      _
    $region11: #{trajectory_model_forward.1} parent=1 // pred_check_branch
      %37 = sbr.rel (0) target = $region13
    $region12: #{trajectory_model_forward.1} parent=1 // pred_region
      _
    $region13: #{trajectory_model_forward.1} parent=1 // pred_fallthru
      _
    // Predicated region
    $region14: #{trajectory_model_forward.1} parent=1 // pred_check
      _
    $region15: #{trajectory_model_forward.1} parent=1 // pred_check_branch
      %39 = sbr.rel (0) target = $region17
    $region16: #{trajectory_model_forward.1} parent=1 // pred_region
      _
    $region17: #{trajectory_model_forward.1} parent=1 // pred_fallthru
      _
    // Predicated region
    $region18: #{trajectory_model_forward.1} parent=1 // pred_check
      _
    $region19: #{trajectory_model_forward.1} parent=1 // pred_check_branch
      %41 = sbr.rel (0) target = $region21
    $region20: #{trajectory_model_forward.1} parent=1 // pred_region
      _
    $region21: #{trajectory_model_forward.1} parent=1 // pred_fallthru
      _
    // Predicated region
    $region22: #{trajectory_model_forward.1} parent=1 // pred_check
      _
    $region23: #{trajectory_model_forward.1} parent=1 // pred_check_branch
      %43 = sbr.rel (0) target = $region25
    $region24: #{trajectory_model_forward.1} parent=1 // pred_region
      _
    $region25: #{trajectory_model_forward.1} parent=1 // pred_fallthru
      _
    // Predicated region
    $region26: #{trajectory_model_forward.1} parent=1 // pred_check
      _
    $region27: #{trajectory_model_forward.1} parent=1 // pred_check_branch
      %45 = sbr.rel (0) target = $region29
    $region28: #{trajectory_model_forward.1} parent=1 // pred_region
      _
    $region29: #{trajectory_model_forward.1} parent=1 // pred_fallthru
      _
    // Predicated region
    $region30: #{trajectory_model_forward.1} parent=1 // pred_check
      _
    $region31: #{trajectory_model_forward.1} parent=1 // pred_check_branch
      %47 = sbr.rel (0) target = $region33
    $region32: #{trajectory_model_forward.1} parent=1 // pred_region
      _
    $region33: #{trajectory_model_forward.1} parent=1 // pred_fallthru
      _
    // Predicated region
    $region34: #{trajectory_model_forward.1} parent=1 // pred_check
      _
    $region35: #{trajectory_model_forward.1} parent=1 // pred_check_branch
      %49 = sbr.rel (0) target = $region37
    $region36: #{trajectory_model_forward.1} parent=1 // pred_region
      _
    $region37: #{trajectory_model_forward.1} parent=1 // pred_fallthru
      _
    // Predicated region
    $region38: #{trajectory_model_forward.1} parent=1 // pred_check
      _
    $region39: #{trajectory_model_forward.1} parent=1 // pred_check_branch
      %51 = sbr.rel (0) target = $region41
    $region40: #{trajectory_model_forward.1} parent=1 // pred_region
      _
    $region41: #{trajectory_model_forward.1} parent=1 // pred_fallthru
      _
    // Predicated region
    $region42: #{trajectory_model_forward.1} parent=1 // pred_check
      _
    $region43: #{trajectory_model_forward.1} parent=1 // pred_check_branch
      %53 = sbr.rel (0) target = $region45
    $region44: #{trajectory_model_forward.1} parent=1 // pred_region
      _
    $region45: #{trajectory_model_forward.1} parent=1 // pred_fallthru
      _
    // Predicated region
    $region46: #{trajectory_model_forward.1} parent=1 // pred_check
      _
    $region47: #{trajectory_model_forward.1} parent=1 // pred_check_branch
      %55 = sbr.rel (0) target = $region49
    $region48: #{trajectory_model_forward.1} parent=1 // pred_region
      _
    $region49: #{trajectory_model_forward.1} parent=1 // pred_fallthru
      _
    // Predicated region
    $region50: #{trajectory_model_forward.1} parent=1 // pred_check
      _
    $region51: #{trajectory_model_forward.1} parent=1 // pred_check_branch
      %57 = sbr.rel (0) target = $region53
    $region52: #{trajectory_model_forward.1} parent=1 // pred_region
      _
    $region53: #{trajectory_model_forward.1} parent=1 // pred_fallthru
      _
    // Predicated region
    $region54: #{trajectory_model_forward.1} parent=1 // pred_check
      _
    $region55: #{trajectory_model_forward.1} parent=1 // pred_check_branch
      %59 = sbr.rel (0) target = $region57
    $region56: #{trajectory_model_forward.1} parent=1 // pred_region
      _
    $region57: #{trajectory_model_forward.1} parent=1 // pred_fallthru
      _
    // Predicated region
    $region58: #{trajectory_model_forward.1} parent=1 // pred_check
      _
    $region59: #{trajectory_model_forward.1} parent=1 // pred_check_branch
      %61 = sbr.rel (0) target = $region61
    $region60: #{trajectory_model_forward.1} parent=1 // pred_region
      _
    $region61: #{trajectory_model_forward.1} parent=1 // pred_fallthru
      _
    // Predicated region
    $region62: #{trajectory_model_forward.1} parent=1 // pred_check
      _
    $region63: #{trajectory_model_forward.1} parent=1 // pred_check_branch
      %63 = sbr.rel (0) target = $region65
    $region64: #{trajectory_model_forward.1} parent=1 // pred_region
      _
    $region65: #{trajectory_model_forward.1} parent=1 // pred_fallthru
      _
    // Predicated region
    $region66: #{trajectory_model_forward.1} parent=1 // pred_check
      _
    $region67: #{trajectory_model_forward.1} parent=1 // pred_check_branch
      %65 = sbr.rel (0) target = $region69
    $region68: #{trajectory_model_forward.1} parent=1 // pred_region
      _
    $region69: #{trajectory_model_forward.1} parent=1 // pred_fallthru
      _
    // Predicated region
    $region70: #{trajectory_model_forward.1} parent=1 // pred_check
      _
    $region71: #{trajectory_model_forward.1} parent=1 // pred_check_branch
      %67 = sbr.rel (0) target = $region73
    $region72: #{trajectory_model_forward.1} parent=1 // pred_region
      _
    $region73: #{trajectory_model_forward.1} parent=1 // pred_fallthru
      _
    // Predicated region
    $region74: #{trajectory_model_forward.1} parent=1 // pred_check
      _
    $region75: #{trajectory_model_forward.1} parent=1 // pred_check_branch
      %69 = sbr.rel (0) target = $region77
    $region76: #{trajectory_model_forward.1} parent=1 // pred_region
      _
    $region77: #{trajectory_model_forward.1} parent=1 // pred_fallthru
      _
    // Predicated region
    $region78: #{trajectory_model_forward.1} parent=1 // pred_check
      _
    $region79: #{trajectory_model_forward.1} parent=1 // pred_check_branch
      %71 = sbr.rel (0) target = $region81
    $region80: #{trajectory_model_forward.1} parent=1 // pred_region
      _
    $region81: #{trajectory_model_forward.1} parent=1 // pred_fallthru
      _
    // Predicated region
    $region82: #{trajectory_model_forward.1} parent=1 // pred_check
      _
    $region83: #{trajectory_model_forward.1} parent=1 // pred_check_branch
      %73 = sbr.rel (0) target = $region85
    $region84: #{trajectory_model_forward.1} parent=1 // pred_region
      _
    $region85: #{trajectory_model_forward.1} parent=1 // pred_fallthru
      _
    // Predicated region
    $region86: #{trajectory_model_forward.1} parent=1 // pred_check
      _
    $region87: #{trajectory_model_forward.1} parent=1 // pred_check_branch
      %75 = sbr.rel (0) target = $region89
    $region88: #{trajectory_model_forward.1} parent=1 // pred_region
      _
    $region89: #{trajectory_model_forward.1} parent=1 // pred_fallthru
      _
    // Predicated region
    $region90: #{trajectory_model_forward.1} parent=1 // pred_check
      _
    $region91: #{trajectory_model_forward.1} parent=1 // pred_check_branch
      %77 = sbr.rel (0) target = $region93
    $region92: #{trajectory_model_forward.1} parent=1 // pred_region
      _
    $region93: #{trajectory_model_forward.1} parent=1 // pred_fallthru
      _
    // Predicated region
    $region94: #{trajectory_model_forward.1} parent=1 // pred_check
      _
    $region95: #{trajectory_model_forward.1} parent=1 // pred_check_branch
      %79 = sbr.rel (0) target = $region97
    $region96: #{trajectory_model_forward.1} parent=1 // pred_region
      _
    $region97: #{trajectory_model_forward.1} parent=1 // pred_fallthru
      _
    // Predicated region
    $region98: #{trajectory_model_forward.1} parent=1 // pred_check
      _
    $region99: #{trajectory_model_forward.1} parent=1 // pred_check_branch
      %81 = sbr.rel (0) target = $region101
    $region100: #{trajectory_model_forward.1} parent=1 // pred_region
      _
    $region101: #{trajectory_model_forward.1} parent=1 // pred_fallthru
      _
    // Predicated region
    $region102: #{trajectory_model_forward.1} parent=1 // pred_check
      _
    $region103: #{trajectory_model_forward.1} parent=1 // pred_check_branch
      %83 = sbr.rel (0) target = $region105
    $region104: #{trajectory_model_forward.1} parent=1 // pred_region
      _
    $region105: #{trajectory_model_forward.1} parent=1 // pred_fallthru
      _
    %v85 = vld [vmem:[%s0] sm:$0xf]
    %v86 = vld [vmem:[%s0 + $0x4] sm:$0xf]
    %v87 = vld [vmem:[%s0 + $0x8] sm:$0xf]
    %v88 = vld [vmem:[%s0 + $0xc] sm:$0xf]
    %v89 = vld [vmem:[%s0 + $0x10] sm:$0xf]
    %v90 = vld [vmem:[%s0 + $0x14] sm:$0xf]
    %v91 = vld [vmem:[%s0 + $0x18] sm:$0xf]
    %v92 = vld [vmem:[%s0 + $0x1c] sm:$0xf]
    %v93 = vld [vmem:[%s5] sm:$0xff]
    %v94 = vld [vmem:[%s5 + $0x8] sm:$0x33]
    %v95 = vld [vmem:[%s6] sm:$0x3]
    %v97 = vperm.slane %v95, 0
    %v98 = vperm.slane %v95, 1
    %v109 = vunpack.c.l.b16 %v85
    %v110 = vunpack.c.l.b16 %v86
    %v111 = vunpack.c.l.b16 %v87
    %v112 = vunpack.c.l.b16 %v88
    %v113 = vunpack.c.l.b16 %v89
    %v114 = vunpack.c.l.b16 %v90
    %v115 = vunpack.c.l.b16 %v91
    %v116 = vunpack.c.l.b16 %v92
    %v117 = vpack.c.b16 %v110, %v109
    %v118 = vpack.c.b16 %v112, %v111
    %v119 = vpack.c.b16 %v114, %v113
    %v120 = vpack.c.b16 %v116, %v115
    %v123 = vunpack.c.l.b16 %v93
    %v124 = vunpack.c.h.b16 %v93
    %v125 = vunpack.c.l.b16 %v94
    %v126 = vunpack.c.h.b16 %v94
    %v127 = vpack.c.b16 %v125, %v123
    %v128 = vpack.c.b16 %v126, %v124
    %vm129 = vcmask 97280
    %v131 = vsel %vm129, %v117, 0
    %v134 = vsel %vm129, %v118, 0
    %v137 = vsel %vm129, %v119, 0
    %v140 = vsel %vm129, %v120, 0
    %vm142 = vcmask 1045504
    %v144 = vsel %vm142, %v127, 0
    %v147 = vsel %vm142, %v128, 0
    %149 = vmatpush.bf16.msra.mxu0 0
    %150 = vmatpush.bf16.msra.mxu0 0
    %151 = vmatpush.bf16.msra.mxu0 0
    %152 = vmatpush.bf16.msra.mxu0 0
    %153 = vmatpush.bf16.msra.mxu0 0
    %154 = vmatpush.bf16.msra.mxu0 0
    %155 = vmatpush.bf16.msra.mxu0 0
    %156 = vmatpush.bf16.msra.mxu0 %v144
    %157 = vmatmul.bf16.gmra.mxu0 %v131
    %v158 = vpop.f32.mrf.mxu0
    %v159 = vadd.f32 %v97, %v158
    %v160 = vpop.f32.mrf.mxu0
    %v161 = vadd.f32 %v97, %v160
    %162 = vmatmul.bf16.gmra.mxu0 %v134
    %v163 = vpop.f32.mrf.mxu0
    %v164 = vadd.f32 %v97, %v163
    %v165 = vpop.f32.mrf.mxu0
    %v166 = vadd.f32 %v97, %v165
    %167 = vmatmul.bf16.gmra.mxu0 %v137
    %v168 = vpop.f32.mrf.mxu0
    %v169 = vadd.f32 %v97, %v168
    %v170 = vpop.f32.mrf.mxu0
    %v171 = vadd.f32 %v97, %v170
    %172 = vmatmul.bf16.gmra.mxu0 %v140
    %v173 = vpop.f32.mrf.mxu0
    %v174 = vadd.f32 %v97, %v173
    %v175 = vpop.f32.mrf.mxu0
    %v176 = vadd.f32 %v97, %v175
    %177 = vdwg.mxu0
    %178 = vmatpush.bf16.msra.mxu0 0
    %179 = vmatpush.bf16.msra.mxu0 0
    %180 = vmatpush.bf16.msra.mxu0 0
    %181 = vmatpush.bf16.msra.mxu0 0
    %182 = vmatpush.bf16.msra.mxu0 0
    %183 = vmatpush.bf16.msra.mxu0 0
    %184 = vmatpush.bf16.msra.mxu0 0
    %185 = vmatpush.bf16.msra.mxu0 %v147
    %186 = vmatmul.bf16.gmra.mxu0 %v131
    %v187 = vpop.f32.mrf.mxu0
    %v188 = vadd.f32 %v98, %v187
    %v189 = vpop.f32.mrf.mxu0
    %v190 = vadd.f32 %v98, %v189
    %191 = vmatmul.bf16.gmra.mxu0 %v134
    %v192 = vpop.f32.mrf.mxu0
    %v193 = vadd.f32 %v98, %v192
    %v194 = vpop.f32.mrf.mxu0
    %v195 = vadd.f32 %v98, %v194
    %196 = vmatmul.bf16.gmra.mxu0 %v137
    %v197 = vpop.f32.mrf.mxu0
    %v198 = vadd.f32 %v98, %v197
    %v199 = vpop.f32.mrf.mxu0
    %v200 = vadd.f32 %v98, %v199
    %201 = vmatmul.bf16.gmra.mxu0 %v140
    %v202 = vpop.f32.mrf.mxu0
    %v203 = vadd.f32 %v98, %v202
    %v204 = vpop.f32.mrf.mxu0
    %v205 = vadd.f32 %v98, %v204
    %206 = vdwg.mxu0
    %v207 = vld [vmem:[%s7] sm:$0xff]
    %v208 = vld [vmem:[%s7 + $0x8] sm:$0xff]
    %v209 = vld [vmem:[%s7 + $0x10] sm:$0xff]
    %v210 = vld [vmem:[%s7 + $0x18] sm:$0xff]
    %v211 = vld [vmem:[%s7 + $0x20] sm:$0xff]
    %v212 = vld [vmem:[%s7 + $0x28] sm:$0xff]
    %v213 = vld [vmem:[%s7 + $0x30] sm:$0xff]
    %v214 = vld [vmem:[%s7 + $0x38] sm:$0xff]
    %v215 = vld [vmem:[%s8] sm:$0x1]
    %v224 = vunpack.c.l.b16 %v207
    %v225 = vunpack.c.h.b16 %v207
    %v226 = vunpack.c.l.b16 %v208
    %v227 = vunpack.c.h.b16 %v208
    %v228 = vunpack.c.l.b16 %v209
    %v229 = vunpack.c.h.b16 %v209
    %v230 = vunpack.c.l.b16 %v210
    %v231 = vunpack.c.h.b16 %v210
    %v232 = vunpack.c.l.b16 %v211
    %v233 = vunpack.c.h.b16 %v211
    %v234 = vunpack.c.l.b16 %v212
    %v235 = vunpack.c.h.b16 %v212
    %v236 = vunpack.c.l.b16 %v213
    %v237 = vunpack.c.h.b16 %v213
    %v238 = vunpack.c.l.b16 %v214
    %v239 = vunpack.c.h.b16 %v214
    %v240 = vpack.c.b16 %v226, %v224
    %v241 = vpack.c.b16 %v227, %v225
    %v242 = vpack.c.b16 %v230, %v228
    %v243 = vpack.c.b16 %v231, %v229
    %v244 = vpack.c.b16 %v234, %v232
    %v245 = vpack.c.b16 %v235, %v233
    %v246 = vpack.c.b16 %v238, %v236
    %v247 = vpack.c.b16 %v239, %v237
    %vm256 = vcmask 523264
    %v258 = vsel %vm256, 0, 0
    %260 = vmatpush.bf16.msra.mxu0 0
    %261 = vmatpush.bf16.msra.mxu0 0
    %262 = vmatpush.bf16.msra.mxu0 0
    %263 = vmatpush.bf16.msra.mxu0 0
    %264 = vmatpush.bf16.msra.mxu0 %v246
    %265 = vmatpush.bf16.msra.mxu0 %v244
    %266 = vmatpush.bf16.msra.mxu0 %v242
    %267 = vmatpush.bf16.msra.mxu0 %v240
    %268 = vmatmul.bf16.gmra.mxu0 %v258
    %v269 = vpop.f32.mrf.mxu0
    %v270 = vadd.f32 0.0, %v269
    %v271 = vpop.f32.mrf.mxu0
    %272 = vdwg.mxu0
    %273 = vmatpush.bf16.msra.mxu0 0
    %274 = vmatpush.bf16.msra.mxu0 0
    %275 = vmatpush.bf16.msra.mxu0 0
    %276 = vmatpush.bf16.msra.mxu0 0
    %277 = vmatpush.bf16.msra.mxu0 %v247
    %278 = vmatpush.bf16.msra.mxu0 %v245
    %279 = vmatpush.bf16.msra.mxu0 %v243
    %280 = vmatpush.bf16.msra.mxu0 %v241
    %281 = vmatmul.bf16.gmra.mxu0 %v258
    %v282 = vpop.f32.mrf.mxu0
    %v283 = vadd.f32 0.0, %v282
    %v284 = vpop.f32.mrf.mxu0
    %285 = vdwg.mxu0
    %v286 = vadd.f32 %v159, %v270
    %v287 = vxor.u32 %v286, 2147483648
    %v288 = vmul.f32 %v287, 1.442695
    %v289 = vpow.pop %v288
    %v290 = vadd.f32 %v289, 1.0
    %v291 = vrcp.pop %v290
    %v292 = vmul.f32 %v290, %v291
    %v293 = vsub.f32 1.0, %v292
    %v294 = vmul.f32 %v291, %v293
    %v295 = vadd.f32 %v291, %v294
    %vm296 = vweird.f32 %v290
    %vm297 = vweird.f32 %v291
    %vm298 = vmor %vm296, %vm297
    %v299 = vsel %vm298, %v291, %v295
    %v300 = vand.u32 2147483647, %v290
    %vm301 = vcmp.eq.f32.partialorder %v300, 8.507059e+37
    %v302 = vand.u32 %v290, 2147483648
    %v303 = vor.u32 1.1754944e-38, %v302
    %v304 = vsel %vm301, %v303, %v299
    %v305 = vmul.f32 1.0, %v304
    %v307 = vperm.slane %v215, 0
    %v309 = vadd.f32 %v283, %v307
    %v310 = vmul.f32 %v305, %v309
    %v311 = vadd.f32 %v188, %v310
    %v312 = vtanh.pop %v311
    %v313 = vsub.f32 1.0, %v305
    %315 = vrot.lane.b32.xlu0 %v312, 64
    %v316 = vpop.permute.xlu0 %315
    %v318 = vmul.f32 %v313, %v316
    %v319 = vmul.f32 %v305, 0.0
    %v320 = vadd.f32 %v318, %v319
    %v321 = vadd.f32 %v320, 0.0
    %v322 = vpack.c.bf16 %v320, %v320
    %324 = vrot.lane.b32.xlu0 %v322, 64
    %v325 = vpop.permute.xlu0 %324
    %v327 = vsel %vm256, %v325, 0
    %329 = vmatpush.bf16.msra.mxu0 0
    %330 = vmatpush.bf16.msra.mxu0 0
    %331 = vmatpush.bf16.msra.mxu0 0
    %332 = vmatpush.bf16.msra.mxu0 0
    %333 = vmatpush.bf16.msra.mxu0 %v246
    %334 = vmatpush.bf16.msra.mxu0 %v244
    %335 = vmatpush.bf16.msra.mxu0 %v242
    %336 = vmatpush.bf16.msra.mxu0 %v240
    %337 = vmatmul.bf16.gmra.mxu0 %v327
    %v338 = vpop.f32.mrf.mxu0
    %v339 = vadd.f32 0.0, %v338
    %v340 = vpop.f32.mrf.mxu0
    %341 = vdwg.mxu0
    %342 = vmatpush.bf16.msra.mxu0 0
    %343 = vmatpush.bf16.msra.mxu0 0
    %344 = vmatpush.bf16.msra.mxu0 0
    %345 = vmatpush.bf16.msra.mxu0 0
    %346 = vmatpush.bf16.msra.mxu0 %v247
    %347 = vmatpush.bf16.msra.mxu0 %v245
    %348 = vmatpush.bf16.msra.mxu0 %v243
    %349 = vmatpush.bf16.msra.mxu0 %v241
    %350 = vmatmul.bf16.gmra.mxu0 %v327
    %v351 = vpop.f32.mrf.mxu0
    %v352 = vadd.f32 0.0, %v351
    %v353 = vpop.f32.mrf.mxu0
    %354 = vdwg.mxu0
    %v355 = vadd.f32 %v161, %v339
    %v356 = vxor.u32 %v355, 2147483648
    %v357 = vmul.f32 %v356, 1.442695
    %v358 = vpow.pop %v357
    %v359 = vadd.f32 %v358, 1.0
    %v360 = vrcp.pop %v359
    %v361 = vmul.f32 %v359, %v360
    %v362 = vsub.f32 1.0, %v361
    %v363 = vmul.f32 %v360, %v362
    %v364 = vadd.f32 %v360, %v363
    %vm365 = vweird.f32 %v359
    %vm366 = vweird.f32 %v360
    %vm367 = vmor %vm365, %vm366
    %v368 = vsel %vm367, %v360, %v364
    %v369 = vand.u32 2147483647, %v359
    %vm370 = vcmp.eq.f32.partialorder %v369, 8.507059e+37
    %v371 = vand.u32 %v359, 2147483648
    %v372 = vor.u32 1.1754944e-38, %v371
    %v373 = vsel %vm370, %v372, %v368
    %v374 = vmul.f32 1.0, %v373
    %v375 = vadd.f32 %v352, %v307
    %v376 = vmul.f32 %v374, %v375
    %v377 = vadd.f32 %v190, %v376
    %v378 = vtanh.pop %v377
    %v379 = vsub.f32 1.0, %v374
    %381 = vrot.lane.b32.xlu0 %v378, 64
    %v382 = vpop.permute.xlu0 %381
    %v384 = vmul.f32 %v379, %v382
    %v385 = vmul.f32 %v374, %v320
    %v386 = vadd.f32 %v384, %v385
    %v387 = vadd.f32 %v321, %v386
    %v388 = vpack.c.bf16 %v386, %v386
    %390 = vrot.lane.b32.xlu0 %v388, 64
    %v391 = vpop.permute.xlu0 %390
    %v393 = vsel %vm256, %v391, 0
    %395 = vmatpush.bf16.msra.mxu0 0
    %396 = vmatpush.bf16.msra.mxu0 0
    %397 = vmatpush.bf16.msra.mxu0 0
    %398 = vmatpush.bf16.msra.mxu0 0
    %399 = vmatpush.bf16.msra.mxu0 %v246
    %400 = vmatpush.bf16.msra.mxu0 %v244
    %401 = vmatpush.bf16.msra.mxu0 %v242
    %402 = vmatpush.bf16.msra.mxu0 %v240
    %403 = vmatmul.bf16.gmra.mxu0 %v393
    %v404 = vpop.f32.mrf.mxu0
    %v405 = vadd.f32 0.0, %v404
    %v406 = vpop.f32.mrf.mxu0
    %407 = vdwg.mxu0
    %408 = vmatpush.bf16.msra.mxu0 0
    %409 = vmatpush.bf16.msra.mxu0 0
    %410 = vmatpush.bf16.msra.mxu0 0
    %411 = vmatpush.bf16.msra.mxu0 0
    %412 = vmatpush.bf16.msra.mxu0 %v247
    %413 = vmatpush.bf16.msra.mxu0 %v245
    %414 = vmatpush.bf16.msra.mxu0 %v243
    %415 = vmatpush.bf16.msra.mxu0 %v241
    %416 = vmatmul.bf16.gmra.mxu0 %v393
    %v417 = vpop.f32.mrf.mxu0
    %v418 = vadd.f32 0.0, %v417
    %v419 = vpop.f32.mrf.mxu0
    %420 = vdwg.mxu0
    %v421 = vadd.f32 %v164, %v405
    %v422 = vxor.u32 %v421, 2147483648
    %v423 = vmul.f32 %v422, 1.442695
    %v424 = vpow.pop %v423
    %v425 = vadd.f32 %v424, 1.0
    %v426 = vrcp.pop %v425
    %v427 = vmul.f32 %v425, %v426
    %v428 = vsub.f32 1.0, %v427
    %v429 = vmul.f32 %v426, %v428
    %v430 = vadd.f32 %v426, %v429
    %vm431 = vweird.f32 %v425
    %vm432 = vweird.f32 %v426
    %vm433 = vmor %vm431, %vm432
    %v434 = vsel %vm433, %v426, %v430
    %v435 = vand.u32 2147483647, %v425
    %vm436 = vcmp.eq.f32.partialorder %v435, 8.507059e+37
    %v437 = vand.u32 %v425, 2147483648
    %v438 = vor.u32 1.1754944e-38, %v437
    %v439 = vsel %vm436, %v438, %v434
    %v440 = vmul.f32 1.0, %v439
    %v441 = vadd.f32 %v418, %v307
    %v442 = vmul.f32 %v440, %v441
    %v443 = vadd.f32 %v193, %v442
    %v444 = vtanh.pop %v443
    %v445 = vsub.f32 1.0, %v440
    %447 = vrot.lane.b32.xlu0 %v444, 64
    %v448 = vpop.permute.xlu0 %447
    %v450 = vmul.f32 %v445, %v448
    %v451 = vmul.f32 %v440, %v386
    %v452 = vadd.f32 %v450, %v451
    %v453 = vadd.f32 %v387, %v452
    %v454 = vpack.c.bf16 %v452, %v452
    %456 = vrot.lane.b32.xlu0 %v454, 64
    %v457 = vpop.permute.xlu0 %456
    %v459 = vsel %vm256, %v457, 0
    %461 = vmatpush.bf16.msra.mxu0 0
    %462 = vmatpush.bf16.msra.mxu0 0
    %463 = vmatpush.bf16.msra.mxu0 0
    %464 = vmatpush.bf16.msra.mxu0 0
    %465 = vmatpush.bf16.msra.mxu0 %v246
    %466 = vmatpush.bf16.msra.mxu0 %v244
    %467 = vmatpush.bf16.msra.mxu0 %v242
    %468 = vmatpush.bf16.msra.mxu0 %v240
    %469 = vmatmul.bf16.gmra.mxu0 %v459
    %v470 = vpop.f32.mrf.mxu0
    %v471 = vadd.f32 0.0, %v470
    %v472 = vpop.f32.mrf.mxu0
    %473 = vdwg.mxu0
    %474 = vmatpush.bf16.msra.mxu0 0
    %475 = vmatpush.bf16.msra.mxu0 0
    %476 = vmatpush.bf16.msra.mxu0 0
    %477 = vmatpush.bf16.msra.mxu0 0
    %478 = vmatpush.bf16.msra.mxu0 %v247
    %479 = vmatpush.bf16.msra.mxu0 %v245
    %480 = vmatpush.bf16.msra.mxu0 %v243
    %481 = vmatpush.bf16.msra.mxu0 %v241
    %482 = vmatmul.bf16.gmra.mxu0 %v459
    %v483 = vpop.f32.mrf.mxu0
    %v484 = vadd.f32 0.0, %v483
    %v485 = vpop.f32.mrf.mxu0
    %486 = vdwg.mxu0
    %v487 = vadd.f32 %v166, %v471
    %v488 = vxor.u32 %v487, 2147483648
    %v489 = vmul.f32 %v488, 1.442695
    %v490 = vpow.pop %v489
    %v491 = vadd.f32 %v490, 1.0
    %v492 = vrcp.pop %v491
    %v493 = vmul.f32 %v491, %v492
    %v494 = vsub.f32 1.0, %v493
    %v495 = vmul.f32 %v492, %v494
    %v496 = vadd.f32 %v492, %v495
    %vm497 = vweird.f32 %v491
    %vm498 = vweird.f32 %v492
    %vm499 = vmor %vm497, %vm498
    %v500 = vsel %vm499, %v492, %v496
    %v501 = vand.u32 2147483647, %v491
    %vm502 = vcmp.eq.f32.partialorder %v501, 8.507059e+37
    %v503 = vand.u32 %v491, 2147483648
    %v504 = vor.u32 1.1754944e-38, %v503
    %v505 = vsel %vm502, %v504, %v500
    %v506 = vmul.f32 1.0, %v505
    %v507 = vadd.f32 %v484, %v307
    %v508 = vmul.f32 %v506, %v507
    %v509 = vadd.f32 %v195, %v508
    %v510 = vtanh.pop %v509
    %v511 = vsub.f32 1.0, %v506
    %513 = vrot.lane.b32.xlu0 %v510, 64
    %v514 = vpop.permute.xlu0 %513
    %v516 = vmul.f32 %v511, %v514
    %v517 = vmul.f32 %v506, %v452
    %v518 = vadd.f32 %v516, %v517
    %v519 = vadd.f32 %v453, %v518
    %v520 = vpack.c.bf16 %v518, %v518
    %522 = vrot.lane.b32.xlu0 %v520, 64
    %v523 = vpop.permute.xlu0 %522
    %v525 = vsel %vm256, %v523, 0
    %527 = vmatpush.bf16.msra.mxu0 0
    %528 = vmatpush.bf16.msra.mxu0 0
    %529 = vmatpush.bf16.msra.mxu0 0
    %530 = vmatpush.bf16.msra.mxu0 0
    %531 = vmatpush.bf16.msra.mxu0 %v246
    %532 = vmatpush.bf16.msra.mxu0 %v244
    %533 = vmatpush.bf16.msra.mxu0 %v242
    %534 = vmatpush.bf16.msra.mxu0 %v240
    %535 = vmatmul.bf16.gmra.mxu0 %v525
    %v536 = vpop.f32.mrf.mxu0
    %v537 = vadd.f32 0.0, %v536
    %v538 = vpop.f32.mrf.mxu0
    %539 = vdwg.mxu0
    %540 = vmatpush.bf16.msra.mxu0 0
    %541 = vmatpush.bf16.msra.mxu0 0
    %542 = vmatpush.bf16.msra.mxu0 0
    %543 = vmatpush.bf16.msra.mxu0 0
    %544 = vmatpush.bf16.msra.mxu0 %v247
    %545 = vmatpush.bf16.msra.mxu0 %v245
    %546 = vmatpush.bf16.msra.mxu0 %v243
    %547 = vmatpush.bf16.msra.mxu0 %v241
    %548 = vmatmul.bf16.gmra.mxu0 %v525
    %v549 = vpop.f32.mrf.mxu0
    %v550 = vadd.f32 0.0, %v549
    %v551 = vpop.f32.mrf.mxu0
    %552 = vdwg.mxu0
    %v553 = vadd.f32 %v169, %v537
    %v554 = vxor.u32 %v553, 2147483648
    %v555 = vmul.f32 %v554, 1.442695
    %v556 = vpow.pop %v555
    %v557 = vadd.f32 %v556, 1.0
    %v558 = vrcp.pop %v557
    %v559 = vmul.f32 %v557, %v558
    %v560 = vsub.f32 1.0, %v559
    %v561 = vmul.f32 %v558, %v560
    %v562 = vadd.f32 %v558, %v561
    %vm563 = vweird.f32 %v557
    %vm564 = vweird.f32 %v558
    %vm565 = vmor %vm563, %vm564
    %v566 = vsel %vm565, %v558, %v562
    %v567 = vand.u32 2147483647, %v557
    %vm568 = vcmp.eq.f32.partialorder %v567, 8.507059e+37
    %v569 = vand.u32 %v557, 2147483648
    %v570 = vor.u32 1.1754944e-38, %v569
    %v571 = vsel %vm568, %v570, %v566
    %v572 = vmul.f32 1.0, %v571
    %v573 = vadd.f32 %v550, %v307
    %v574 = vmul.f32 %v572, %v573
    %v575 = vadd.f32 %v198, %v574
    %v576 = vtanh.pop %v575
    %v577 = vsub.f32 1.0, %v572
    %579 = vrot.lane.b32.xlu0 %v576, 64
    %v580 = vpop.permute.xlu0 %579
    %v582 = vmul.f32 %v577, %v580
    %v583 = vmul.f32 %v572, %v518
    %v584 = vadd.f32 %v582, %v583
    %v585 = vadd.f32 %v519, %v584
    %v586 = vpack.c.bf16 %v584, %v584
    %588 = vrot.lane.b32.xlu0 %v586, 64
    %v589 = vpop.permute.xlu0 %588
    %v591 = vsel %vm256, %v589, 0
    %593 = vmatpush.bf16.msra.mxu0 0
    %594 = vmatpush.bf16.msra.mxu0 0
    %595 = vmatpush.bf16.msra.mxu0 0
    %596 = vmatpush.bf16.msra.mxu0 0
    %597 = vmatpush.bf16.msra.mxu0 %v246
    %598 = vmatpush.bf16.msra.mxu0 %v244
    %599 = vmatpush.bf16.msra.mxu0 %v242
    %600 = vmatpush.bf16.msra.mxu0 %v240
    %601 = vmatmul.bf16.gmra.mxu0 %v591
    %v602 = vpop.f32.mrf.mxu0
    %v603 = vadd.f32 0.0, %v602
    %v604 = vpop.f32.mrf.mxu0
    %605 = vdwg.mxu0
    %606 = vmatpush.bf16.msra.mxu0 0
    %607 = vmatpush.bf16.msra.mxu0 0
    %608 = vmatpush.bf16.msra.mxu0 0
    %609 = vmatpush.bf16.msra.mxu0 0
    %610 = vmatpush.bf16.msra.mxu0 %v247
    %611 = vmatpush.bf16.msra.mxu0 %v245
    %612 = vmatpush.bf16.msra.mxu0 %v243
    %613 = vmatpush.bf16.msra.mxu0 %v241
    %614 = vmatmul.bf16.gmra.mxu0 %v591
    %v615 = vpop.f32.mrf.mxu0
    %v616 = vadd.f32 0.0, %v615
    %v617 = vpop.f32.mrf.mxu0
    %618 = vdwg.mxu0
    %v619 = vadd.f32 %v171, %v603
    %v620 = vxor.u32 %v619, 2147483648
    %v621 = vmul.f32 %v620, 1.442695
    %v622 = vpow.pop %v621
    %v623 = vadd.f32 %v622, 1.0
    %v624 = vrcp.pop %v623
    %v625 = vmul.f32 %v623, %v624
    %v626 = vsub.f32 1.0, %v625
    %v627 = vmul.f32 %v624, %v626
    %v628 = vadd.f32 %v624, %v627
    %vm629 = vweird.f32 %v623
    %vm630 = vweird.f32 %v624
    %vm631 = vmor %vm629, %vm630
    %v632 = vsel %vm631, %v624, %v628
    %v633 = vand.u32 2147483647, %v623
    %vm634 = vcmp.eq.f32.partialorder %v633, 8.507059e+37
    %v635 = vand.u32 %v623, 2147483648
    %v636 = vor.u32 1.1754944e-38, %v635
    %v637 = vsel %vm634, %v636, %v632
    %v638 = vmul.f32 1.0, %v637
    %v639 = vadd.f32 %v616, %v307
    %v640 = vmul.f32 %v638, %v639
    %v641 = vadd.f32 %v200, %v640
    %v642 = vtanh.pop %v641
    %v643 = vsub.f32 1.0, %v638
    %645 = vrot.lane.b32.xlu0 %v642, 64
    %v646 = vpop.permute.xlu0 %645
    %v648 = vmul.f32 %v643, %v646
    %v649 = vmul.f32 %v638, %v584
    %v650 = vadd.f32 %v648, %v649
    %v651 = vadd.f32 %v585, %v650
    %v652 = vpack.c.bf16 %v650, %v650
    %654 = vrot.lane.b32.xlu0 %v652, 64
    %v655 = vpop.permute.xlu0 %654
    %v657 = vsel %vm256, %v655, 0
    %659 = vmatpush.bf16.msra.mxu0 0
    %660 = vmatpush.bf16.msra.mxu0 0
    %661 = vmatpush.bf16.msra.mxu0 0
    %662 = vmatpush.bf16.msra.mxu0 0
    %663 = vmatpush.bf16.msra.mxu0 %v246
    %664 = vmatpush.bf16.msra.mxu0 %v244
    %665 = vmatpush.bf16.msra.mxu0 %v242
    %666 = vmatpush.bf16.msra.mxu0 %v240
    %667 = vmatmul.bf16.gmra.mxu0 %v657
    %v668 = vpop.f32.mrf.mxu0
    %v669 = vadd.f32 0.0, %v668
    %v670 = vpop.f32.mrf.mxu0
    %671 = vdwg.mxu0
    %672 = vmatpush.bf16.msra.mxu0 0
    %673 = vmatpush.bf16.msra.mxu0 0
    %674 = vmatpush.bf16.msra.mxu0 0
    %675 = vmatpush.bf16.msra.mxu0 0
    %676 = vmatpush.bf16.msra.mxu0 %v247
    %677 = vmatpush.bf16.msra.mxu0 %v245
    %678 = vmatpush.bf16.msra.mxu0 %v243
    %679 = vmatpush.bf16.msra.mxu0 %v241
    %680 = vmatmul.bf16.gmra.mxu0 %v657
    %v681 = vpop.f32.mrf.mxu0
    %v682 = vadd.f32 0.0, %v681
    %v683 = vpop.f32.mrf.mxu0
    %684 = vdwg.mxu0
    %v685 = vadd.f32 %v174, %v669
    %v686 = vxor.u32 %v685, 2147483648
    %v687 = vmul.f32 %v686, 1.442695
    %v688 = vpow.pop %v687
    %v689 = vadd.f32 %v688, 1.0
    %v690 = vrcp.pop %v689
    %v691 = vmul.f32 %v689, %v690
    %v692 = vsub.f32 1.0, %v691
    %v693 = vmul.f32 %v690, %v692
    %v694 = vadd.f32 %v690, %v693
    %vm695 = vweird.f32 %v689
    %vm696 = vweird.f32 %v690
    %vm697 = vmor %vm695, %vm696
    %v698 = vsel %vm697, %v690, %v694
    %v699 = vand.u32 2147483647, %v689
    %vm700 = vcmp.eq.f32.partialorder %v699, 8.507059e+37
    %v701 = vand.u32 %v689, 2147483648
    %v702 = vor.u32 1.1754944e-38, %v701
    %v703 = vsel %vm700, %v702, %v698
    %v704 = vmul.f32 1.0, %v703
    %v705 = vadd.f32 %v682, %v307
    %v706 = vmul.f32 %v704, %v705
    %v707 = vadd.f32 %v203, %v706
    %v708 = vtanh.pop %v707
    %v709 = vsub.f32 1.0, %v704
    %711 = vrot.lane.b32.xlu0 %v708, 64
    %v712 = vpop.permute.xlu0 %711
    %v714 = vmul.f32 %v709, %v712
    %v715 = vmul.f32 %v704, %v650
    %v716 = vadd.f32 %v714, %v715
    %v717 = vadd.f32 %v651, %v716
    %v718 = vpack.c.bf16 %v716, %v716
    %720 = vrot.lane.b32.xlu0 %v718, 64
    %v721 = vpop.permute.xlu0 %720
    %v723 = vsel %vm256, %v721, 0
    %725 = vmatpush.bf16.msra.mxu0 0
    %726 = vmatpush.bf16.msra.mxu0 0
    %727 = vmatpush.bf16.msra.mxu0 0
    %728 = vmatpush.bf16.msra.mxu0 0
    %729 = vmatpush.bf16.msra.mxu0 %v246
    %730 = vmatpush.bf16.msra.mxu0 %v244
    %731 = vmatpush.bf16.msra.mxu0 %v242
    %732 = vmatpush.bf16.msra.mxu0 %v240
    %733 = vmatmul.bf16.gmra.mxu0 %v723
    %v734 = vpop.f32.mrf.mxu0
    %v735 = vadd.f32 0.0, %v734
    %v736 = vpop.f32.mrf.mxu0
    %737 = vdwg.mxu0
    %738 = vmatpush.bf16.msra.mxu0 0
    %739 = vmatpush.bf16.msra.mxu0 0
    %740 = vmatpush.bf16.msra.mxu0 0
    %741 = vmatpush.bf16.msra.mxu0 0
    %742 = vmatpush.bf16.msra.mxu0 %v247
    %743 = vmatpush.bf16.msra.mxu0 %v245
    %744 = vmatpush.bf16.msra.mxu0 %v243
    %745 = vmatpush.bf16.msra.mxu0 %v241
    %746 = vmatmul.bf16.gmra.mxu0 %v723
    %v747 = vpop.f32.mrf.mxu0
    %v748 = vadd.f32 0.0, %v747
    %v749 = vpop.f32.mrf.mxu0
    %750 = vdwg.mxu0
    %v751 = vadd.f32 %v176, %v735
    %v752 = vxor.u32 %v751, 2147483648
    %v753 = vmul.f32 %v752, 1.442695
    %v754 = vpow.pop %v753
    %v755 = vadd.f32 %v754, 1.0
    %v756 = vrcp.pop %v755
    %v757 = vmul.f32 %v755, %v756
    %v758 = vsub.f32 1.0, %v757
    %v759 = vmul.f32 %v756, %v758
    %v760 = vadd.f32 %v756, %v759
    %vm761 = vweird.f32 %v755
    %vm762 = vweird.f32 %v756
    %vm763 = vmor %vm761, %vm762
    %v764 = vsel %vm763, %v756, %v760
    %v765 = vand.u32 2147483647, %v755
    %vm766 = vcmp.eq.f32.partialorder %v765, 8.507059e+37
    %v767 = vand.u32 %v755, 2147483648
    %v768 = vor.u32 1.1754944e-38, %v767
    %v769 = vsel %vm766, %v768, %v764
    %v770 = vmul.f32 1.0, %v769
    %v771 = vadd.f32 %v748, %v307
    %v772 = vmul.f32 %v770, %v771
    %v773 = vadd.f32 %v205, %v772
    %v774 = vtanh.pop %v773
    %v775 = vsub.f32 1.0, %v770
    %777 = vrot.lane.b32.xlu0 %v774, 64
    %v778 = vpop.permute.xlu0 %777
    %v780 = vmul.f32 %v775, %v778
    %v781 = vmul.f32 %v770, %v716
    %v782 = vadd.f32 %v780, %v781
    %v783 = vadd.f32 %v717, %v782
    %v784 = vld [vmem:[%s9] sm:$0xf]
    %v785 = vld [vmem:[%s9 + $0x4] sm:$0xf]
    %v786 = vld [vmem:[%s9 + $0x8] sm:$0xf]
    %v787 = vld [vmem:[%s9 + $0xc] sm:$0xf]
    %v788 = vld [vmem:[%s9 + $0x10] sm:$0xf]
    %v789 = vld [vmem:[%s9 + $0x14] sm:$0xf]
    %v790 = vld [vmem:[%s9 + $0x18] sm:$0xf]
    %v791 = vld [vmem:[%s9 + $0x1c] sm:$0xf]
    %v792 = vpack.c.bf16 %v783, %v783
    %v793 = vld [vmem:[%s10] sm:$0x1]
    %v795 = vperm.slane %v793, 0
    %798 = vrot.lane.b32.xlu0 %v792, 64
    %v799 = vpop.permute.xlu0 %798
    %v808 = vunpack.c.l.b16 %v784
    %v809 = vunpack.c.l.b16 %v785
    %v810 = vunpack.c.l.b16 %v786
    %v811 = vunpack.c.l.b16 %v787
    %v812 = vunpack.c.l.b16 %v788
    %v813 = vunpack.c.l.b16 %v789
    %v814 = vunpack.c.l.b16 %v790
    %v815 = vunpack.c.l.b16 %v791
    %v816 = vpack.c.b16 %v809, %v808
    %v817 = vpack.c.b16 %v811, %v810
    %v818 = vpack.c.b16 %v813, %v812
    %v819 = vpack.c.b16 %v815, %v814
    %v825 = vsel %vm256, %v799, 0
    %827 = vmatpush.bf16.msra.mxu0 0
    %828 = vmatpush.bf16.msra.mxu0 0
    %829 = vmatpush.bf16.msra.mxu0 0
    %830 = vmatpush.bf16.msra.mxu0 0
    %831 = vmatpush.bf16.msra.mxu0 %v819
    %832 = vmatpush.bf16.msra.mxu0 %v818
    %833 = vmatpush.bf16.msra.mxu0 %v817
    %834 = vmatpush.bf16.msra.mxu0 %v816
    %835 = vmatmul.bf16.gmra.mxu0 %v825
    %v836 = vpop.f32.mrf.mxu0
    %v837 = vadd.f32 %v795, %v836
    %v838 = vpop.f32.mrf.mxu0
    %839 = vdwg.mxu0
    %v840 = vmax.f32 %v837, 0.0
    %v841 = vld [vmem:[%s11] sm:$0xf]
    %v842 = vld [vmem:[%s11 + $0x4] sm:$0xf]
    %v843 = vld [vmem:[%s11 + $0x8] sm:$0xf]
    %v844 = vld [vmem:[%s11 + $0xc] sm:$0xf]
    %v845 = vpack.c.bf16 %v840, %v840
    %v846 = vld [vmem:[%s12] sm:$0x1]
    %v848 = vperm.slane %v846, 0
    %v854 = vunpack.c.l.b16 %v841
    %v855 = vunpack.c.l.b16 %v842
    %v856 = vunpack.c.l.b16 %v843
    %v857 = vunpack.c.l.b16 %v844
    %v858 = vpack.c.b16 %v855, %v854
    %v859 = vpack.c.b16 %v857, %v856
    %vm862 = vcmask 261120
    %v864 = vsel %vm862, %v845, 0
    %866 = vmatpush.bf16.msra.mxu0 0
    %867 = vmatpush.bf16.msra.mxu0 0
    %868 = vmatpush.bf16.msra.mxu0 0
    %869 = vmatpush.bf16.msra.mxu0 0
    %870 = vmatpush.bf16.msra.mxu0 0
    %871 = vmatpush.bf16.msra.mxu0 0
    %872 = vmatpush.bf16.msra.mxu0 %v859
    %873 = vmatpush.bf16.msra.mxu0 %v858
    %874 = vmatmul.bf16.gmra.mxu0 %v864
    %v875 = vpop.f32.mrf.mxu0
    %v876 = vadd.f32 %v848, %v875
    %v877 = vpop.f32.mrf.mxu0
    %878 = vdwg.mxu0
    %v879 = vmax.f32 %v876, 0.0
    %v880 = vld [vmem:[%s13] sm:$0xf]
    %v881 = vld [vmem:[%s13 + $0x4] sm:$0xf]
    %v882 = vld [vmem:[%s13 + $0x8] sm:$0xf]
    %v883 = vld [vmem:[%s13 + $0xc] sm:$0xf]
    %v884 = vpack.c.bf16 %v879, %v879
    %v885 = vld [vmem:[%s14] sm:$0x1]
    %v887 = vperm.slane %v885, 0
    %v893 = vunpack.c.l.b16 %v880
    %v894 = vunpack.c.l.b16 %v881
    %v895 = vunpack.c.l.b16 %v882
    %v896 = vunpack.c.l.b16 %v883
    %v897 = vpack.c.b16 %v894, %v893
    %v898 = vpack.c.b16 %v896, %v895
    %v902 = vsel %vm862, %v884, 0
    %904 = vmatpush.bf16.msra.mxu0 0
    %905 = vmatpush.bf16.msra.mxu0 0
    %906 = vmatpush.bf16.msra.mxu0 0
    %907 = vmatpush.bf16.msra.mxu0 0
    %908 = vmatpush.bf16.msra.mxu0 0
    %909 = vmatpush.bf16.msra.mxu0 0
    %910 = vmatpush.bf16.msra.mxu0 %v898
    %911 = vmatpush.bf16.msra.mxu0 %v897
    %912 = vmatmul.bf16.gmra.mxu0 %v902
    %v913 = vpop.f32.mrf.mxu0
    %v914 = vadd.f32 %v887, %v913
    %v915 = vpop.f32.mrf.mxu0
    %916 = vdwg.mxu0
    %v917 = vmul.f32 %v914, 1.442695
    %v918 = vpow.pop %v917
    %v919 = vmul.f32 %v914, %v914
    %921 = vrot.lane.b32.xlu0 %v919, 8
    %v922 = vpop.permute.xlu0 %921
    %v924 = vadd.f32 %v918, %v922
    %v925 = vsub.f32 %v924, 1.0
    %v926 = vsub.f32 %v925, %v914
    %v927 = vmul.f32 %v926, 0.5
    %v928 = vmax.f32 %v927, 0.125
    %930 = vrot.lane.b32.xlu0 %v928, 120
    %v931 = vpop.permute.xlu0 %930
    %vm933 = vcmask 64512
    %v934 = vsel %vm933, %v931, 0.0
    %935 = vadd.xlane.f32.xlu0 %v934
    %v936 = vpop.xlane.xlu0 %935
    %v937 = vrot.slane %v936, 4
    %v938 = vadd.f32 %v936, %v937
    %v939 = vrot.slane %v938, 2
    %v940 = vadd.f32 %v938, %v939
    %v941 = vrot.slane %v940, 1
    %v942 = vadd.f32 %v940, %v941
    %s943 = vtos %v942
    %v944 = vld [vmem:[%s3] sm:$0xff]
    %v945 = vmul.f32 %v914, 0.5
    %v946 = vmul.f32 %v945, 1.442695
    %v947 = vpow.pop %v946
    %949 = vrot.lane.b32.xlu0 %v947, 120
    %v950 = vpop.permute.xlu0 %949
    %v952 = vmul.f32 %v944, %v950
    %v953 = vadd.f32 %v914, %v952
    %v954 = vld [vmem:[%s15] sm:$0x7]
    %v955 = vld [vmem:[%s16] sm:$0xf]
    %v956 = vld [vmem:[%s16 + $0x4] sm:$0xf]
    %v957 = vld [vmem:[%s16 + $0x8] sm:$0xf]
    %v958 = vld [vmem:[%s16 + $0xc] sm:$0xf]
    %v959 = vld [vmem:[%s17] sm:$0x7]
    %v960 = vld [vmem:[%s18] sm:$0x1]
    %v961 = vld [vmem:[%s19] sm:$0x1]
    %v962 = vld [vmem:[%s22] sm:$0xf]
    %v963 = vld [vmem:[%s22 + $0x4] sm:$0xf]
    %v964 = vld [vmem:[%s22 + $0x8] sm:$0xf]
    %v965 = vld [vmem:[%s22 + $0xc] sm:$0xf]
    %v966 = vld [vmem:[%s23] sm:$0x1]
    %v967 = vld [vmem:[%s24] sm:$0xf]
    %v968 = vld [vmem:[%s24 + $0x4] sm:$0xf]
    %v969 = vld [vmem:[%s24 + $0x8] sm:$0xf]
    %v970 = vld [vmem:[%s24 + $0xc] sm:$0xf]
    %v971 = vld [vmem:[%s25] sm:$0x1]
    %v972 = vld [vmem:[%s20] sm:$0xf]
    %v973 = vpack.c.bf16 %v953, %v953
    %v974 = vld [vmem:[%s21] sm:$0x1]
    %v976 = vperm.slane %v974, 0
    %v979 = vsel %vm933, %v973, 0
    %vm981 = vcmask 1043456
    %v983 = vsel %vm981, %v972, 0
    %985 = vmatpush.bf16.msra.mxu0 0
    %986 = vmatpush.bf16.msra.mxu0 0
    %987 = vmatpush.bf16.msra.mxu0 0
    %988 = vmatpush.bf16.msra.mxu0 0
    %989 = vmatpush.bf16.msra.mxu0 0
    %990 = vmatpush.bf16.msra.mxu0 0
    %991 = vmatpush.bf16.msra.mxu0 0
    %992 = vmatpush.bf16.msra.mxu0 %v983
    %993 = vmatmul.bf16.gmra.mxu0 %v979
    %v994 = vpop.f32.mrf.mxu0
    %v995 = vadd.f32 %v976, %v994
    %v996 = vpop.f32.mrf.mxu0
    %997 = vdwg.mxu0
    %v998 = vld [vmem:[%s1] sm:$0xff]
    %v999 = vpack.c.bf16 %v998, %v998
    %vm1000 = vcmask 48128
    %v1002 = vsel %vm1000, %v999, 0
    %vm1004 = vcmask 1042432
    %v1006 = vsel %vm1004, %v954, 0
    %1008 = vmatpush.bf16.msra.mxu0 0
    %1009 = vmatpush.bf16.msra.mxu0 0
    %1010 = vmatpush.bf16.msra.mxu0 0
    %1011 = vmatpush.bf16.msra.mxu0 0
    %1012 = vmatpush.bf16.msra.mxu0 0
    %1013 = vmatpush.bf16.msra.mxu0 0
    %1014 = vmatpush.bf16.msra.mxu0 0
    %1015 = vmatpush.bf16.msra.mxu0 %v1006
    %1016 = vmatmul.bf16.gmra.mxu0 %v1002
    %v1017 = vpop.f32.mrf.mxu0
    %v1018 = vadd.f32 0.0, %v1017
    %v1019 = vpop.f32.mrf.mxu0
    %1020 = vdwg.mxu0
    %v1025 = vunpack.c.l.b16 %v955
    %v1026 = vunpack.c.l.b16 %v956
    %v1027 = vunpack.c.l.b16 %v957
    %v1028 = vunpack.c.l.b16 %v958
    %v1029 = vpack.c.b16 %v1026, %v1025
    %v1030 = vpack.c.b16 %v1028, %v1027
    %v1033 = vsel %vm862, 0, 0
    %1035 = vmatpush.bf16.msra.mxu0 0
    %1036 = vmatpush.bf16.msra.mxu0 0
    %1037 = vmatpush.bf16.msra.mxu0 0
    %1038 = vmatpush.bf16.msra.mxu0 0
    %1039 = vmatpush.bf16.msra.mxu0 0
    %1040 = vmatpush.bf16.msra.mxu0 0
    %1041 = vmatpush.bf16.msra.mxu0 %v1030
    %1042 = vmatpush.bf16.msra.mxu0 %v1029
    %1043 = vmatmul.bf16.gmra.mxu0 %v1033
    %v1044 = vpop.f32.mrf.mxu0
    %v1045 = vadd.f32 0.0, %v1044
    %v1046 = vpop.f32.mrf.mxu0
    %1047 = vdwg.mxu0
    %v1048 = vadd.f32 %v1018, %v1045
    %1050 = vrot.lane.b32.xlu0 %v995, 96
    %v1051 = vpop.permute.xlu0 %1050
    %v1053 = vadd.f32 %v1048, %v1051
    %v1054 = vmax.f32 %v1053, 0.0
    %v1055 = vpack.c.bf16 %v1054, %v1054
    %v1057 = vperm.slane %v966, 0
    %1060 = vrot.lane.b32.xlu0 %v1055, 32
    %v1061 = vpop.permute.xlu0 %1060
    %v1066 = vunpack.c.l.b16 %v962
    %v1067 = vunpack.c.l.b16 %v963
    %v1068 = vunpack.c.l.b16 %v964
    %v1069 = vunpack.c.l.b16 %v965
    %v1070 = vpack.c.b16 %v1067, %v1066
    %v1071 = vpack.c.b16 %v1069, %v1068
    %v1075 = vsel %vm862, %v1061, 0
    %1077 = vmatpush.bf16.msra.mxu0 0
    %1078 = vmatpush.bf16.msra.mxu0 0
    %1079 = vmatpush.bf16.msra.mxu0 0
    %1080 = vmatpush.bf16.msra.mxu0 0
    %1081 = vmatpush.bf16.msra.mxu0 0
    %1082 = vmatpush.bf16.msra.mxu0 0
    %1083 = vmatpush.bf16.msra.mxu0 %v1071
    %1084 = vmatpush.bf16.msra.mxu0 %v1070
    %1085 = vmatmul.bf16.gmra.mxu0 %v1075
    %v1086 = vpop.f32.mrf.mxu0
    %v1087 = vadd.f32 %v1057, %v1086
    %v1088 = vpop.f32.mrf.mxu0
    %1089 = vdwg.mxu0
    %v1090 = vmax.f32 %v1087, 0.0
    %v1091 = vpack.c.bf16 %v1090, %v1090
    %v1093 = vperm.slane %v971, 0
    %v1099 = vunpack.c.l.b16 %v967
    %v1100 = vunpack.c.l.b16 %v968
    %v1101 = vunpack.c.l.b16 %v969
    %v1102 = vunpack.c.l.b16 %v970
    %v1103 = vpack.c.b16 %v1100, %v1099
    %v1104 = vpack.c.b16 %v1102, %v1101
    %v1108 = vsel %vm862, %v1091, 0
    %1110 = vmatpush.bf16.msra.mxu0 0
    %1111 = vmatpush.bf16.msra.mxu0 0
    %1112 = vmatpush.bf16.msra.mxu0 0
    %1113 = vmatpush.bf16.msra.mxu0 0
    %1114 = vmatpush.bf16.msra.mxu0 0
    %1115 = vmatpush.bf16.msra.mxu0 0
    %1116 = vmatpush.bf16.msra.mxu0 %v1104
    %1117 = vmatpush.bf16.msra.mxu0 %v1103
    %1118 = vmatmul.bf16.gmra.mxu0 %v1108
    %v1119 = vpop.f32.mrf.mxu0
    %v1120 = vadd.f32 %v1093, %v1119
    %v1121 = vpop.f32.mrf.mxu0
    %1122 = vdwg.mxu0
    %v1123 = vld [vmem:[%s2] sm:$0xff]
    %v1124 = vsub.f32 %v1123, %v1120
    %v1125 = vmul.f32 %v1124, %v1124
    %v1126 = vsub.f32 0.0, %v1120
    %v1127 = vmul.f32 %v1126, 1.442695
    %v1128 = vpow.pop %v1127
    %1130 = vrot.lane.b32.xlu0 %v1128, 122
    %v1131 = vpop.permute.xlu0 %1130
    %v1133 = vmul.f32 %v1125, %v1131
    %v1134 = vadd.f32 %v1133, 0.0
    %1136 = vrot.lane.b32.xlu0 %v1120, 122
    %v1137 = vpop.permute.xlu0 %1136
    %v1139 = vadd.f32 %v1134, %v1137
    %v1140 = vld [vmem:[%s4] sm:$0xff]
    %v1141 = vmul.f32 %v1120, 0.5
    %v1142 = vmul.f32 %v1141, 1.442695
    %v1143 = vpow.pop %v1142
    %1145 = vrot.lane.b32.xlu0 %v1143, 122
    %v1146 = vpop.permute.xlu0 %1145
    %v1148 = vmul.f32 %v1140, %v1146
    %v1149 = vadd.f32 %v1120, %v1148
    %v1150 = vpack.c.bf16 %v1149, %v1149
    %v1152 = vsel %vm1000, %v1150, 0
    %v1155 = vsel %vm1004, %v959, 0
    %1157 = vmatpush.bf16.msra.mxu0 0
    %1158 = vmatpush.bf16.msra.mxu0 0
    %1159 = vmatpush.bf16.msra.mxu0 0
    %1160 = vmatpush.bf16.msra.mxu0 0
    %1161 = vmatpush.bf16.msra.mxu0 0
    %1162 = vmatpush.bf16.msra.mxu0 0
    %1163 = vmatpush.bf16.msra.mxu0 0
    %1164 = vmatpush.bf16.msra.mxu0 %v1155
    %1165 = vmatmul.bf16.gmra.mxu0 %v1152
    %v1166 = vpop.f32.mrf.mxu0
    %v1167 = vadd.f32 0.0, %v1166
    %v1168 = vpop.f32.mrf.mxu0
    %1169 = vdwg.mxu0
    %v1170 = vadd.f32 %v1018, %v1167
    %v1172 = vperm.slane %v960, 0
    %v1174 = vadd.f32 %v1170, %v1172
    %v1175 = vadd.f32 %v1174, %v1045
    %v1176 = vxor.u32 %v1175, 2147483648
    %v1177 = vmul.f32 %v1176, 1.442695
    %v1178 = vpow.pop %v1177
    %v1179 = vadd.f32 %v1178, 1.0
    %v1180 = vrcp.pop %v1179
    %v1181 = vmul.f32 %v1179, %v1180
    %v1182 = vsub.f32 1.0, %v1181
    %v1183 = vmul.f32 %v1180, %v1182
    %v1184 = vadd.f32 %v1180, %v1183
    %vm1185 = vweird.f32 %v1179
    %vm1186 = vweird.f32 %v1180
    %vm1187 = vmor %vm1185, %vm1186
    %v1188 = vsel %vm1187, %v1180, %v1184
    %v1189 = vand.u32 2147483647, %v1179
    %vm1190 = vcmp.eq.f32.partialorder %v1189, 8.507059e+37
    %v1191 = vand.u32 %v1179, 2147483648
    %v1192 = vor.u32 1.1754944e-38, %v1191
    %v1193 = vsel %vm1190, %v1192, %v1188
    %v1194 = vmul.f32 1.0, %v1193
    %v1196 = vperm.slane %v961, 0
    %1197 = vrot.lane.b32.xlu0 %v1196, 64
    %v1198 = vpop.permute.xlu0 %1197
    %v1200 = vadd.f32 %v1045, %v1198
    %1202 = vrot.lane.b32.xlu0 %v1200, 64
    %v1203 = vpop.permute.xlu0 %1202
    %v1205 = vmul.f32 %v1194, %v1203
    %1207 = vrot.lane.b32.xlu0 %v1205, 64
    %v1208 = vpop.permute.xlu0 %1207
    %v1210 = vadd.f32 %v1174, %v1208
    %v1211 = vtanh.pop %v1210
    %v1212 = vsub.f32 1.0, %v1194
    %1214 = vrot.lane.b32.xlu0 %v1211, 96
    %v1215 = vpop.permute.xlu0 %1214
    %v1217 = vmul.f32 %v1212, %v1215
    %v1218 = vmul.f32 %v1194, 0.0
    %v1219 = vadd.f32 %v1217, %v1218
    %v1220 = vadd.f32 %v998, %v1149
    %v1221 = vpack.c.bf16 %v1220, %v1220
    %v1223 = vsel %vm1000, %v1221, 0
    %1225 = vmatpush.bf16.msra.mxu0 0
    %1226 = vmatpush.bf16.msra.mxu0 0
    %1227 = vmatpush.bf16.msra.mxu0 0
    %1228 = vmatpush.bf16.msra.mxu0 0
    %1229 = vmatpush.bf16.msra.mxu0 0
    %1230 = vmatpush.bf16.msra.mxu0 0
    %1231 = vmatpush.bf16.msra.mxu0 0
    %1232 = vmatpush.bf16.msra.mxu0 %v1006
    %1233 = vmatmul.bf16.gmra.mxu0 %v1223
    %v1234 = vpop.f32.mrf.mxu0
    %v1235 = vadd.f32 0.0, %v1234
    %v1236 = vpop.f32.mrf.mxu0
    %1237 = vdwg.mxu0
    %v1238 = vpack.c.bf16 %v1219, %v1219
    %1240 = vrot.lane.b32.xlu0 %v1238, 96
    %v1241 = vpop.permute.xlu0 %1240
    %v1243 = vsel %vm862, %v1241, 0
    %1245 = vmatpush.bf16.msra.mxu0 0
    %1246 = vmatpush.bf16.msra.mxu0 0
    %1247 = vmatpush.bf16.msra.mxu0 0
    %1248 = vmatpush.bf16.msra.mxu0 0
    %1249 = vmatpush.bf16.msra.mxu0 0
    %1250 = vmatpush.bf16.msra.mxu0 0
    %1251 = vmatpush.bf16.msra.mxu0 %v1030
    %1252 = vmatpush.bf16.msra.mxu0 %v1029
    %1253 = vmatmul.bf16.gmra.mxu0 %v1243
    %v1254 = vpop.f32.mrf.mxu0
    %v1255 = vadd.f32 0.0, %v1254
    %v1256 = vpop.f32.mrf.mxu0
    %1257 = vdwg.mxu0
    %v1258 = vadd.f32 %v1235, %v1255
    %v1259 = vadd.f32 %v1258, %v1051
    %v1260 = vmax.f32 %v1259, 0.0
    %v1261 = vpack.c.bf16 %v1260, %v1260
    %1263 = vrot.lane.b32.xlu0 %v1261, 32
    %v1264 = vpop.permute.xlu0 %1263
    %v1266 = vsel %vm862, %v1264, 0
    %1268 = vmatpush.bf16.msra.mxu0 0
    %1269 = vmatpush.bf16.msra.mxu0 0
    %1270 = vmatpush.bf16.msra.mxu0 0
    %1271 = vmatpush.bf16.msra.mxu0 0
    %1272 = vmatpush.bf16.msra.mxu0 0
    %1273 = vmatpush.bf16.msra.mxu0 0
    %1274 = vmatpush.bf16.msra.mxu0 %v1071
    %1275 = vmatpush.bf16.msra.mxu0 %v1070
    %1276 = vmatmul.bf16.gmra.mxu0 %v1266
    %v1277 = vpop.f32.mrf.mxu0
    %v1278 = vadd.f32 %v1057, %v1277
    %v1279 = vpop.f32.mrf.mxu0
    %1280 = vdwg.mxu0
    %v1281 = vmax.f32 %v1278, 0.0
    %v1282 = vpack.c.bf16 %v1281, %v1281
    %v1284 = vsel %vm862, %v1282, 0
    %1286 = vmatpush.bf16.msra.mxu0 0
    %1287 = vmatpush.bf16.msra.mxu0 0
    %1288 = vmatpush.bf16.msra.mxu0 0
    %1289 = vmatpush.bf16.msra.mxu0 0
    %1290 = vmatpush.bf16.msra.mxu0 0
    %1291 = vmatpush.bf16.msra.mxu0 0
    %1292 = vmatpush.bf16.msra.mxu0 %v1104
    %1293 = vmatpush.bf16.msra.mxu0 %v1103
    %1294 = vmatmul.bf16.gmra.mxu0 %v1284
    %v1295 = vpop.f32.mrf.mxu0
    %v1296 = vadd.f32 %v1093, %v1295
    %v1297 = vpop.f32.mrf.mxu0
    %1298 = vdwg.mxu0
    %s1299 = scalar_lea.vmem %s2, 8
    %v1300 = vld [vmem:[%s1299] sm:$0xff]
    %v1301 = vsub.f32 %v1300, %v1296
    %v1302 = vmul.f32 %v1301, %v1301
    %v1303 = vsub.f32 0.0, %v1296
    %v1304 = vmul.f32 %v1303, 1.442695
    %v1305 = vpow.pop %v1304
    %1307 = vrot.lane.b32.xlu0 %v1305, 122
    %v1308 = vpop.permute.xlu0 %1307
    %v1310 = vmul.f32 %v1302, %v1308
    %v1311 = vadd.f32 %v1139, %v1310
    %1313 = vrot.lane.b32.xlu0 %v1296, 122
    %v1314 = vpop.permute.xlu0 %1313
    %v1316 = vadd.f32 %v1311, %v1314
    %s1317 = scalar_lea.vmem %s4, 8
    %v1318 = vld [vmem:[%s1317] sm:$0xff]
    %v1319 = vmul.f32 %v1296, 0.5
    %v1320 = vmul.f32 %v1319, 1.442695
    %v1321 = vpow.pop %v1320
    %1323 = vrot.lane.b32.xlu0 %v1321, 122
    %v1324 = vpop.permute.xlu0 %1323
    %v1326 = vmul.f32 %v1318, %v1324
    %v1327 = vadd.f32 %v1296, %v1326
    %v1328 = vpack.c.bf16 %v1327, %v1327
    %v1330 = vsel %vm1000, %v1328, 0
    %1332 = vmatpush.bf16.msra.mxu0 0
    %1333 = vmatpush.bf16.msra.mxu0 0
    %1334 = vmatpush.bf16.msra.mxu0 0
    %1335 = vmatpush.bf16.msra.mxu0 0
    %1336 = vmatpush.bf16.msra.mxu0 0
    %1337 = vmatpush.bf16.msra.mxu0 0
    %1338 = vmatpush.bf16.msra.mxu0 0
    %1339 = vmatpush.bf16.msra.mxu0 %v1155
    %1340 = vmatmul.bf16.gmra.mxu0 %v1330
    %v1341 = vpop.f32.mrf.mxu0
    %v1342 = vadd.f32 0.0, %v1341
    %v1343 = vpop.f32.mrf.mxu0
    %1344 = vdwg.mxu0
    %v1345 = vadd.f32 %v1235, %v1342
    %v1346 = vadd.f32 %v1345, %v1172
    %v1347 = vadd.f32 %v1346, %v1255
    %v1348 = vxor.u32 %v1347, 2147483648
    %v1349 = vmul.f32 %v1348, 1.442695
    %v1350 = vpow.pop %v1349
    %v1351 = vadd.f32 %v1350, 1.0
    %v1352 = vrcp.pop %v1351
    %v1353 = vmul.f32 %v1351, %v1352
    %v1354 = vsub.f32 1.0, %v1353
    %v1355 = vmul.f32 %v1352, %v1354
    %v1356 = vadd.f32 %v1352, %v1355
    %vm1357 = vweird.f32 %v1351
    %vm1358 = vweird.f32 %v1352
    %vm1359 = vmor %vm1357, %vm1358
    %v1360 = vsel %vm1359, %v1352, %v1356
    %v1361 = vand.u32 2147483647, %v1351
    %vm1362 = vcmp.eq.f32.partialorder %v1361, 8.507059e+37
    %v1363 = vand.u32 %v1351, 2147483648
    %v1364 = vor.u32 1.1754944e-38, %v1363
    %v1365 = vsel %vm1362, %v1364, %v1360
    %v1366 = vmul.f32 1.0, %v1365
    %v1367 = vadd.f32 %v1255, %v1198
    %1369 = vrot.lane.b32.xlu0 %v1367, 64
    %v1370 = vpop.permute.xlu0 %1369
    %v1372 = vmul.f32 %v1366, %v1370
    %1374 = vrot.lane.b32.xlu0 %v1372, 64
    %v1375 = vpop.permute.xlu0 %1374
    %v1377 = vadd.f32 %v1346, %v1375
    %v1378 = vtanh.pop %v1377
    %v1379 = vsub.f32 1.0, %v1366
    %1381 = vrot.lane.b32.xlu0 %v1378, 96
    %v1382 = vpop.permute.xlu0 %1381
    %v1384 = vmul.f32 %v1379, %v1382
    %v1385 = vmul.f32 %v1366, %v1219
    %v1386 = vadd.f32 %v1384, %v1385
    %v1387 = vadd.f32 %v1220, %v1327
    %v1388 = vpack.c.bf16 %v1387, %v1387
    %v1390 = vsel %vm1000, %v1388, 0
    %1392 = vmatpush.bf16.msra.mxu0 0
    %1393 = vmatpush.bf16.msra.mxu0 0
    %1394 = vmatpush.bf16.msra.mxu0 0
    %1395 = vmatpush.bf16.msra.mxu0 0
    %1396 = vmatpush.bf16.msra.mxu0 0
    %1397 = vmatpush.bf16.msra.mxu0 0
    %1398 = vmatpush.bf16.msra.mxu0 0
    %1399 = vmatpush.bf16.msra.mxu0 %v1006
    %1400 = vmatmul.bf16.gmra.mxu0 %v1390
    %v1401 = vpop.f32.mrf.mxu0
    %v1402 = vadd.f32 0.0, %v1401
    %v1403 = vpop.f32.mrf.mxu0
    %1404 = vdwg.mxu0
    %v1405 = vpack.c.bf16 %v1386, %v1386
    %1407 = vrot.lane.b32.xlu0 %v1405, 96
    %v1408 = vpop.permute.xlu0 %1407
    %v1410 = vsel %vm862, %v1408, 0
    %1412 = vmatpush.bf16.msra.mxu0 0
    %1413 = vmatpush.bf16.msra.mxu0 0
    %1414 = vmatpush.bf16.msra.mxu0 0
    %1415 = vmatpush.bf16.msra.mxu0 0
    %1416 = vmatpush.bf16.msra.mxu0 0
    %1417 = vmatpush.bf16.msra.mxu0 0
    %1418 = vmatpush.bf16.msra.mxu0 %v1030
    %1419 = vmatpush.bf16.msra.mxu0 %v1029
    %1420 = vmatmul.bf16.gmra.mxu0 %v1410
    %v1421 = vpop.f32.mrf.mxu0
    %v1422 = vadd.f32 0.0, %v1421
    %v1423 = vpop.f32.mrf.mxu0
    %1424 = vdwg.mxu0
    %v1425 = vadd.f32 %v1402, %v1422
    %v1426 = vadd.f32 %v1425, %v1051
    %v1427 = vmax.f32 %v1426, 0.0
    %v1428 = vpack.c.bf16 %v1427, %v1427
    %1430 = vrot.lane.b32.xlu0 %v1428, 32
    %v1431 = vpop.permute.xlu0 %1430
    %v1433 = vsel %vm862, %v1431, 0
    %1435 = vmatpush.bf16.msra.mxu0 0
    %1436 = vmatpush.bf16.msra.mxu0 0
    %1437 = vmatpush.bf16.msra.mxu0 0
    %1438 = vmatpush.bf16.msra.mxu0 0
    %1439 = vmatpush.bf16.msra.mxu0 0
    %1440 = vmatpush.bf16.msra.mxu0 0
    %1441 = vmatpush.bf16.msra.mxu0 %v1071
    %1442 = vmatpush.bf16.msra.mxu0 %v1070
    %1443 = vmatmul.bf16.gmra.mxu0 %v1433
    %v1444 = vpop.f32.mrf.mxu0
    %v1445 = vadd.f32 %v1057, %v1444
    %v1446 = vpop.f32.mrf.mxu0
    %1447 = vdwg.mxu0
    %v1448 = vmax.f32 %v1445, 0.0
    %v1449 = vpack.c.bf16 %v1448, %v1448
    %v1451 = vsel %vm862, %v1449, 0
    %1453 = vmatpush.bf16.msra.mxu0 0
    %1454 = vmatpush.bf16.msra.mxu0 0
    %1455 = vmatpush.bf16.msra.mxu0 0
    %1456 = vmatpush.bf16.msra.mxu0 0
    %1457 = vmatpush.bf16.msra.mxu0 0
    %1458 = vmatpush.bf16.msra.mxu0 0
    %1459 = vmatpush.bf16.msra.mxu0 %v1104
    %1460 = vmatpush.bf16.msra.mxu0 %v1103
    %1461 = vmatmul.bf16.gmra.mxu0 %v1451
    %v1462 = vpop.f32.mrf.mxu0
    %v1463 = vadd.f32 %v1093, %v1462
    %v1464 = vpop.f32.mrf.mxu0
    %1465 = vdwg.mxu0
    %s1466 = scalar_lea.vmem %s2, 16
    %v1467 = vld [vmem:[%s1466] sm:$0xff]
    %v1468 = vsub.f32 %v1467, %v1463
    %v1469 = vmul.f32 %v1468, %v1468
    %v1470 = vsub.f32 0.0, %v1463
    %v1471 = vmul.f32 %v1470, 1.442695
    %v1472 = vpow.pop %v1471
    %1474 = vrot.lane.b32.xlu0 %v1472, 122
    %v1475 = vpop.permute.xlu0 %1474
    %v1477 = vmul.f32 %v1469, %v1475
    %v1478 = vadd.f32 %v1316, %v1477
    %1480 = vrot.lane.b32.xlu0 %v1463, 122
    %v1481 = vpop.permute.xlu0 %1480
    %v1483 = vadd.f32 %v1478, %v1481
    %s1484 = scalar_lea.vmem %s4, 16
    %v1485 = vld [vmem:[%s1484] sm:$0xff]
    %v1486 = vmul.f32 %v1463, 0.5
    %v1487 = vmul.f32 %v1486, 1.442695
    %v1488 = vpow.pop %v1487
    %1490 = vrot.lane.b32.xlu0 %v1488, 122
    %v1491 = vpop.permute.xlu0 %1490
    %v1493 = vmul.f32 %v1485, %v1491
    %v1494 = vadd.f32 %v1463, %v1493
    %v1495 = vpack.c.bf16 %v1494, %v1494
    %v1497 = vsel %vm1000, %v1495, 0
    %1499 = vmatpush.bf16.msra.mxu0 0
    %1500 = vmatpush.bf16.msra.mxu0 0
    %1501 = vmatpush.bf16.msra.mxu0 0
    %1502 = vmatpush.bf16.msra.mxu0 0
    %1503 = vmatpush.bf16.msra.mxu0 0
    %1504 = vmatpush.bf16.msra.mxu0 0
    %1505 = vmatpush.bf16.msra.mxu0 0
    %1506 = vmatpush.bf16.msra.mxu0 %v1155
    %1507 = vmatmul.bf16.gmra.mxu0 %v1497
    %v1508 = vpop.f32.mrf.mxu0
    %v1509 = vadd.f32 0.0, %v1508
    %v1510 = vpop.f32.mrf.mxu0
    %1511 = vdwg.mxu0
    %v1512 = vadd.f32 %v1402, %v1509
    %v1513 = vadd.f32 %v1512, %v1172
    %v1514 = vadd.f32 %v1513, %v1422
    %v1515 = vxor.u32 %v1514, 2147483648
    %v1516 = vmul.f32 %v1515, 1.442695
    %v1517 = vpow.pop %v1516
    %v1518 = vadd.f32 %v1517, 1.0
    %v1519 = vrcp.pop %v1518
    %v1520 = vmul.f32 %v1518, %v1519
    %v1521 = vsub.f32 1.0, %v1520
    %v1522 = vmul.f32 %v1519, %v1521
    %v1523 = vadd.f32 %v1519, %v1522
    %vm1524 = vweird.f32 %v1518
    %vm1525 = vweird.f32 %v1519
    %vm1526 = vmor %vm1524, %vm1525
    %v1527 = vsel %vm1526, %v1519, %v1523
    %v1528 = vand.u32 2147483647, %v1518
    %vm1529 = vcmp.eq.f32.partialorder %v1528, 8.507059e+37
    %v1530 = vand.u32 %v1518, 2147483648
    %v1531 = vor.u32 1.1754944e-38, %v1530
    %v1532 = vsel %vm1529, %v1531, %v1527
    %v1533 = vmul.f32 1.0, %v1532
    %v1534 = vadd.f32 %v1422, %v1198
    %1536 = vrot.lane.b32.xlu0 %v1534, 64
    %v1537 = vpop.permute.xlu0 %1536
    %v1539 = vmul.f32 %v1533, %v1537
    %1541 = vrot.lane.b32.xlu0 %v1539, 64
    %v1542 = vpop.permute.xlu0 %1541
    %v1544 = vadd.f32 %v1513, %v1542
    %v1545 = vtanh.pop %v1544
    %v1546 = vsub.f32 1.0, %v1533
    %1548 = vrot.lane.b32.xlu0 %v1545, 96
    %v1549 = vpop.permute.xlu0 %1548
    %v1551 = vmul.f32 %v1546, %v1549
    %v1552 = vmul.f32 %v1533, %v1386
    %v1553 = vadd.f32 %v1551, %v1552
    %v1554 = vadd.f32 %v1387, %v1494
    %v1555 = vpack.c.bf16 %v1554, %v1554
    %v1557 = vsel %vm1000, %v1555, 0
    %1559 = vmatpush.bf16.msra.mxu0 0
    %1560 = vmatpush.bf16.msra.mxu0 0
    %1561 = vmatpush.bf16.msra.mxu0 0
    %1562 = vmatpush.bf16.msra.mxu0 0
    %1563 = vmatpush.bf16.msra.mxu0 0
    %1564 = vmatpush.bf16.msra.mxu0 0
    %1565 = vmatpush.bf16.msra.mxu0 0
    %1566 = vmatpush.bf16.msra.mxu0 %v1006
    %1567 = vmatmul.bf16.gmra.mxu0 %v1557
    %v1568 = vpop.f32.mrf.mxu0
    %v1569 = vadd.f32 0.0, %v1568
    %v1570 = vpop.f32.mrf.mxu0
    %1571 = vdwg.mxu0
    %v1572 = vpack.c.bf16 %v1553, %v1553
    %1574 = vrot.lane.b32.xlu0 %v1572, 96
    %v1575 = vpop.permute.xlu0 %1574
    %v1577 = vsel %vm862, %v1575, 0
    %1579 = vmatpush.bf16.msra.mxu0 0
    %1580 = vmatpush.bf16.msra.mxu0 0
    %1581 = vmatpush.bf16.msra.mxu0 0
    %1582 = vmatpush.bf16.msra.mxu0 0
    %1583 = vmatpush.bf16.msra.mxu0 0
    %1584 = vmatpush.bf16.msra.mxu0 0
    %1585 = vmatpush.bf16.msra.mxu0 %v1030
    %1586 = vmatpush.bf16.msra.mxu0 %v1029
    %1587 = vmatmul.bf16.gmra.mxu0 %v1577
    %v1588 = vpop.f32.mrf.mxu0
    %v1589 = vadd.f32 0.0, %v1588
    %v1590 = vpop.f32.mrf.mxu0
    %1591 = vdwg.mxu0
    %v1592 = vadd.f32 %v1569, %v1589
    %v1593 = vadd.f32 %v1592, %v1051
    %v1594 = vmax.f32 %v1593, 0.0
    %v1595 = vpack.c.bf16 %v1594, %v1594
    %1597 = vrot.lane.b32.xlu0 %v1595, 32
    %v1598 = vpop.permute.xlu0 %1597
    %v1600 = vsel %vm862, %v1598, 0
    %1602 = vmatpush.bf16.msra.mxu0 0
    %1603 = vmatpush.bf16.msra.mxu0 0
    %1604 = vmatpush.bf16.msra.mxu0 0
    %1605 = vmatpush.bf16.msra.mxu0 0
    %1606 = vmatpush.bf16.msra.mxu0 0
    %1607 = vmatpush.bf16.msra.mxu0 0
    %1608 = vmatpush.bf16.msra.mxu0 %v1071
    %1609 = vmatpush.bf16.msra.mxu0 %v1070
    %1610 = vmatmul.bf16.gmra.mxu0 %v1600
    %v1611 = vpop.f32.mrf.mxu0
    %v1612 = vadd.f32 %v1057, %v1611
    %v1613 = vpop.f32.mrf.mxu0
    %1614 = vdwg.mxu0
    %v1615 = vmax.f32 %v1612, 0.0
    %v1616 = vpack.c.bf16 %v1615, %v1615
    %v1618 = vsel %vm862, %v1616, 0
    %1620 = vmatpush.bf16.msra.mxu0 0
    %1621 = vmatpush.bf16.msra.mxu0 0
    %1622 = vmatpush.bf16.msra.mxu0 0
    %1623 = vmatpush.bf16.msra.mxu0 0
    %1624 = vmatpush.bf16.msra.mxu0 0
    %1625 = vmatpush.bf16.msra.mxu0 0
    %1626 = vmatpush.bf16.msra.mxu0 %v1104
    %1627 = vmatpush.bf16.msra.mxu0 %v1103
    %1628 = vmatmul.bf16.gmra.mxu0 %v1618
    %v1629 = vpop.f32.mrf.mxu0
    %v1630 = vadd.f32 %v1093, %v1629
    %v1631 = vpop.f32.mrf.mxu0
    %1632 = vdwg.mxu0
    %s1633 = scalar_lea.vmem %s2, 24
    %v1634 = vld [vmem:[%s1633] sm:$0xff]
    %v1635 = vsub.f32 %v1634, %v1630
    %v1636 = vmul.f32 %v1635, %v1635
    %v1637 = vsub.f32 0.0, %v1630
    %v1638 = vmul.f32 %v1637, 1.442695
    %v1639 = vpow.pop %v1638
    %1641 = vrot.lane.b32.xlu0 %v1639, 122
    %v1642 = vpop.permute.xlu0 %1641
    %v1644 = vmul.f32 %v1636, %v1642
    %v1645 = vadd.f32 %v1483, %v1644
    %1647 = vrot.lane.b32.xlu0 %v1630, 122
    %v1648 = vpop.permute.xlu0 %1647
    %v1650 = vadd.f32 %v1645, %v1648
    %s1651 = scalar_lea.vmem %s4, 24
    %v1652 = vld [vmem:[%s1651] sm:$0xff]
    %v1653 = vmul.f32 %v1630, 0.5
    %v1654 = vmul.f32 %v1653, 1.442695
    %v1655 = vpow.pop %v1654
    %1657 = vrot.lane.b32.xlu0 %v1655, 122
    %v1658 = vpop.permute.xlu0 %1657
    %v1660 = vmul.f32 %v1652, %v1658
    %v1661 = vadd.f32 %v1630, %v1660
    %v1662 = vpack.c.bf16 %v1661, %v1661
    %v1664 = vsel %vm1000, %v1662, 0
    %1666 = vmatpush.bf16.msra.mxu0 0
    %1667 = vmatpush.bf16.msra.mxu0 0
    %1668 = vmatpush.bf16.msra.mxu0 0
    %1669 = vmatpush.bf16.msra.mxu0 0
    %1670 = vmatpush.bf16.msra.mxu0 0
    %1671 = vmatpush.bf16.msra.mxu0 0
    %1672 = vmatpush.bf16.msra.mxu0 0
    %1673 = vmatpush.bf16.msra.mxu0 %v1155
    %1674 = vmatmul.bf16.gmra.mxu0 %v1664
    %v1675 = vpop.f32.mrf.mxu0
    %v1676 = vadd.f32 0.0, %v1675
    %v1677 = vpop.f32.mrf.mxu0
    %1678 = vdwg.mxu0
    %v1679 = vadd.f32 %v1569, %v1676
    %v1680 = vadd.f32 %v1679, %v1172
    %v1681 = vadd.f32 %v1680, %v1589
    %v1682 = vxor.u32 %v1681, 2147483648
    %v1683 = vmul.f32 %v1682, 1.442695
    %v1684 = vpow.pop %v1683
    %v1685 = vadd.f32 %v1684, 1.0
    %v1686 = vrcp.pop %v1685
    %v1687 = vmul.f32 %v1685, %v1686
    %v1688 = vsub.f32 1.0, %v1687
    %v1689 = vmul.f32 %v1686, %v1688
    %v1690 = vadd.f32 %v1686, %v1689
    %vm1691 = vweird.f32 %v1685
    %vm1692 = vweird.f32 %v1686
    %vm1693 = vmor %vm1691, %vm1692
    %v1694 = vsel %vm1693, %v1686, %v1690
    %v1695 = vand.u32 2147483647, %v1685
    %vm1696 = vcmp.eq.f32.partialorder %v1695, 8.507059e+37
    %v1697 = vand.u32 %v1685, 2147483648
    %v1698 = vor.u32 1.1754944e-38, %v1697
    %v1699 = vsel %vm1696, %v1698, %v1694
    %v1700 = vmul.f32 1.0, %v1699
    %v1701 = vadd.f32 %v1589, %v1198
    %1703 = vrot.lane.b32.xlu0 %v1701, 64
    %v1704 = vpop.permute.xlu0 %1703
    %v1706 = vmul.f32 %v1700, %v1704
    %1708 = vrot.lane.b32.xlu0 %v1706, 64
    %v1709 = vpop.permute.xlu0 %1708
    %v1711 = vadd.f32 %v1680, %v1709
    %v1712 = vtanh.pop %v1711
    %v1713 = vsub.f32 1.0, %v1700
    %1715 = vrot.lane.b32.xlu0 %v1712, 96
    %v1716 = vpop.permute.xlu0 %1715
    %v1718 = vmul.f32 %v1713, %v1716
    %v1719 = vmul.f32 %v1700, %v1553
    %v1720 = vadd.f32 %v1718, %v1719
    %v1721 = vadd.f32 %v1554, %v1661
    %v1722 = vpack.c.bf16 %v1721, %v1721
    %v1724 = vsel %vm1000, %v1722, 0
    %1726 = vmatpush.bf16.msra.mxu0 0
    %1727 = vmatpush.bf16.msra.mxu0 0
    %1728 = vmatpush.bf16.msra.mxu0 0
    %1729 = vmatpush.bf16.msra.mxu0 0
    %1730 = vmatpush.bf16.msra.mxu0 0
    %1731 = vmatpush.bf16.msra.mxu0 0
    %1732 = vmatpush.bf16.msra.mxu0 0
    %1733 = vmatpush.bf16.msra.mxu0 %v1006
    %1734 = vmatmul.bf16.gmra.mxu0 %v1724
    %v1735 = vpop.f32.mrf.mxu0
    %v1736 = vadd.f32 0.0, %v1735
    %v1737 = vpop.f32.mrf.mxu0
    %1738 = vdwg.mxu0
    %v1739 = vpack.c.bf16 %v1720, %v1720
    %1741 = vrot.lane.b32.xlu0 %v1739, 96
    %v1742 = vpop.permute.xlu0 %1741
    %v1744 = vsel %vm862, %v1742, 0
    %1746 = vmatpush.bf16.msra.mxu0 0
    %1747 = vmatpush.bf16.msra.mxu0 0
    %1748 = vmatpush.bf16.msra.mxu0 0
    %1749 = vmatpush.bf16.msra.mxu0 0
    %1750 = vmatpush.bf16.msra.mxu0 0
    %1751 = vmatpush.bf16.msra.mxu0 0
    %1752 = vmatpush.bf16.msra.mxu0 %v1030
    %1753 = vmatpush.bf16.msra.mxu0 %v1029
    %1754 = vmatmul.bf16.gmra.mxu0 %v1744
    %v1755 = vpop.f32.mrf.mxu0
    %v1756 = vadd.f32 0.0, %v1755
    %v1757 = vpop.f32.mrf.mxu0
    %1758 = vdwg.mxu0
    %v1759 = vadd.f32 %v1736, %v1756
    %v1760 = vadd.f32 %v1759, %v1051
    %v1761 = vmax.f32 %v1760, 0.0
    %v1762 = vpack.c.bf16 %v1761, %v1761
    %1764 = vrot.lane.b32.xlu0 %v1762, 32
    %v1765 = vpop.permute.xlu0 %1764
    %v1767 = vsel %vm862, %v1765, 0
    %1769 = vmatpush.bf16.msra.mxu0 0
    %1770 = vmatpush.bf16.msra.mxu0 0
    %1771 = vmatpush.bf16.msra.mxu0 0
    %1772 = vmatpush.bf16.msra.mxu0 0
    %1773 = vmatpush.bf16.msra.mxu0 0
    %1774 = vmatpush.bf16.msra.mxu0 0
    %1775 = vmatpush.bf16.msra.mxu0 %v1071
    %1776 = vmatpush.bf16.msra.mxu0 %v1070
    %1777 = vmatmul.bf16.gmra.mxu0 %v1767
    %v1778 = vpop.f32.mrf.mxu0
    %v1779 = vadd.f32 %v1057, %v1778
    %v1780 = vpop.f32.mrf.mxu0
    %1781 = vdwg.mxu0
    %v1782 = vmax.f32 %v1779, 0.0
    %v1783 = vpack.c.bf16 %v1782, %v1782
    %v1785 = vsel %vm862, %v1783, 0
    %1787 = vmatpush.bf16.msra.mxu0 0
    %1788 = vmatpush.bf16.msra.mxu0 0
    %1789 = vmatpush.bf16.msra.mxu0 0
    %1790 = vmatpush.bf16.msra.mxu0 0
    %1791 = vmatpush.bf16.msra.mxu0 0
    %1792 = vmatpush.bf16.msra.mxu0 0
    %1793 = vmatpush.bf16.msra.mxu0 %v1104
    %1794 = vmatpush.bf16.msra.mxu0 %v1103
    %1795 = vmatmul.bf16.gmra.mxu0 %v1785
    %v1796 = vpop.f32.mrf.mxu0
    %v1797 = vadd.f32 %v1093, %v1796
    %v1798 = vpop.f32.mrf.mxu0
    %1799 = vdwg.mxu0
    %s1800 = scalar_lea.vmem %s2, 32
    %v1801 = vld [vmem:[%s1800] sm:$0xff]
    %v1802 = vsub.f32 %v1801, %v1797
    %v1803 = vmul.f32 %v1802, %v1802
    %v1804 = vsub.f32 0.0, %v1797
    %v1805 = vmul.f32 %v1804, 1.442695
    %v1806 = vpow.pop %v1805
    %1808 = vrot.lane.b32.xlu0 %v1806, 122
    %v1809 = vpop.permute.xlu0 %1808
    %v1811 = vmul.f32 %v1803, %v1809
    %v1812 = vadd.f32 %v1650, %v1811
    %1814 = vrot.lane.b32.xlu0 %v1797, 122
    %v1815 = vpop.permute.xlu0 %1814
    %v1817 = vadd.f32 %v1812, %v1815
    %s1818 = scalar_lea.vmem %s4, 32
    %v1819 = vld [vmem:[%s1818] sm:$0xff]
    %v1820 = vmul.f32 %v1797, 0.5
    %v1821 = vmul.f32 %v1820, 1.442695
    %v1822 = vpow.pop %v1821
    %1824 = vrot.lane.b32.xlu0 %v1822, 122
    %v1825 = vpop.permute.xlu0 %1824
    %v1827 = vmul.f32 %v1819, %v1825
    %v1828 = vadd.f32 %v1797, %v1827
    %v1829 = vpack.c.bf16 %v1828, %v1828
    %v1831 = vsel %vm1000, %v1829, 0
    %1833 = vmatpush.bf16.msra.mxu0 0
    %1834 = vmatpush.bf16.msra.mxu0 0
    %1835 = vmatpush.bf16.msra.mxu0 0
    %1836 = vmatpush.bf16.msra.mxu0 0
    %1837 = vmatpush.bf16.msra.mxu0 0
    %1838 = vmatpush.bf16.msra.mxu0 0
    %1839 = vmatpush.bf16.msra.mxu0 0
    %1840 = vmatpush.bf16.msra.mxu0 %v1155
    %1841 = vmatmul.bf16.gmra.mxu0 %v1831
    %v1842 = vpop.f32.mrf.mxu0
    %v1843 = vadd.f32 0.0, %v1842
    %v1844 = vpop.f32.mrf.mxu0
    %1845 = vdwg.mxu0
    %v1846 = vadd.f32 %v1736, %v1843
    %v1847 = vadd.f32 %v1846, %v1172
    %v1848 = vadd.f32 %v1847, %v1756
    %v1849 = vxor.u32 %v1848, 2147483648
    %v1850 = vmul.f32 %v1849, 1.442695
    %v1851 = vpow.pop %v1850
    %v1852 = vadd.f32 %v1851, 1.0
    %v1853 = vrcp.pop %v1852
    %v1854 = vmul.f32 %v1852, %v1853
    %v1855 = vsub.f32 1.0, %v1854
    %v1856 = vmul.f32 %v1853, %v1855
    %v1857 = vadd.f32 %v1853, %v1856
    %vm1858 = vweird.f32 %v1852
    %vm1859 = vweird.f32 %v1853
    %vm1860 = vmor %vm1858, %vm1859
    %v1861 = vsel %vm1860, %v1853, %v1857
    %v1862 = vand.u32 2147483647, %v1852
    %vm1863 = vcmp.eq.f32.partialorder %v1862, 8.507059e+37
    %v1864 = vand.u32 %v1852, 2147483648
    %v1865 = vor.u32 1.1754944e-38, %v1864
    %v1866 = vsel %vm1863, %v1865, %v1861
    %v1867 = vmul.f32 1.0, %v1866
    %v1868 = vadd.f32 %v1756, %v1198
    %1870 = vrot.lane.b32.xlu0 %v1868, 64
    %v1871 = vpop.permute.xlu0 %1870
    %v1873 = vmul.f32 %v1867, %v1871
    %1875 = vrot.lane.b32.xlu0 %v1873, 64
    %v1876 = vpop.permute.xlu0 %1875
    %v1878 = vadd.f32 %v1847, %v1876
    %v1879 = vtanh.pop %v1878
    %v1880 = vsub.f32 1.0, %v1867
    %1882 = vrot.lane.b32.xlu0 %v1879, 96
    %v1883 = vpop.permute.xlu0 %1882
    %v1885 = vmul.f32 %v1880, %v1883
    %v1886 = vmul.f32 %v1867, %v1720
    %v1887 = vadd.f32 %v1885, %v1886
    %v1888 = vadd.f32 %v1721, %v1828
    %v1889 = vpack.c.bf16 %v1888, %v1888
    %v1891 = vsel %vm1000, %v1889, 0
    %1893 = vmatpush.bf16.msra.mxu0 0
    %1894 = vmatpush.bf16.msra.mxu0 0
    %1895 = vmatpush.bf16.msra.mxu0 0
    %1896 = vmatpush.bf16.msra.mxu0 0
    %1897 = vmatpush.bf16.msra.mxu0 0
    %1898 = vmatpush.bf16.msra.mxu0 0
    %1899 = vmatpush.bf16.msra.mxu0 0
    %1900 = vmatpush.bf16.msra.mxu0 %v1006
    %1901 = vmatmul.bf16.gmra.mxu0 %v1891
    %v1902 = vpop.f32.mrf.mxu0
    %v1903 = vadd.f32 0.0, %v1902
    %v1904 = vpop.f32.mrf.mxu0
    %1905 = vdwg.mxu0
    %v1906 = vpack.c.bf16 %v1887, %v1887
    %1908 = vrot.lane.b32.xlu0 %v1906, 96
    %v1909 = vpop.permute.xlu0 %1908
    %v1911 = vsel %vm862, %v1909, 0
    %1913 = vmatpush.bf16.msra.mxu0 0
    %1914 = vmatpush.bf16.msra.mxu0 0
    %1915 = vmatpush.bf16.msra.mxu0 0
    %1916 = vmatpush.bf16.msra.mxu0 0
    %1917 = vmatpush.bf16.msra.mxu0 0
    %1918 = vmatpush.bf16.msra.mxu0 0
    %1919 = vmatpush.bf16.msra.mxu0 %v1030
    %1920 = vmatpush.bf16.msra.mxu0 %v1029
    %1921 = vmatmul.bf16.gmra.mxu0 %v1911
    %v1922 = vpop.f32.mrf.mxu0
    %v1923 = vadd.f32 0.0, %v1922
    %v1924 = vpop.f32.mrf.mxu0
    %1925 = vdwg.mxu0
    %v1926 = vadd.f32 %v1903, %v1923
    %v1927 = vadd.f32 %v1926, %v1051
    %v1928 = vmax.f32 %v1927, 0.0
    %v1929 = vpack.c.bf16 %v1928, %v1928
    %1931 = vrot.lane.b32.xlu0 %v1929, 32
    %v1932 = vpop.permute.xlu0 %1931
    %v1934 = vsel %vm862, %v1932, 0
    %1936 = vmatpush.bf16.msra.mxu0 0
    %1937 = vmatpush.bf16.msra.mxu0 0
    %1938 = vmatpush.bf16.msra.mxu0 0
    %1939 = vmatpush.bf16.msra.mxu0 0
    %1940 = vmatpush.bf16.msra.mxu0 0
    %1941 = vmatpush.bf16.msra.mxu0 0
    %1942 = vmatpush.bf16.msra.mxu0 %v1071
    %1943 = vmatpush.bf16.msra.mxu0 %v1070
    %1944 = vmatmul.bf16.gmra.mxu0 %v1934
    %v1945 = vpop.f32.mrf.mxu0
    %v1946 = vadd.f32 %v1057, %v1945
    %v1947 = vpop.f32.mrf.mxu0
    %1948 = vdwg.mxu0
    %v1949 = vmax.f32 %v1946, 0.0
    %v1950 = vpack.c.bf16 %v1949, %v1949
    %v1952 = vsel %vm862, %v1950, 0
    %1954 = vmatpush.bf16.msra.mxu0 0
    %1955 = vmatpush.bf16.msra.mxu0 0
    %1956 = vmatpush.bf16.msra.mxu0 0
    %1957 = vmatpush.bf16.msra.mxu0 0
    %1958 = vmatpush.bf16.msra.mxu0 0
    %1959 = vmatpush.bf16.msra.mxu0 0
    %1960 = vmatpush.bf16.msra.mxu0 %v1104
    %1961 = vmatpush.bf16.msra.mxu0 %v1103
    %1962 = vmatmul.bf16.gmra.mxu0 %v1952
    %v1963 = vpop.f32.mrf.mxu0
    %v1964 = vadd.f32 %v1093, %v1963
    %v1965 = vpop.f32.mrf.mxu0
    %1966 = vdwg.mxu0
    %s1967 = scalar_lea.vmem %s2, 40
    %v1968 = vld [vmem:[%s1967] sm:$0xff]
    %v1969 = vsub.f32 %v1968, %v1964
    %v1970 = vmul.f32 %v1969, %v1969
    %v1971 = vsub.f32 0.0, %v1964
    %v1972 = vmul.f32 %v1971, 1.442695
    %v1973 = vpow.pop %v1972
    %1975 = vrot.lane.b32.xlu0 %v1973, 122
    %v1976 = vpop.permute.xlu0 %1975
    %v1978 = vmul.f32 %v1970, %v1976
    %v1979 = vadd.f32 %v1817, %v1978
    %1981 = vrot.lane.b32.xlu0 %v1964, 122
    %v1982 = vpop.permute.xlu0 %1981
    %v1984 = vadd.f32 %v1979, %v1982
    %s1985 = scalar_lea.vmem %s4, 40
    %v1986 = vld [vmem:[%s1985] sm:$0xff]
    %v1987 = vmul.f32 %v1964, 0.5
    %v1988 = vmul.f32 %v1987, 1.442695
    %v1989 = vpow.pop %v1988
    %1991 = vrot.lane.b32.xlu0 %v1989, 122
    %v1992 = vpop.permute.xlu0 %1991
    %v1994 = vmul.f32 %v1986, %v1992
    %v1995 = vadd.f32 %v1964, %v1994
    %v1996 = vpack.c.bf16 %v1995, %v1995
    %v1998 = vsel %vm1000, %v1996, 0
    %2000 = vmatpush.bf16.msra.mxu0 0
    %2001 = vmatpush.bf16.msra.mxu0 0
    %2002 = vmatpush.bf16.msra.mxu0 0
    %2003 = vmatpush.bf16.msra.mxu0 0
    %2004 = vmatpush.bf16.msra.mxu0 0
    %2005 = vmatpush.bf16.msra.mxu0 0
    %2006 = vmatpush.bf16.msra.mxu0 0
    %2007 = vmatpush.bf16.msra.mxu0 %v1155
    %2008 = vmatmul.bf16.gmra.mxu0 %v1998
    %v2009 = vpop.f32.mrf.mxu0
    %v2010 = vadd.f32 0.0, %v2009
    %v2011 = vpop.f32.mrf.mxu0
    %2012 = vdwg.mxu0
    %v2013 = vadd.f32 %v1903, %v2010
    %v2014 = vadd.f32 %v2013, %v1172
    %v2015 = vadd.f32 %v2014, %v1923
    %v2016 = vxor.u32 %v2015, 2147483648
    %v2017 = vmul.f32 %v2016, 1.442695
    %v2018 = vpow.pop %v2017
    %v2019 = vadd.f32 %v2018, 1.0
    %v2020 = vrcp.pop %v2019
    %v2021 = vmul.f32 %v2019, %v2020
    %v2022 = vsub.f32 1.0, %v2021
    %v2023 = vmul.f32 %v2020, %v2022
    %v2024 = vadd.f32 %v2020, %v2023
    %vm2025 = vweird.f32 %v2019
    %vm2026 = vweird.f32 %v2020
    %vm2027 = vmor %vm2025, %vm2026
    %v2028 = vsel %vm2027, %v2020, %v2024
    %v2029 = vand.u32 2147483647, %v2019
    %vm2030 = vcmp.eq.f32.partialorder %v2029, 8.507059e+37
    %v2031 = vand.u32 %v2019, 2147483648
    %v2032 = vor.u32 1.1754944e-38, %v2031
    %v2033 = vsel %vm2030, %v2032, %v2028
    %v2034 = vmul.f32 1.0, %v2033
    %v2035 = vadd.f32 %v1923, %v1198
    %2037 = vrot.lane.b32.xlu0 %v2035, 64
    %v2038 = vpop.permute.xlu0 %2037
    %v2040 = vmul.f32 %v2034, %v2038
    %2042 = vrot.lane.b32.xlu0 %v2040, 64
    %v2043 = vpop.permute.xlu0 %2042
    %v2045 = vadd.f32 %v2014, %v2043
    %v2046 = vtanh.pop %v2045
    %v2047 = vsub.f32 1.0, %v2034
    %2049 = vrot.lane.b32.xlu0 %v2046, 96
    %v2050 = vpop.permute.xlu0 %2049
    %v2052 = vmul.f32 %v2047, %v2050
    %v2053 = vmul.f32 %v2034, %v1887
    %v2054 = vadd.f32 %v2052, %v2053
    %v2055 = vadd.f32 %v1888, %v1995
    %v2056 = vpack.c.bf16 %v2055, %v2055
    %v2058 = vsel %vm1000, %v2056, 0
    %2060 = vmatpush.bf16.msra.mxu0 0
    %2061 = vmatpush.bf16.msra.mxu0 0
    %2062 = vmatpush.bf16.msra.mxu0 0
    %2063 = vmatpush.bf16.msra.mxu0 0
    %2064 = vmatpush.bf16.msra.mxu0 0
    %2065 = vmatpush.bf16.msra.mxu0 0
    %2066 = vmatpush.bf16.msra.mxu0 0
    %2067 = vmatpush.bf16.msra.mxu0 %v1006
    %2068 = vmatmul.bf16.gmra.mxu0 %v2058
    %v2069 = vpop.f32.mrf.mxu0
    %v2070 = vadd.f32 0.0, %v2069
    %v2071 = vpop.f32.mrf.mxu0
    %2072 = vdwg.mxu0
    %v2073 = vpack.c.bf16 %v2054, %v2054
    %2075 = vrot.lane.b32.xlu0 %v2073, 96
    %v2076 = vpop.permute.xlu0 %2075
    %v2078 = vsel %vm862, %v2076, 0
    %2080 = vmatpush.bf16.msra.mxu0 0
    %2081 = vmatpush.bf16.msra.mxu0 0
    %2082 = vmatpush.bf16.msra.mxu0 0
    %2083 = vmatpush.bf16.msra.mxu0 0
    %2084 = vmatpush.bf16.msra.mxu0 0
    %2085 = vmatpush.bf16.msra.mxu0 0
    %2086 = vmatpush.bf16.msra.mxu0 %v1030
    %2087 = vmatpush.bf16.msra.mxu0 %v1029
    %2088 = vmatmul.bf16.gmra.mxu0 %v2078
    %v2089 = vpop.f32.mrf.mxu0
    %v2090 = vadd.f32 0.0, %v2089
    %v2091 = vpop.f32.mrf.mxu0
    %2092 = vdwg.mxu0
    %v2093 = vadd.f32 %v2070, %v2090
    %v2094 = vadd.f32 %v2093, %v1051
    %v2095 = vmax.f32 %v2094, 0.0
    %v2096 = vpack.c.bf16 %v2095, %v2095
    %2098 = vrot.lane.b32.xlu0 %v2096, 32
    %v2099 = vpop.permute.xlu0 %2098
    %v2101 = vsel %vm862, %v2099, 0
    %2103 = vmatpush.bf16.msra.mxu0 0
    %2104 = vmatpush.bf16.msra.mxu0 0
    %2105 = vmatpush.bf16.msra.mxu0 0
    %2106 = vmatpush.bf16.msra.mxu0 0
    %2107 = vmatpush.bf16.msra.mxu0 0
    %2108 = vmatpush.bf16.msra.mxu0 0
    %2109 = vmatpush.bf16.msra.mxu0 %v1071
    %2110 = vmatpush.bf16.msra.mxu0 %v1070
    %2111 = vmatmul.bf16.gmra.mxu0 %v2101
    %v2112 = vpop.f32.mrf.mxu0
    %v2113 = vadd.f32 %v1057, %v2112
    %v2114 = vpop.f32.mrf.mxu0
    %2115 = vdwg.mxu0
    %v2116 = vmax.f32 %v2113, 0.0
    %v2117 = vpack.c.bf16 %v2116, %v2116
    %v2119 = vsel %vm862, %v2117, 0
    %2121 = vmatpush.bf16.msra.mxu0 0
    %2122 = vmatpush.bf16.msra.mxu0 0
    %2123 = vmatpush.bf16.msra.mxu0 0
    %2124 = vmatpush.bf16.msra.mxu0 0
    %2125 = vmatpush.bf16.msra.mxu0 0
    %2126 = vmatpush.bf16.msra.mxu0 0
    %2127 = vmatpush.bf16.msra.mxu0 %v1104
    %2128 = vmatpush.bf16.msra.mxu0 %v1103
    %2129 = vmatmul.bf16.gmra.mxu0 %v2119
    %v2130 = vpop.f32.mrf.mxu0
    %v2131 = vadd.f32 %v1093, %v2130
    %v2132 = vpop.f32.mrf.mxu0
    %2133 = vdwg.mxu0
    %s2134 = scalar_lea.vmem %s2, 48
    %v2135 = vld [vmem:[%s2134] sm:$0xff]
    %v2136 = vsub.f32 %v2135, %v2131
    %v2137 = vmul.f32 %v2136, %v2136
    %v2138 = vsub.f32 0.0, %v2131
    %v2139 = vmul.f32 %v2138, 1.442695
    %v2140 = vpow.pop %v2139
    %2142 = vrot.lane.b32.xlu0 %v2140, 122
    %v2143 = vpop.permute.xlu0 %2142
    %v2145 = vmul.f32 %v2137, %v2143
    %v2146 = vadd.f32 %v1984, %v2145
    %2148 = vrot.lane.b32.xlu0 %v2131, 122
    %v2149 = vpop.permute.xlu0 %2148
    %v2151 = vadd.f32 %v2146, %v2149
    %v2152 = vsel %vm1000, %v2151, 0.0
    %2153 = vadd.xlane.f32.xlu0 %v2152
    %v2154 = vpop.xlane.xlu0 %2153
    %v2155 = vrot.slane %v2154, 4
    %v2156 = vadd.f32 %v2154, %v2155
    %v2157 = vrot.slane %v2156, 2
    %v2158 = vadd.f32 %v2156, %v2157
    %v2159 = vrot.slane %v2158, 1
    %v2160 = vadd.f32 %v2158, %v2159
    %s2161 = vtos %v2160
    %s2162 = sadd.f32 %s2161, 617.5267
    %s2163 = smul.f32 %s2162, 0.5
    %s2164 = scalar_lea.smem [#allocation2], 0
    %2165 = sst [smem:[%s2164]] %s2163
    %s2166 = scalar_lea.smem [#allocation2], 1
    %2167 = sst [smem:[%s2166]] %s943
    // Predicated region
    $region106: #{trajectory_model_forward.1} parent=1 // pred_check
      _
    $region107: #{trajectory_model_forward.1} parent=1 // pred_check_branch
      %2169 = sbr.rel (0) target = $region109
    $region108: #{trajectory_model_forward.1} parent=1 // pred_region
      %2171 = vsyncadd [#allocation3], 0
      %s2173 = sshll.u32 %s26, 4
      %s2174 = int_to_ptr.vmem [resolvable:$true] %s2173
      %2176 = dma.smem_to_vmem [#allocation2], 16, %s2174, [#allocation3]
    $region109: #{trajectory_model_forward.1} parent=1 // pred_fallthru
      _
    // Predicated region
    $region110: #{trajectory_model_forward.1} parent=1 // pred_check
      _
    $region111: #{trajectory_model_forward.1} parent=1 // pred_check_branch
      %2178 = sbr.rel (0) target = $region113
    $region112: #{trajectory_model_forward.1} parent=1 // pred_region
      %2180 = dma.done [#allocation3], 16
    $region113: #{trajectory_model_forward.1} parent=1 // pred_fallthru
      _
    %2181 = sfence
    %2182 = vsyncpa [#allocation3], 1

</llo_original>
